<compile_context>
chip_gen: v7x
topology: tpu7x:2x2x1
jax: 0.10.0
libtpu: 0.0.40
codegen_flags: <defaults>
</compile_context>

<pallas_src>
import functools

import jax
import jax.numpy as jnp
from jax import lax
from jax.experimental import pallas as pl
from jax.experimental.pallas import tpu as pltpu


def _round_up(x, m):
    return (x + m - 1) // m * m


def _choose_tq(hw, max_tq):
    """Largest multiple-of-8 divisor of hw <= max_tq, else largest divisor."""
    best = None
    for t in range(8, min(hw, max_tq) + 1, 8):
        if hw % t == 0:
            best = t
    if best is None:
        for t in range(min(hw, max_tq), 0, -1):
            if hw % t == 0:
                best = t
                break
    return best if best else hw


def _nonlocal_kernel(x_ref, wtpg_ref, btpg_ref, ww_ref, wb_ref, o_ref,
                     theta_s, phi_s, g_s, acc_s, *, tq, cip, cdt):
    k = pl.program_id(1)
    nq = pl.num_programs(1)

    # ---- once per batch element: chunked theta/phi/g projection + acc init --
    @pl.when(k == 0)
    def _init():
        xb = x_ref[...].astype(cdt)                               # (HW, Cp)
        for idx, dst in enumerate((theta_s, phi_s, g_s)):
            w = wtpg_ref[:, idx * cip:(idx + 1) * cip]            # (Cp, Cip)
            b = btpg_ref[:, idx * cip:(idx + 1) * cip]            # (1, Cip) f32
            proj = jnp.dot(xb, w, preferred_element_type=jnp.float32) + b
            dst[...] = proj.astype(dst.dtype)                     # (HW, Cip)
        acc_s[...] = jnp.zeros_like(acc_s)

    # ---- per query-row tile: exact softmax over all HW keys -----------------
    q0 = pl.multiple_of(k * tq, tq)
    theta_t = theta_s[pl.ds(q0, tq), :]                           # (TQ, Cip)
    g_t = g_s[pl.ds(q0, tq), :]                                   # (TQ, Cip)
    phi_all = phi_s[...]                                          # (HW, Cip)

    # scores_t[m, n] = <phi[m], theta_t[n]> : native "NT" matmul; softmax
    # reductions below are sublane reductions; accumulation matmul is "NN".
    scores_t = lax.dot_general(
        phi_all, theta_t, (((1,), (1,)), ((), ())),
        preferred_element_type=jnp.float32)                       # (HW, TQ) f32

    col_max = jnp.max(scores_t, axis=0, keepdims=True)            # (1, TQ)
    e = jnp.exp(scores_t - col_max)                               # (HW, TQ) f32
    z = jnp.sum(e, axis=0, keepdims=True)                         # (1, TQ)
    inv_z = pl.reciprocal(z, approx=False)                        # tiny, exact

    # Fold 1/Z into the (TQ, Cip) g tile instead of the (HW, TQ) e matrix.
    # Relayout the lane-vector inv_z into a sublane column with an exact
    # identity matmul (iota + compare + MXU dot -- all natively supported).
    rows = lax.broadcasted_iota(jnp.int32, (tq, tq), 0)
    cols = lax.broadcasted_iota(jnp.int32, (tq, tq), 1)
    eye = (rows == cols).astype(jnp.float32)
    inv_z_col = lax.dot_general(
        eye, inv_z, (((1,), (1,)), ((), ())),
        preferred_element_type=jnp.float32)                       # (TQ, 1)

    g_scaled = (g_t.astype(jnp.float32) * inv_z_col).astype(cdt)  # (TQ, Cip)

    # acc[m, c] += sum_n e[m, n] * g[n, c] / Z[n]
    acc_s[...] += jnp.dot(e.astype(cdt), g_scaled,
                          preferred_element_type=jnp.float32)     # (HW, Cip)

    # ---- last tile: W 1x1 conv back to C channels + residual + store --------
    @pl.when(k == nq - 1)
    def _finalize():
        y = jnp.dot(acc_s[...].astype(cdt), ww_ref[...],
                    preferred_element_type=jnp.float32)           # (HW, Cp)
        y = y + wb_ref[...]
        o_ref[...] = (x_ref[...].astype(jnp.float32) + y).astype(o_ref.dtype)


def non_local_block(x_nchw, params, *, max_tq=256):
    """NonLocalBlock forward.  x_nchw: (B, C, H, W).

    max_tq=256 matches the 256x256 MXU on v6e/v7x; use max_tq=128 on v5e.
    """
    B, C, H, W = x_nchw.shape
    HW = H * W
    Ci = C // 2
    dt = x_nchw.dtype
    # bf16 matmul operands / scratch (f32 accumulation kept everywhere).
    cdt = jnp.bfloat16 if jnp.issubdtype(dt, jnp.floating) else dt

    tq = _choose_tq(HW, max_tq)
    nq = HW // tq

    Cip = max(_round_up(Ci, 128), 128)   # lane-pad inter channels
    Cp = max(_round_up(C, 128), 128)     # lane-pad in/out channels (dense stores)

    # NCHW -> channels-last (B, HW, Cp).
    # TODO(synk): keep the surrounding network channels-last so these two
    # layout transposes (full HBM round trips) can be elided.
    x_bhwc = jnp.transpose(x_nchw, (0, 2, 3, 1)).reshape(B, HW, C)
    if Cp != C:
        x_bhwc = jnp.pad(x_bhwc, ((0, 0), (0, 0), (0, Cp - C)))

    def pad_to(a, shape):
        return jnp.pad(a, [(0, s - d) for d, s in zip(a.shape, shape)])

    # Pre-transposed, fused projection weights (kernel never transposes).
    wtpg = jnp.concatenate(
        [pad_to(params["theta_w"].T, (Cp, Cip)),
         pad_to(params["phi_w"].T, (Cp, Cip)),
         pad_to(params["g_w"].T, (Cp, Cip))], axis=1).astype(cdt)   # (Cp, 3*Cip)
    btpg = jnp.concatenate(
        [pad_to(params["theta_b"], (1, Cip)),
         pad_to(params["phi_b"], (1, Cip)),
         pad_to(params["g_b"], (1, Cip))], axis=1).astype(jnp.float32)
    ww_t = pad_to(params["W_w"].T, (Cip, Cp)).astype(cdt)           # (Cip, Cp)
    wb = pad_to(params["W_b"], (1, Cp)).astype(jnp.float32)         # (1, Cp)

    kernel = functools.partial(_nonlocal_kernel, tq=tq, cip=Cip, cdt=cdt)

    ib = jnp.dtype(dt).itemsize
    cb = jnp.dtype(cdt).itemsize
    # VMEM footprint estimate -> scoped-vmem limit (derived, not a flat 32 MiB).
    scratch_bytes = 3 * HW * Cip * cb + HW * Cip * 4
    slab_bytes = 2 * 2 * HW * Cp * ib                   # x + out, double-buffered
    weight_bytes = (Cp * 3 * Cip + Cip * Cp) * cb + 4 * (3 * Cip + Cp)
    transient_bytes = HW * tq * 6 + HW * Cip * 4 + tq * (tq + Cip + 8) * 4
    need = scratch_bytes + slab_bytes + 2 * weight_bytes + transient_bytes
    try:
        cap = int(pltpu.get_tpu_info().vmem_capacity_bytes)
    except Exception:
        cap = 64 * 1024 * 1024                          # conservative (v7x)
    vmem_limit = int(min(max(32 * 1024 * 1024, int(need * 1.4) + (4 << 20)),
                         int(cap * 0.9)))

    cost = pl.CostEstimate(
        flops=int(2 * B * (3 * HW * Cp * Cip + 2 * HW * HW * Cip + HW * Cip * Cp)),
        transcendentals=int(B * HW * HW),
        bytes_accessed=int(2 * B * HW * Cp * ib + weight_bytes))

    big_spec = pl.BlockSpec((pl.Squeezed(), HW, Cp), lambda b, k: (b, 0, 0))

    def run(single_buffer_weights):
        if single_buffer_weights:
            # Constant-index weights need only a single VMEM copy.
            wspec = lambda s: pl.BlockSpec(s, lambda b, k: (0, 0),
                                           pipeline_mode=pl.Buffered(1))
        else:
            wspec = lambda s: pl.BlockSpec(s, lambda b, k: (0, 0))
        call = pl.pallas_call(
            kernel,
            out_shape=jax.ShapeDtypeStruct((B, HW, Cp), dt),
            grid_spec=pltpu.PrefetchScalarGridSpec(
                num_scalar_prefetch=0,
                grid=(B, nq),
                in_specs=[
                    big_spec,                   # x: full (HW, Cp) slab per batch
                    wspec((Cp, 3 * Cip)),       # fused theta/phi/g weight
                    wspec((1, 3 * Cip)),        # fused theta/phi/g bias
                    wspec((Cip, Cp)),           # W weight (pre-transposed)
                    wspec((1, Cp)),             # W bias
                ],
                out_specs=big_spec,
                scratch_shapes=[
                    pltpu.VMEM((HW, Cip), cdt),          # theta (all query rows)
                    pltpu.VMEM((HW, Cip), cdt),          # phi (all keys resident)
                    pltpu.VMEM((HW, Cip), cdt),          # g
                    pltpu.VMEM((HW, Cip), jnp.float32),  # f32 output accumulator
                ],
            ),
            compiler_params=pltpu.CompilerParams(
                dimension_semantics=("parallel", "arbitrary"),
                vmem_limit_bytes=vmem_limit,
            ),
            cost_estimate=cost,
        )
        return call(x_bhwc, wtpg, btpg, ww_t, wb)

    try:
        out_p = run(True)
    except Exception:
        # Fallback for jax versions without BlockSpec(pipeline_mode=...) /
        # pl.Buffered(1): default double-buffered weights (same semantics).
        out_p = run(False)

    out_bhwc = out_p[:, :, :C] if Cp != C else out_p
    return jnp.transpose(out_bhwc.reshape(B, H, W, C), (0, 3, 1, 2))


def _reference(x_nchw, params):
    """Pure-JAX reference mirroring the PyTorch forward exactly."""
    B, C, H, W = x_nchw.shape
    Ci = C // 2
    x = x_nchw.astype(jnp.float32)

    def conv1x1(inp, w, b):  # inp (B,Cin,H,W), w (Cout,Cin), b (Cout,)
        y = jnp.einsum("bchw,oc->bohw", inp, w)
        return y + b[None, :, None, None]

    theta = conv1x1(x, params["theta_w"], params["theta_b"][0]).reshape(B, Ci, -1)
    phi = conv1x1(x, params["phi_w"], params["phi_b"][0]).reshape(B, Ci, -1)
    g = conv1x1(x, params["g_w"], params["g_b"][0]).reshape(B, Ci, -1)
    theta = jnp.transpose(theta, (0, 2, 1))                      # (B, HW, Ci)
    attn = jax.nn.softmax(jnp.einsum("bnc,bcm->bnm", theta, phi), axis=-1)
    out = jnp.einsum("bcn,bnm->bcm", g, attn).reshape(B, Ci, H, W)
    out = conv1x1(out, params["W_w"], params["W_b"][0])
    return x + out


if __name__ == "__main__":
    key = jax.random.PRNGKey(0)
    B, C, H, W = 2, 4, 16, 16
    Ci = C // 2

    ks = jax.random.split(key, 9)
    params = {
        # 1x1 conv weights stored as (out_ch, in_ch); biases as (1, out_ch).
        "theta_w": jax.random.normal(ks[0], (Ci, C), jnp.float32) * 0.1,
        "theta_b": jax.random.normal(ks[1], (1, Ci), jnp.float32) * 0.1,
        "phi_w":   jax.random.normal(ks[2], (Ci, C), jnp.float32) * 0.1,
        "phi_b":   jax.random.normal(ks[3], (1, Ci), jnp.float32) * 0.1,
        "g_w":     jax.random.normal(ks[4], (Ci, C), jnp.float32) * 0.1,
        "g_b":     jax.random.normal(ks[5], (1, Ci), jnp.float32) * 0.1,
        "W_w":     jax.random.normal(ks[6], (C, Ci), jnp.float32) * 0.1,
        "W_b":     jax.random.normal(ks[7], (1, C), jnp.float32) * 0.1,
    }
    x = jax.random.normal(ks[8], (B, C, H, W), jnp.float32)

    # max_tq=128 so the small demo (HW=256) exercises the multi-tile
    # accumulation path (2 query tiles); production default is 256 on v6e/v7x.
    out = jax.block_until_ready(non_local_block(x, params, max_tq=128))
    ref = jax.block_until_ready(_reference(x, params))

    assert out.shape == (B, C, H, W)
    err = float(jnp.max(jnp.abs(out - ref)))
    # bf16 MXU operands with f32 accumulation: small, bounded deviation.
    assert jnp.allclose(out, ref, atol=5e-3, rtol=5e-3), f"max abs err {err}"
    print("KERNEL_OK")
</pallas_src>

<mosaic_0001>
module attributes {stable_mosaic.version = 11 : i64} {
  func.func @_nonlocal_kernel(%arg0: i32, %arg1: i32, %arg2: memref<1x256x128xf32, #tpu.memory_space<vmem>>, %arg3: memref<128x384xbf16, #tpu.memory_space<vmem>>, %arg4: memref<1x384xf32, #tpu.memory_space<vmem>>, %arg5: memref<128x128xbf16, #tpu.memory_space<vmem>>, %arg6: memref<1x128xf32, #tpu.memory_space<vmem>>, %arg7: memref<1x256x128xf32, #tpu.memory_space<vmem>>, %arg8: memref<256x128xbf16, #tpu.memory_space<vmem>>, %arg9: memref<256x128xbf16, #tpu.memory_space<vmem>>, %arg10: memref<256x128xbf16, #tpu.memory_space<vmem>>, %arg11: memref<256x128xf32, #tpu.memory_space<vmem>>) attributes {dimension_semantics = [#tpu.dimension_semantics<parallel>, #tpu.dimension_semantics<arbitrary>], iteration_bounds = array<i64: 2, 2>, scalar_prefetch = 0 : i64, scratch_operands = 4 : i64, tpu.core_type = #tpu.core_type<tc>, window_params = [{transform_indices = @transform_0, window_bounds = array<i64: 1, 256, 128>}, {pipeline_mode = #tpu.pipeline_mode<synchronous>, transform_indices = @transform_1, window_bounds = array<i64: 128, 384>}, {pipeline_mode = #tpu.pipeline_mode<synchronous>, transform_indices = @transform_2, window_bounds = array<i64: 1, 384>}, {pipeline_mode = #tpu.pipeline_mode<synchronous>, transform_indices = @transform_3, window_bounds = array<i64: 128, 128>}, {pipeline_mode = #tpu.pipeline_mode<synchronous>, transform_indices = @transform_4, window_bounds = array<i64: 1, 128>}, {transform_indices = @transform_5, window_bounds = array<i64: 1, 256, 128>}]} {
    %c0_i32 = arith.constant 0 : i32
    %0 = arith.cmpi eq, %arg1, %c0_i32 : i32
    %1 = arith.extui %0 : i1 to i32
    %c0_i32_0 = arith.constant 0 : i32
    %2 = arith.cmpi ne, %1, %c0_i32_0 : i32
    scf.if %2 {
      %c0_13 = arith.constant 0 : index
      %c0_14 = arith.constant 0 : index
      %c0_15 = arith.constant 0 : index
      %37 = vector.load %arg2[%c0_13, %c0_14, %c0_15] : memref<1x256x128xf32, #tpu.memory_space<vmem>>, vector<1x256x128xf32>
      %38 = vector.shape_cast %37 : vector<1x256x128xf32> to vector<256x128xf32>
      %39 = arith.truncf %38 : vector<256x128xf32> to vector<256x128xbf16>
      %c0_16 = arith.constant 0 : index
      %c0_17 = arith.constant 0 : index
      %40 = vector.load %arg3[%c0_16, %c0_17] : memref<128x384xbf16, #tpu.memory_space<vmem>>, vector<128x128xbf16>
      %c0_18 = arith.constant 0 : index
      %c0_19 = arith.constant 0 : index
      %41 = vector.load %arg4[%c0_18, %c0_19] : memref<1x384xf32, #tpu.memory_space<vmem>>, vector<1x128xf32>
      %cst_20 = arith.constant dense<0.000000e+00> : vector<256x128xf32>
      %42 = tpu.matmul %39, %40, %cst_20 {dimension_numbers = #tpu.dot_dimension_numbers<[1], [0], [0], [1], [0, 0, 1, 1], [], []>} : vector<256x128xbf16>, vector<128x128xbf16>, vector<256x128xf32> -> vector<256x128xf32>
      %43 = vector.broadcast %41 : vector<1x128xf32> to vector<256x128xf32>
      %44 = arith.addf %42, %43 : vector<256x128xf32>
      %45 = arith.truncf %44 : vector<256x128xf32> to vector<256x128xbf16>
      %c0_21 = arith.constant 0 : index
      %c0_22 = arith.constant 0 : index
      %46 = vector.load %arg8[%c0_21, %c0_22] : memref<256x128xbf16, #tpu.memory_space<vmem>>, vector<256x128xbf16>
      tpu.vector_store %arg8[%c0_21, %c0_22], %45 {strides = array<i32>} : memref<256x128xbf16, #tpu.memory_space<vmem>>, vector<256x128xbf16>,
      %c0_23 = arith.constant 0 : index
      %c128 = arith.constant 128 : index
      %47 = vector.load %arg3[%c0_23, %c128] : memref<128x384xbf16, #tpu.memory_space<vmem>>, vector<128x128xbf16>
      %c0_24 = arith.constant 0 : index
      %c128_25 = arith.constant 128 : index
      %48 = vector.load %arg4[%c0_24, %c128_25] : memref<1x384xf32, #tpu.memory_space<vmem>>, vector<1x128xf32>
      %cst_26 = arith.constant dense<0.000000e+00> : vector<256x128xf32>
      %49 = tpu.matmul %39, %47, %cst_26 {dimension_numbers = #tpu.dot_dimension_numbers<[1], [0], [0], [1], [0, 0, 1, 1], [], []>} : vector<256x128xbf16>, vector<128x128xbf16>, vector<256x128xf32> -> vector<256x128xf32>
      %50 = vector.broadcast %48 : vector<1x128xf32> to vector<256x128xf32>
      %51 = arith.addf %49, %50 : vector<256x128xf32>
      %52 = arith.truncf %51 : vector<256x128xf32> to vector<256x128xbf16>
      %c0_27 = arith.constant 0 : index
      %c0_28 = arith.constant 0 : index
      %53 = vector.load %arg9[%c0_27, %c0_28] : memref<256x128xbf16, #tpu.memory_space<vmem>>, vector<256x128xbf16>
      tpu.vector_store %arg9[%c0_27, %c0_28], %52 {strides = array<i32>} : memref<256x128xbf16, #tpu.memory_space<vmem>>, vector<256x128xbf16>,
      %c0_29 = arith.constant 0 : index
      %c256 = arith.constant 256 : index
      %54 = vector.load %arg3[%c0_29, %c256] : memref<128x384xbf16, #tpu.memory_space<vmem>>, vector<128x128xbf16>
      %c0_30 = arith.constant 0 : index
      %c256_31 = arith.constant 256 : index
      %55 = vector.load %arg4[%c0_30, %c256_31] : memref<1x384xf32, #tpu.memory_space<vmem>>, vector<1x128xf32>
      %cst_32 = arith.constant dense<0.000000e+00> : vector<256x128xf32>
      %56 = tpu.matmul %39, %54, %cst_32 {dimension_numbers = #tpu.dot_dimension_numbers<[1], [0], [0], [1], [0, 0, 1, 1], [], []>} : vector<256x128xbf16>, vector<128x128xbf16>, vector<256x128xf32> -> vector<256x128xf32>
      %57 = vector.broadcast %55 : vector<1x128xf32> to vector<256x128xf32>
      %58 = arith.addf %56, %57 : vector<256x128xf32>
      %59 = arith.truncf %58 : vector<256x128xf32> to vector<256x128xbf16>
      %c0_33 = arith.constant 0 : index
      %c0_34 = arith.constant 0 : index
      %60 = vector.load %arg10[%c0_33, %c0_34] : memref<256x128xbf16, #tpu.memory_space<vmem>>, vector<256x128xbf16>
      tpu.vector_store %arg10[%c0_33, %c0_34], %59 {strides = array<i32>} : memref<256x128xbf16, #tpu.memory_space<vmem>>, vector<256x128xbf16>,
      %cst_35 = arith.constant 0.000000e+00 : f32
      %61 = vector.broadcast %cst_35 : f32 to vector<256x128xf32>
      %c0_36 = arith.constant 0 : index
      %c0_37 = arith.constant 0 : index
      %62 = vector.load %arg11[%c0_36, %c0_37] : memref<256x128xf32, #tpu.memory_space<vmem>>, vector<256x128xf32>
      tpu.vector_store %arg11[%c0_36, %c0_37], %61 {strides = array<i32>} : memref<256x128xf32, #tpu.memory_space<vmem>>, vector<256x128xf32>,
    } else {
    }
    %c128_i32 = arith.constant 128 : i32
    %3 = arith.muli %arg1, %c128_i32 : i32
    %4 = tpu.assume_multiple %3, 128 : i32
    %5 = arith.index_cast %4 : i32 to index
    %c0 = arith.constant 0 : index
    %6 = vector.load %arg8[%5, %c0] : memref<256x128xbf16, #tpu.memory_space<vmem>>, vector<128x128xbf16>
    %7 = arith.index_cast %4 : i32 to index
    %c0_1 = arith.constant 0 : index
    %8 = vector.load %arg10[%7, %c0_1] : memref<256x128xbf16, #tpu.memory_space<vmem>>, vector<128x128xbf16>
    %c0_2 = arith.constant 0 : index
    %c0_3 = arith.constant 0 : index
    %9 = vector.load %arg9[%c0_2, %c0_3] : memref<256x128xbf16, #tpu.memory_space<vmem>>, vector<256x128xbf16>
    %cst = arith.constant dense<0.000000e+00> : vector<256x128xf32>
    %10 = tpu.matmul %9, %6, %cst {dimension_numbers = #tpu.dot_dimension_numbers<[1], [1], [0], [0], [0, 0, 1, 0], [], []>} : vector<256x128xbf16>, vector<128x128xbf16>, vector<256x128xf32> -> vector<256x128xf32>
    %cst_4 = arith.constant dense<0xFF800000> : vector<128xf32>
    %11 = vector.multi_reduction <maximumf>, %10, %cst_4 [0] : vector<256x128xf32> to vector<128xf32>
    %12 = vector.shape_cast %11 : vector<128xf32> to vector<1x128xf32>
    %13 = vector.broadcast %12 : vector<1x128xf32> to vector<256x128xf32>
    %14 = arith.subf %10, %13 : vector<256x128xf32>
    %15 = math.exp %14 : vector<256x128xf32>
    %cst_5 = arith.constant dense<0.000000e+00> : vector<128xf32>
    %16 = vector.multi_reduction <add>, %15, %cst_5 [0] : vector<256x128xf32> to vector<128xf32>
    %17 = vector.shape_cast %16 : vector<128xf32> to vector<1x128xf32>
    %18 = tpu.reciprocal %17 : vector<1x128xf32> -> vector<1x128xf32>
    %19 = tpu.iota {dimensions = array<i32: 0>} : vector<128x128xi32>
    %20 = tpu.iota {dimensions = array<i32: 1>} : vector<128x128xi32>
    %21 = arith.cmpi eq, %19, %20 : vector<128x128xi32>
    %22 = arith.extui %21 : vector<128x128xi1> to vector<128x128xi32>
    %23 = arith.sitofp %22 : vector<128x128xi32> to vector<128x128xf32>
    %cst_6 = arith.constant dense<0.000000e+00> : vector<128x1xf32>
    %24 = tpu.matmul %23, %18, %cst_6 {dimension_numbers = #tpu.dot_dimension_numbers<[1], [1], [0], [0], [0, 0, 1, 0], [], []>} : vector<128x128xf32>, vector<1x128xf32>, vector<128x1xf32> -> vector<128x1xf32>
    %25 = arith.extf %8 : vector<128x128xbf16> to vector<128x128xf32>
    %26 = vector.broadcast %24 : vector<128x1xf32> to vector<128x128xf32>
    %27 = arith.mulf %25, %26 : vector<128x128xf32>
    %28 = arith.truncf %27 : vector<128x128xf32> to vector<128x128xbf16>
    %c0_7 = arith.constant 0 : index
    %c0_8 = arith.constant 0 : index
    %29 = vector.load %arg11[%c0_7, %c0_8] : memref<256x128xf32, #tpu.memory_space<vmem>>, vector<256x128xf32>
    %30 = arith.truncf %15 : vector<256x128xf32> to vector<256x128xbf16>
    %cst_9 = arith.constant dense<0.000000e+00> : vector<256x128xf32>
    %31 = tpu.matmul %30, %28, %cst_9 {dimension_numbers = #tpu.dot_dimension_numbers<[1], [0], [0], [1], [0, 0, 1, 1], [], []>} : vector<256x128xbf16>, vector<128x128xbf16>, vector<256x128xf32> -> vector<256x128xf32>
    %32 = arith.addf %29, %31 : vector<256x128xf32>
    %c0_10 = arith.constant 0 : index
    %c0_11 = arith.constant 0 : index
    %33 = vector.load %arg11[%c0_10, %c0_11] : memref<256x128xf32, #tpu.memory_space<vmem>>, vector<256x128xf32>
    tpu.vector_store %arg11[%c0_10, %c0_11], %32 {strides = array<i32>} : memref<256x128xf32, #tpu.memory_space<vmem>>, vector<256x128xf32>,
    %c1_i32 = arith.constant 1 : i32
    %34 = arith.cmpi eq, %arg1, %c1_i32 : i32
    %35 = arith.extui %34 : i1 to i32
    %c0_i32_12 = arith.constant 0 : i32
    %36 = arith.cmpi ne, %35, %c0_i32_12 : i32
    scf.if %36 {
      %c0_13 = arith.constant 0 : index
      %c0_14 = arith.constant 0 : index
      %37 = vector.load %arg11[%c0_13, %c0_14] : memref<256x128xf32, #tpu.memory_space<vmem>>, vector<256x128xf32>
      %38 = arith.truncf %37 : vector<256x128xf32> to vector<256x128xbf16>
      %c0_15 = arith.constant 0 : index
      %c0_16 = arith.constant 0 : index
      %39 = vector.load %arg5[%c0_15, %c0_16] : memref<128x128xbf16, #tpu.memory_space<vmem>>, vector<128x128xbf16>
      %cst_17 = arith.constant dense<0.000000e+00> : vector<256x128xf32>
      %40 = tpu.matmul %38, %39, %cst_17 {dimension_numbers = #tpu.dot_dimension_numbers<[1], [0], [0], [1], [0, 0, 1, 1], [], []>} : vector<256x128xbf16>, vector<128x128xbf16>, vector<256x128xf32> -> vector<256x128xf32>
      %c0_18 = arith.constant 0 : index
      %c0_19 = arith.constant 0 : index
      %41 = vector.load %arg6[%c0_18, %c0_19] : memref<1x128xf32, #tpu.memory_space<vmem>>, vector<1x128xf32>
      %42 = vector.broadcast %41 : vector<1x128xf32> to vector<256x128xf32>
      %43 = arith.addf %40, %42 : vector<256x128xf32>
      %c0_20 = arith.constant 0 : index
      %c0_21 = arith.constant 0 : index
      %c0_22 = arith.constant 0 : index
      %44 = vector.load %arg2[%c0_20, %c0_21, %c0_22] : memref<1x256x128xf32, #tpu.memory_space<vmem>>, vector<1x256x128xf32>
      %45 = vector.shape_cast %44 : vector<1x256x128xf32> to vector<256x128xf32>
      %46 = arith.addf %45, %43 : vector<256x128xf32>
      %c0_23 = arith.constant 0 : index
      %c0_24 = arith.constant 0 : index
      %c0_25 = arith.constant 0 : index
      %47 = vector.load %arg7[%c0_23, %c0_24, %c0_25] : memref<1x256x128xf32, #tpu.memory_space<vmem>>, vector<1x256x128xf32>
      %48 = vector.shape_cast %47 : vector<1x256x128xf32> to vector<256x128xf32>
      %49 = vector.shape_cast %46 : vector<256x128xf32> to vector<1x256x128xf32>
      tpu.vector_store %arg7[%c0_23, %c0_24, %c0_25], %49 {strides = array<i32>} : memref<1x256x128xf32, #tpu.memory_space<vmem>>, vector<1x256x128xf32>,
    } else {
    }
    return
  }
  func.func @transform_0(%arg0: i32, %arg1: i32) -> (i32, i32, i32) {
    %c0_i32 = arith.constant 0 : i32
    %c0_i32_0 = arith.constant 0 : i32
    %c0_i32_1 = arith.constant 0 : i32
    return %arg0, %c0_i32, %c0_i32_0 : i32, i32, i32
  }
  func.func @transform_1(%arg0: i32, %arg1: i32) -> (i32, i32) {
    %c0_i32 = arith.constant 0 : i32
    %c0_i32_0 = arith.constant 0 : i32
    %c0_i32_1 = arith.constant 0 : i32
    return %c0_i32, %c0_i32_0 : i32, i32
  }
  func.func @transform_2(%arg0: i32, %arg1: i32) -> (i32, i32) {
    %c0_i32 = arith.constant 0 : i32
    %c0_i32_0 = arith.constant 0 : i32
    %c0_i32_1 = arith.constant 0 : i32
    return %c0_i32, %c0_i32_0 : i32, i32
  }
  func.func @transform_3(%arg0: i32, %arg1: i32) -> (i32, i32) {
    %c0_i32 = arith.constant 0 : i32
    %c0_i32_0 = arith.constant 0 : i32
    %c0_i32_1 = arith.constant 0 : i32
    return %c0_i32, %c0_i32_0 : i32, i32
  }
  func.func @transform_4(%arg0: i32, %arg1: i32) -> (i32, i32) {
    %c0_i32 = arith.constant 0 : i32
    %c0_i32_0 = arith.constant 0 : i32
    %c0_i32_1 = arith.constant 0 : i32
    return %c0_i32, %c0_i32_0 : i32, i32
  }
  func.func @transform_5(%arg0: i32, %arg1: i32) -> (i32, i32, i32) {
    %c0_i32 = arith.constant 0 : i32
    %c0_i32_0 = arith.constant 0 : i32
    %c0_i32_1 = arith.constant 0 : i32
    return %arg0, %c0_i32, %c0_i32_0 : i32, i32, i32
  }
}

module attributes {stable_mosaic.version = 11 : i64} {
  func.func @_nonlocal_kernel(%arg0: i32, %arg1: i32, %arg2: memref<1x256x128xf32, #tpu.memory_space<vmem>>, %arg3: memref<128x384xbf16, #tpu.memory_space<vmem>>, %arg4: memref<1x384xf32, #tpu.memory_space<vmem>>, %arg5: memref<128x128xbf16, #tpu.memory_space<vmem>>, %arg6: memref<1x128xf32, #tpu.memory_space<vmem>>, %arg7: memref<1x256x128xf32, #tpu.memory_space<vmem>>, %arg8: memref<256x128xbf16, #tpu.memory_space<vmem>>, %arg9: memref<256x128xbf16, #tpu.memory_space<vmem>>, %arg10: memref<256x128xbf16, #tpu.memory_space<vmem>>, %arg11: memref<256x128xf32, #tpu.memory_space<vmem>>) attributes {dimension_semantics = [#tpu.dimension_semantics<parallel>, #tpu.dimension_semantics<arbitrary>], iteration_bounds = array<i64: 2, 2>, scalar_prefetch = 0 : i64, scratch_operands = 4 : i64, tpu.core_type = #tpu.core_type<tc>, window_params = [{transform_indices = @transform_0, window_bounds = array<i64: 1, 256, 128>}, {pipeline_mode = #tpu.pipeline_mode<synchronous>, transform_indices = @transform_1, window_bounds = array<i64: 128, 384>}, {pipeline_mode = #tpu.pipeline_mode<synchronous>, transform_indices = @transform_2, window_bounds = array<i64: 1, 384>}, {pipeline_mode = #tpu.pipeline_mode<synchronous>, transform_indices = @transform_3, window_bounds = array<i64: 128, 128>}, {pipeline_mode = #tpu.pipeline_mode<synchronous>, transform_indices = @transform_4, window_bounds = array<i64: 1, 128>}, {transform_indices = @transform_5, window_bounds = array<i64: 1, 256, 128>}]} {
    %c0_i32 = arith.constant 0 : i32
    %0 = arith.cmpi eq, %arg1, %c0_i32 : i32
    %1 = arith.extui %0 : i1 to i32
    %c0_i32_0 = arith.constant 0 : i32
    %2 = arith.cmpi ne, %1, %c0_i32_0 : i32
    scf.if %2 {
      %c0_13 = arith.constant 0 : index
      %c0_14 = arith.constant 0 : index
      %c0_15 = arith.constant 0 : index
      %37 = vector.load %arg2[%c0_13, %c0_14, %c0_15] : memref<1x256x128xf32, #tpu.memory_space<vmem>>, vector<1x256x128xf32>
      %38 = vector.shape_cast %37 : vector<1x256x128xf32> to vector<256x128xf32>
      %39 = arith.truncf %38 : vector<256x128xf32> to vector<256x128xbf16>
      %c0_16 = arith.constant 0 : index
      %c0_17 = arith.constant 0 : index
      %40 = vector.load %arg3[%c0_16, %c0_17] : memref<128x384xbf16, #tpu.memory_space<vmem>>, vector<128x128xbf16>
      %c0_18 = arith.constant 0 : index
      %c0_19 = arith.constant 0 : index
      %41 = vector.load %arg4[%c0_18, %c0_19] : memref<1x384xf32, #tpu.memory_space<vmem>>, vector<1x128xf32>
      %cst_20 = arith.constant dense<0.000000e+00> : vector<256x128xf32>
      %42 = tpu.matmul %39, %40, %cst_20 {dimension_numbers = #tpu.dot_dimension_numbers<[1], [0], [0], [1], [0, 0, 1, 1], [], []>} : vector<256x128xbf16>, vector<128x128xbf16>, vector<256x128xf32> -> vector<256x128xf32>
      %43 = vector.broadcast %41 : vector<1x128xf32> to vector<256x128xf32>
      %44 = arith.addf %42, %43 : vector<256x128xf32>
      %45 = arith.truncf %44 : vector<256x128xf32> to vector<256x128xbf16>
      %c0_21 = arith.constant 0 : index
      %c0_22 = arith.constant 0 : index
      %46 = vector.load %arg8[%c0_21, %c0_22] : memref<256x128xbf16, #tpu.memory_space<vmem>>, vector<256x128xbf16>
      tpu.vector_store %arg8[%c0_21, %c0_22], %45 {strides = array<i32>} : memref<256x128xbf16, #tpu.memory_space<vmem>>, vector<256x128xbf16>,
      %c0_23 = arith.constant 0 : index
      %c128 = arith.constant 128 : index
      %47 = vector.load %arg3[%c0_23, %c128] : memref<128x384xbf16, #tpu.memory_space<vmem>>, vector<128x128xbf16>
      %c0_24 = arith.constant 0 : index
      %c128_25 = arith.constant 128 : index
      %48 = vector.load %arg4[%c0_24, %c128_25] : memref<1x384xf32, #tpu.memory_space<vmem>>, vector<1x128xf32>
      %cst_26 = arith.constant dense<0.000000e+00> : vector<256x128xf32>
      %49 = tpu.matmul %39, %47, %cst_26 {dimension_numbers = #tpu.dot_dimension_numbers<[1], [0], [0], [1], [0, 0, 1, 1], [], []>} : vector<256x128xbf16>, vector<128x128xbf16>, vector<256x128xf32> -> vector<256x128xf32>
      %50 = vector.broadcast %48 : vector<1x128xf32> to vector<256x128xf32>
      %51 = arith.addf %49, %50 : vector<256x128xf32>
      %52 = arith.truncf %51 : vector<256x128xf32> to vector<256x128xbf16>
      %c0_27 = arith.constant 0 : index
      %c0_28 = arith.constant 0 : index
      %53 = vector.load %arg9[%c0_27, %c0_28] : memref<256x128xbf16, #tpu.memory_space<vmem>>, vector<256x128xbf16>
      tpu.vector_store %arg9[%c0_27, %c0_28], %52 {strides = array<i32>} : memref<256x128xbf16, #tpu.memory_space<vmem>>, vector<256x128xbf16>,
      %c0_29 = arith.constant 0 : index
      %c256 = arith.constant 256 : index
      %54 = vector.load %arg3[%c0_29, %c256] : memref<128x384xbf16, #tpu.memory_space<vmem>>, vector<128x128xbf16>
      %c0_30 = arith.constant 0 : index
      %c256_31 = arith.constant 256 : index
      %55 = vector.load %arg4[%c0_30, %c256_31] : memref<1x384xf32, #tpu.memory_space<vmem>>, vector<1x128xf32>
      %cst_32 = arith.constant dense<0.000000e+00> : vector<256x128xf32>
      %56 = tpu.matmul %39, %54, %cst_32 {dimension_numbers = #tpu.dot_dimension_numbers<[1], [0], [0], [1], [0, 0, 1, 1], [], []>} : vector<256x128xbf16>, vector<128x128xbf16>, vector<256x128xf32> -> vector<256x128xf32>
      %57 = vector.broadcast %55 : vector<1x128xf32> to vector<256x128xf32>
      %58 = arith.addf %56, %57 : vector<256x128xf32>
      %59 = arith.truncf %58 : vector<256x128xf32> to vector<256x128xbf16>
      %c0_33 = arith.constant 0 : index
      %c0_34 = arith.constant 0 : index
      %60 = vector.load %arg10[%c0_33, %c0_34] : memref<256x128xbf16, #tpu.memory_space<vmem>>, vector<256x128xbf16>
      tpu.vector_store %arg10[%c0_33, %c0_34], %59 {strides = array<i32>} : memref<256x128xbf16, #tpu.memory_space<vmem>>, vector<256x128xbf16>,
      %cst_35 = arith.constant 0.000000e+00 : f32
      %61 = vector.broadcast %cst_35 : f32 to vector<256x128xf32>
      %c0_36 = arith.constant 0 : index
      %c0_37 = arith.constant 0 : index
      %62 = vector.load %arg11[%c0_36, %c0_37] : memref<256x128xf32, #tpu.memory_space<vmem>>, vector<256x128xf32>
      tpu.vector_store %arg11[%c0_36, %c0_37], %61 {strides = array<i32>} : memref<256x128xf32, #tpu.memory_space<vmem>>, vector<256x128xf32>,
    } else {
    }
    %c128_i32 = arith.constant 128 : i32
    %3 = arith.muli %arg1, %c128_i32 : i32
    %4 = tpu.assume_multiple %3, 128 : i32
    %5 = arith.index_cast %4 : i32 to index
    %c0 = arith.constant 0 : index
    %6 = vector.load %arg8[%5, %c0] : memref<256x128xbf16, #tpu.memory_space<vmem>>, vector<128x128xbf16>
    %7 = arith.index_cast %4 : i32 to index
    %c0_1 = arith.constant 0 : index
    %8 = vector.load %arg10[%7, %c0_1] : memref<256x128xbf16, #tpu.memory_space<vmem>>, vector<128x128xbf16>
    %c0_2 = arith.constant 0 : index
    %c0_3 = arith.constant 0 : index
    %9 = vector.load %arg9[%c0_2, %c0_3] : memref<256x128xbf16, #tpu.memory_space<vmem>>, vector<256x128xbf16>
    %cst = arith.constant dense<0.000000e+00> : vector<256x128xf32>
    %10 = tpu.matmul %9, %6, %cst {dimension_numbers = #tpu.dot_dimension_numbers<[1], [1], [0], [0], [0, 0, 1, 0], [], []>} : vector<256x128xbf16>, vector<128x128xbf16>, vector<256x128xf32> -> vector<256x128xf32>
    %cst_4 = arith.constant dense<0xFF800000> : vector<128xf32>
    %11 = vector.multi_reduction <maximumf>, %10, %cst_4 [0] : vector<256x128xf32> to vector<128xf32>
    %12 = vector.shape_cast %11 : vector<128xf32> to vector<1x128xf32>
    %13 = vector.broadcast %12 : vector<1x128xf32> to vector<256x128xf32>
    %14 = arith.subf %10, %13 : vector<256x128xf32>
    %15 = math.exp %14 : vector<256x128xf32>
    %cst_5 = arith.constant dense<0.000000e+00> : vector<128xf32>
    %16 = vector.multi_reduction <add>, %15, %cst_5 [0] : vector<256x128xf32> to vector<128xf32>
    %17 = vector.shape_cast %16 : vector<128xf32> to vector<1x128xf32>
    %18 = tpu.reciprocal %17 : vector<1x128xf32> -> vector<1x128xf32>
    %19 = tpu.iota {dimensions = array<i32: 0>} : vector<128x128xi32>
    %20 = tpu.iota {dimensions = array<i32: 1>} : vector<128x128xi32>
    %21 = arith.cmpi eq, %19, %20 : vector<128x128xi32>
    %22 = arith.extui %21 : vector<128x128xi1> to vector<128x128xi32>
    %23 = arith.sitofp %22 : vector<128x128xi32> to vector<128x128xf32>
    %cst_6 = arith.constant dense<0.000000e+00> : vector<128x1xf32>
    %24 = tpu.matmul %23, %18, %cst_6 {dimension_numbers = #tpu.dot_dimension_numbers<[1], [1], [0], [0], [0, 0, 1, 0], [], []>} : vector<128x128xf32>, vector<1x128xf32>, vector<128x1xf32> -> vector<128x1xf32>
    %25 = arith.extf %8 : vector<128x128xbf16> to vector<128x128xf32>
    %26 = vector.broadcast %24 : vector<128x1xf32> to vector<128x128xf32>
    %27 = arith.mulf %25, %26 : vector<128x128xf32>
    %28 = arith.truncf %27 : vector<128x128xf32> to vector<128x128xbf16>
    %c0_7 = arith.constant 0 : index
    %c0_8 = arith.constant 0 : index
    %29 = vector.load %arg11[%c0_7, %c0_8] : memref<256x128xf32, #tpu.memory_space<vmem>>, vector<256x128xf32>
    %30 = arith.truncf %15 : vector<256x128xf32> to vector<256x128xbf16>
    %cst_9 = arith.constant dense<0.000000e+00> : vector<256x128xf32>
    %31 = tpu.matmul %30, %28, %cst_9 {dimension_numbers = #tpu.dot_dimension_numbers<[1], [0], [0], [1], [0, 0, 1, 1], [], []>} : vector<256x128xbf16>, vector<128x128xbf16>, vector<256x128xf32> -> vector<256x128xf32>
    %32 = arith.addf %29, %31 : vector<256x128xf32>
    %c0_10 = arith.constant 0 : index
    %c0_11 = arith.constant 0 : index
    %33 = vector.load %arg11[%c0_10, %c0_11] : memref<256x128xf32, #tpu.memory_space<vmem>>, vector<256x128xf32>
    tpu.vector_store %arg11[%c0_10, %c0_11], %32 {strides = array<i32>} : memref<256x128xf32, #tpu.memory_space<vmem>>, vector<256x128xf32>,
    %c1_i32 = arith.constant 1 : i32
    %34 = arith.cmpi eq, %arg1, %c1_i32 : i32
    %35 = arith.extui %34 : i1 to i32
    %c0_i32_12 = arith.constant 0 : i32
    %36 = arith.cmpi ne, %35, %c0_i32_12 : i32
    scf.if %36 {
      %c0_13 = arith.constant 0 : index
      %c0_14 = arith.constant 0 : index
      %37 = vector.load %arg11[%c0_13, %c0_14] : memref<256x128xf32, #tpu.memory_space<vmem>>, vector<256x128xf32>
      %38 = arith.truncf %37 : vector<256x128xf32> to vector<256x128xbf16>
      %c0_15 = arith.constant 0 : index
      %c0_16 = arith.constant 0 : index
      %39 = vector.load %arg5[%c0_15, %c0_16] : memref<128x128xbf16, #tpu.memory_space<vmem>>, vector<128x128xbf16>
      %cst_17 = arith.constant dense<0.000000e+00> : vector<256x128xf32>
      %40 = tpu.matmul %38, %39, %cst_17 {dimension_numbers = #tpu.dot_dimension_numbers<[1], [0], [0], [1], [0, 0, 1, 1], [], []>} : vector<256x128xbf16>, vector<128x128xbf16>, vector<256x128xf32> -> vector<256x128xf32>
      %c0_18 = arith.constant 0 : index
      %c0_19 = arith.constant 0 : index
      %41 = vector.load %arg6[%c0_18, %c0_19] : memref<1x128xf32, #tpu.memory_space<vmem>>, vector<1x128xf32>
      %42 = vector.broadcast %41 : vector<1x128xf32> to vector<256x128xf32>
      %43 = arith.addf %40, %42 : vector<256x128xf32>
      %c0_20 = arith.constant 0 : index
      %c0_21 = arith.constant 0 : index
      %c0_22 = arith.constant 0 : index
      %44 = vector.load %arg2[%c0_20, %c0_21, %c0_22] : memref<1x256x128xf32, #tpu.memory_space<vmem>>, vector<1x256x128xf32>
      %45 = vector.shape_cast %44 : vector<1x256x128xf32> to vector<256x128xf32>
      %46 = arith.addf %45, %43 : vector<256x128xf32>
      %c0_23 = arith.constant 0 : index
      %c0_24 = arith.constant 0 : index
      %c0_25 = arith.constant 0 : index
      %47 = vector.load %arg7[%c0_23, %c0_24, %c0_25] : memref<1x256x128xf32, #tpu.memory_space<vmem>>, vector<1x256x128xf32>
      %48 = vector.shape_cast %47 : vector<1x256x128xf32> to vector<256x128xf32>
      %49 = vector.shape_cast %46 : vector<256x128xf32> to vector<1x256x128xf32>
      tpu.vector_store %arg7[%c0_23, %c0_24, %c0_25], %49 {strides = array<i32>} : memref<1x256x128xf32, #tpu.memory_space<vmem>>, vector<1x256x128xf32>,
    } else {
    }
    return
  }
  func.func @transform_0(%arg0: i32, %arg1: i32) -> (i32, i32, i32) {
    %c0_i32 = arith.constant 0 : i32
    %c0_i32_0 = arith.constant 0 : i32
    %c0_i32_1 = arith.constant 0 : i32
    return %arg0, %c0_i32, %c0_i32_0 : i32, i32, i32
  }
  func.func @transform_1(%arg0: i32, %arg1: i32) -> (i32, i32) {
    %c0_i32 = arith.constant 0 : i32
    %c0_i32_0 = arith.constant 0 : i32
    %c0_i32_1 = arith.constant 0 : i32
    return %c0_i32, %c0_i32_0 : i32, i32
  }
  func.func @transform_2(%arg0: i32, %arg1: i32) -> (i32, i32) {
    %c0_i32 = arith.constant 0 : i32
    %c0_i32_0 = arith.constant 0 : i32
    %c0_i32_1 = arith.constant 0 : i32
    return %c0_i32, %c0_i32_0 : i32, i32
  }
  func.func @transform_3(%arg0: i32, %arg1: i32) -> (i32, i32) {
    %c0_i32 = arith.constant 0 : i32
    %c0_i32_0 = arith.constant 0 : i32
    %c0_i32_1 = arith.constant 0 : i32
    return %c0_i32, %c0_i32_0 : i32, i32
  }
  func.func @transform_4(%arg0: i32, %arg1: i32) -> (i32, i32) {
    %c0_i32 = arith.constant 0 : i32
    %c0_i32_0 = arith.constant 0 : i32
    %c0_i32_1 = arith.constant 0 : i32
    return %c0_i32, %c0_i32_0 : i32, i32
  }
  func.func @transform_5(%arg0: i32, %arg1: i32) -> (i32, i32, i32) {
    %c0_i32 = arith.constant 0 : i32
    %c0_i32_0 = arith.constant 0 : i32
    %c0_i32_1 = arith.constant 0 : i32
    return %arg0, %c0_i32, %c0_i32_0 : i32, i32, i32
  }
}

</mosaic_0001>

<llo_original>
// kernel: tpu_custom_call.1
$region0: #{tpu_custom_call.1}
  #allocation0 [shape = 'u32[]', space=smem, size = 0x4, offset = 0x4, fixed_abs, tag = 'smem constant byte address 0x4 - core index']
  #allocation1 [shape = 'u32[144,128]{1,0:T(1,128)}', space=vmem, size = 0x12000, scoped, tag = 'internal scratch']
  #allocation2 [shape = 'bf16[256,128]{1,0:T(16,128)(2,1)}', space=vmem, size = 0x10000, scoped, tag = 'scratch operand']
  #allocation3 [shape = 'bf16[256,128]{1,0:T(16,128)(2,1)}', space=vmem, size = 0x10000, scoped, tag = 'scratch operand']
  #allocation4 [shape = 'bf16[256,128]{1,0:T(16,128)(2,1)}', space=vmem, size = 0x10000, scoped, tag = 'scratch operand']
  #allocation5 [shape = 'f32[256,128]{1,0:T(8,128)}', space=vmem, size = 0x20000, scoped, tag = 'scratch operand']
  %s0 = inlined_call_operand.hbm [shape: f32[2,256,128], index: 0, kind: input, shape index: {}]
  %s1 = inlined_call_operand.hbm [shape: bf16[128,384], index: 1, kind: input, shape index: {}]
  %s2 = inlined_call_operand.vmem [shape: f32[1,384], index: 2, kind: input, shape index: {}]
  %s3 = inlined_call_operand.hbm [shape: bf16[128,128], index: 3, kind: input, shape index: {}]
  %s4 = inlined_call_operand.vmem [shape: f32[1,128], index: 4, kind: input, shape index: {}]
  %s5 = inlined_call_operand.hbm [shape: f32[2,256,128], index: 5, kind: output, shape index: {}]
  %s6 = sld [smem:[#allocation0]]
  $region73: #{tpu_custom_call.1} parent=0
    _
  %s8 = ssub.s32 1, %s6
  %s9 = scalar_select 0, %s8, %s6
  $region1: #{tpu_custom_call.1} parent=0
    #allocation6 [shape = 'u8[262144]{0}', space=vmem, size = 0x40000, scoped, tag = 'input window, operand 0']
    #allocation7 [shape = 's32[2]{0}', space=sflag, size = 0x8, scoped, tag = 'scoped memory for tpu_custom_call.1']
    #allocation8 [shape = 's32[2]{0}', space=sflag, size = 0x8, scoped, tag = 'scoped memory for tpu_custom_call.1']
    #allocation9 [shape = 'u8[98304]{0}', space=vmem, size = 0x18000, scoped, tag = 'input window, operand 1, single buffered']
    #allocation10 [shape = 's32[1]{0}', space=sflag, size = 0x4, scoped, tag = 'scoped memory for tpu_custom_call.1']
    #allocation11 [shape = 'u8[32768]{0}', space=vmem, size = 0x8000, scoped, tag = 'input window, operand 3, single buffered']
    #allocation12 [shape = 'u8[262144]{0}', space=vmem, size = 0x40000, scoped, tag = 'output window, operand 0']
    %10 = vsyncpa [#allocation7], 0
    %s11 = scalar_lea.sflag [#allocation7], 1
    %12 = vsyncpa %s11, 0
    %13 = vsyncpa [#allocation10], 0
    %14 = vsyncpa [#allocation8], 0
    %s15 = scalar_lea.sflag [#allocation8], 1
    %16 = vsyncpa %s15, 0
    loop: start=0, step=1, limit=6
    $region2: #{tpu_custom_call.1} parent=1 // loop_pre_header
      _
    $region3: #{tpu_custom_call.1} parent=1 // loop_header
      %s18 = sphi 0, %s22
      %p19 = scmp.ge.s32.totalorder %s18, 6
      %s25 = sphi 0, %s37
      %s26 = sphi 0, %s33
      %s27 = sphi 0, %s25
      %s28 = sphi 0, %s26
      %s29 = sphi 0, %s27
      %s30 = sphi 0, %s28
      %s40 = sphi 0, %s42
      %s43 = sphi 0, %s40
      %s44 = sphi 0, %s43
      %s60 = sphi 0, %s44
      %s64 = sphi 0, %s64
      %s66 = sphi 0, %s64
      %s67 = sphi 0, %s66
      %s81 = sphi 0, %s67
      %s85 = sphi 0, %s85
      %s87 = sphi 0, %s85
      %s88 = sphi 0, %s87
      %s102 = sphi 0, %s88
      %s106 = sphi 0, %s106
      %s108 = sphi 0, %s106
      %s109 = sphi 0, %s108
      %s123 = sphi 0, %s109
      %s127 = sphi 0, %s127
      %s129 = sphi 0, %s127
      %s130 = sphi 0, %s129
      %s144 = sphi 0, %s130
      %s150 = sphi 0, %s152
      %s153 = sphi 0, %s150
      %s154 = sphi 0, %s153
      %s170 = sphi 0, %s154
    $region4: #{tpu_custom_call.1} parent=1 // loop_header_branch
      %21 = sbr.rel (%p19) target = $region8
    $region5: #{tpu_custom_call.1} parent=1 // loop_body
      %s23 = ssub.s32 %s18, 1
      %s24 = ssub.s32 %s18, 2
      %s31 = sadd.s32 1, %s26
      %p32 = scmp.ge.s32.totalorder %s31, 2
      %s33 = scalar_select %p32, 0, %s31
      %s34 = sadd.s32 1, %s25
      %s35 = scalar_select %p32, %s34, %s25
      %p36 = scmp.ge.s32.totalorder %s35, 2
      %s37 = scalar_select %p36, 0, %s35
      %s38 = ssub.s32 %s25, %s37
      %p39 = scmp.eq.s32.totalorder %s38, 0
      %s41 = sadd.s32 %s40, 1
      %s42 = scalar_select %p39, %s40, %s41
      %p45 = pneg %p39
      %p46 = scmp.eq.s32.totalorder %s18, 3
      %p47 = por %p45, %p46
      %p48 = scmp.ne.s32.totalorder %s40, %s43
      %p49 = scmp.eq.s32.totalorder %s18, 0
      %p50 = por %p48, %p49
      %p51 = scmp.ne.s32.totalorder %s40, %s43
      %p52 = scmp.eq.s32.totalorder %s23, 3
      %p53 = por %p51, %p52
      %p54 = scmp.ne.s32.totalorder %s43, %s44
      %p55 = scmp.eq.s32.totalorder %s23, 0
      %p56 = por %p54, %p55
      %p57 = scmp.ne.s32.totalorder %s43, %s44
      %p58 = scmp.eq.s32.totalorder %s24, 3
      %p59 = por %p57, %p58
      %p61 = scmp.ne.s32.totalorder %s44, %s60
      %p62 = scmp.eq.s32.totalorder %s24, 0
      %p63 = por %p61, %p62
      %s65 = sadd.s32 %s64, 1
      %p68 = scmp.eq.s32.totalorder %s18, 3
      %p69 = scmp.ne.s32.totalorder %s64, %s66
      %p70 = scmp.eq.s32.totalorder %s18, 0
      %p71 = por %p69, %p70
      %p72 = scmp.ne.s32.totalorder %s64, %s66
      %p73 = scmp.eq.s32.totalorder %s23, 3
      %p74 = por %p72, %p73
      %p75 = scmp.ne.s32.totalorder %s66, %s67
      %p76 = scmp.eq.s32.totalorder %s23, 0
      %p77 = por %p75, %p76
      %p78 = scmp.ne.s32.totalorder %s66, %s67
      %p79 = scmp.eq.s32.totalorder %s24, 3
      %p80 = por %p78, %p79
      %p82 = scmp.ne.s32.totalorder %s67, %s81
      %p83 = scmp.eq.s32.totalorder %s24, 0
      %p84 = por %p82, %p83
      %s86 = sadd.s32 %s85, 1
      %p89 = scmp.eq.s32.totalorder %s18, 3
      %p90 = scmp.ne.s32.totalorder %s85, %s87
      %p91 = scmp.eq.s32.totalorder %s18, 0
      %p92 = por %p90, %p91
      %p93 = scmp.ne.s32.totalorder %s85, %s87
      %p94 = scmp.eq.s32.totalorder %s23, 3
      %p95 = por %p93, %p94
      %p96 = scmp.ne.s32.totalorder %s87, %s88
      %p97 = scmp.eq.s32.totalorder %s23, 0
      %p98 = por %p96, %p97
      %p99 = scmp.ne.s32.totalorder %s87, %s88
      %p100 = scmp.eq.s32.totalorder %s24, 3
      %p101 = por %p99, %p100
      %p103 = scmp.ne.s32.totalorder %s88, %s102
      %p104 = scmp.eq.s32.totalorder %s24, 0
      %p105 = por %p103, %p104
      %s107 = sadd.s32 %s106, 1
      %p110 = scmp.eq.s32.totalorder %s18, 3
      %p111 = scmp.ne.s32.totalorder %s106, %s108
      %p112 = scmp.eq.s32.totalorder %s18, 0
      %p113 = por %p111, %p112
      %p114 = scmp.ne.s32.totalorder %s106, %s108
      %p115 = scmp.eq.s32.totalorder %s23, 3
      %p116 = por %p114, %p115
      %p117 = scmp.ne.s32.totalorder %s108, %s109
      %p118 = scmp.eq.s32.totalorder %s23, 0
      %p119 = por %p117, %p118
      %p120 = scmp.ne.s32.totalorder %s108, %s109
      %p121 = scmp.eq.s32.totalorder %s24, 3
      %p122 = por %p120, %p121
      %p124 = scmp.ne.s32.totalorder %s109, %s123
      %p125 = scmp.eq.s32.totalorder %s24, 0
      %p126 = por %p124, %p125
      %s128 = sadd.s32 %s127, 1
      %p131 = scmp.eq.s32.totalorder %s18, 3
      %p132 = scmp.ne.s32.totalorder %s127, %s129
      %p133 = scmp.eq.s32.totalorder %s18, 0
      %p134 = por %p132, %p133
      %p135 = scmp.ne.s32.totalorder %s127, %s129
      %p136 = scmp.eq.s32.totalorder %s23, 3
      %p137 = por %p135, %p136
      %p138 = scmp.ne.s32.totalorder %s129, %s130
      %p139 = scmp.eq.s32.totalorder %s23, 0
      %p140 = por %p138, %p139
      %p141 = scmp.ne.s32.totalorder %s129, %s130
      %p142 = scmp.eq.s32.totalorder %s24, 3
      %p143 = por %p141, %p142
      %p145 = scmp.ne.s32.totalorder %s130, %s144
      %p146 = scmp.eq.s32.totalorder %s24, 0
      %p147 = por %p145, %p146
      %s148 = ssub.s32 %s25, %s37
      %p149 = scmp.eq.s32.totalorder %s148, 0
      %s151 = sadd.s32 %s150, 1
      %s152 = scalar_select %p149, %s150, %s151
      %p155 = pneg %p149
      %p156 = scmp.eq.s32.totalorder %s18, 3
      %p157 = por %p155, %p156
      %p158 = scmp.ne.s32.totalorder %s150, %s153
      %p159 = scmp.eq.s32.totalorder %s18, 0
      %p160 = por %p158, %p159
      %p161 = scmp.ne.s32.totalorder %s150, %s153
      %p162 = scmp.eq.s32.totalorder %s23, 3
      %p163 = por %p161, %p162
      %p164 = scmp.ne.s32.totalorder %s153, %s154
      %p165 = scmp.eq.s32.totalorder %s23, 0
      %p166 = por %p164, %p165
      %p167 = scmp.ne.s32.totalorder %s153, %s154
      %p168 = scmp.eq.s32.totalorder %s24, 3
      %p169 = por %p167, %p168
      %p171 = scmp.ne.s32.totalorder %s154, %s170
      %p172 = scmp.eq.s32.totalorder %s24, 0
      %p173 = por %p171, %p172
      %p174 = scmp.le.s32.totalorder 1, %s18
      %p175 = scmp.lt.s32.totalorder %s18, 5
      %p176 = pnand %p174, %p175
      %p177 = pneg %p176
      // Predicated region
      $region9: #{tpu_custom_call.1} parent=5 // pred_check
        _
      $region10: #{tpu_custom_call.1} parent=5 // pred_check_branch
        %179 = sbr.rel (%p176) target = $region12
      $region11: #{tpu_custom_call.1} parent=5 // pred_region
        %s180 = ssub.s32 %s18, 1
        // Predicated region
        $region13: #{tpu_custom_call.1} parent=11 // pred_check
          %p181 = pneg %p77
        $region14: #{tpu_custom_call.1} parent=11 // pred_check_branch
          %183 = sbr.rel (%p181) target = $region16
        $region15: #{tpu_custom_call.1} parent=11 // pred_region
          %s185 = ssub.s32 3072, 3072
          %186 = vsyncadd [#allocation10], %s185
          %s187 = sshll.u32 [#allocation9], 4
          %s188 = int_to_ptr.vmem [resolvable:$true] %s187
          %193 = dma.hbm_to_vmem [thread:$0]  %s1, 3072, %s188, [#allocation10], 192, 192, 12
        $region16: #{tpu_custom_call.1} parent=11 // pred_fallthru
          _
        // Predicated region
        $region17: #{tpu_custom_call.1} parent=11 // pred_check
          %p194 = pneg %p98
        $region18: #{tpu_custom_call.1} parent=11 // pred_check_branch
          %196 = sbr.rel (%p194) target = $region20
        $region19: #{tpu_custom_call.1} parent=11 // pred_region
          _
        $region20: #{tpu_custom_call.1} parent=11 // pred_fallthru
          _
        // Predicated region
        $region21: #{tpu_custom_call.1} parent=11 // pred_check
          %p197 = pneg %p119
        $region22: #{tpu_custom_call.1} parent=11 // pred_check_branch
          %199 = sbr.rel (%p197) target = $region24
        $region23: #{tpu_custom_call.1} parent=11 // pred_region
          %s201 = ssub.s32 1024, 1024
          %202 = vsyncadd [#allocation10], %s201
          %s203 = sshll.u32 [#allocation11], 4
          %s204 = int_to_ptr.vmem [resolvable:$true] %s203
          %209 = dma.hbm_to_vmem [thread:$0]  %s3, 1024, %s204, [#allocation10], 64, 64, 4
        $region24: #{tpu_custom_call.1} parent=11 // pred_fallthru
          _
        // Predicated region
        $region25: #{tpu_custom_call.1} parent=11 // pred_check
          %p210 = pneg %p140
        $region26: #{tpu_custom_call.1} parent=11 // pred_check_branch
          %212 = sbr.rel (%p210) target = $region28
        $region27: #{tpu_custom_call.1} parent=11 // pred_region
          _
        $region28: #{tpu_custom_call.1} parent=11 // pred_fallthru
          _
      $region12: #{tpu_custom_call.1} parent=5 // pred_fallthru
        _
      %p213 = scmp.lt.s32.totalorder %s18, 4
      // Predicated region
      $region29: #{tpu_custom_call.1} parent=5 // pred_check
        %p214 = pneg %p213
      $region30: #{tpu_custom_call.1} parent=5 // pred_check_branch
        %216 = sbr.rel (%p214) target = $region32
      $region31: #{tpu_custom_call.1} parent=5 // pred_region
        // Predicated region
        $region33: #{tpu_custom_call.1} parent=31 // pred_check
          %p217 = pneg %p50
        $region34: #{tpu_custom_call.1} parent=31 // pred_check_branch
          %219 = sbr.rel (%p217) target = $region36
        $region35: #{tpu_custom_call.1} parent=31 // pred_region
          %s220 = sand.u32 %s40, 1
          %s221 = scalar_lea.sflag [#allocation7], %s220
          %s222 = sand.u32 %s40, 1
          %s223 = smul.addr %s222, 256
          %s224 = scalar_lea.vmem [#allocation6], %s223
          %s226 = ssub.s32 4096, 4096
          %227 = vsyncadd %s221, %s226
          %s228 = smul.addr %s25, 32
          %s229 = smul.addr %s228, 128
          %s230 = scalar_lea.hbm %s0, %s229
          %s231 = sshll.u32 %s224, 4
          %s232 = int_to_ptr.vmem [resolvable:$true] %s231
          %237 = dma.hbm_to_vmem [thread:$0]  %s230, 4096, %s232, %s221, 128, 128, 8
        $region36: #{tpu_custom_call.1} parent=31 // pred_fallthru
          _
      $region32: #{tpu_custom_call.1} parent=5 // pred_fallthru
        _
      %p238 = scmp.le.s32.totalorder 1, %s18
      %p239 = scmp.lt.s32.totalorder %s18, 5
      %p240 = pnand %p238, %p239
      %p241 = pneg %p240
      // Predicated region
      $region37: #{tpu_custom_call.1} parent=5 // pred_check
        _
      $region38: #{tpu_custom_call.1} parent=5 // pred_check_branch
        %243 = sbr.rel (%p240) target = $region40
      $region39: #{tpu_custom_call.1} parent=5 // pred_region
        %s244 = ssub.s32 %s18, 1
        %s245 = sand.u32 %s43, 1
        %s246 = scalar_lea.sflag [#allocation7], %s245
        %s247 = sand.u32 %s43, 1
        %s248 = smul.addr %s247, 256
        %s249 = scalar_lea.vmem [#allocation6], %s248
        // Predicated region
        $region41: #{tpu_custom_call.1} parent=39 // pred_check
          %p250 = pneg %p56
        $region42: #{tpu_custom_call.1} parent=39 // pred_check_branch
          %252 = sbr.rel (%p250) target = $region44
        $region43: #{tpu_custom_call.1} parent=39 // pred_region
          %253 = dma.done %s246, 4096
        $region44: #{tpu_custom_call.1} parent=39 // pred_fallthru
          _
        // Predicated region
        $region45: #{tpu_custom_call.1} parent=39 // pred_check
          %p254 = pneg %p77
        $region46: #{tpu_custom_call.1} parent=39 // pred_check_branch
          %256 = sbr.rel (%p254) target = $region48
        $region47: #{tpu_custom_call.1} parent=39 // pred_region
          %257 = dma.done [#allocation10], 3072
        $region48: #{tpu_custom_call.1} parent=39 // pred_fallthru
          _
        // Predicated region
        $region49: #{tpu_custom_call.1} parent=39 // pred_check
          %p258 = pneg %p119
        $region50: #{tpu_custom_call.1} parent=39 // pred_check_branch
          %260 = sbr.rel (%p258) target = $region52
        $region51: #{tpu_custom_call.1} parent=39 // pred_region
          %261 = dma.done [#allocation10], 1024
        $region52: #{tpu_custom_call.1} parent=39 // pred_fallthru
          _
        %s262 = sand.u32 %s43, 1
        %s263 = scalar_lea.sflag [#allocation7], %s262
        %s264 = sand.u32 %s43, 1
        %s265 = smul.addr %s264, 256
        %s266 = scalar_lea.vmem [#allocation6], %s265
        %p267 = pneg %p56
        %p268 = pneg %p53
        %p269 = pneg %p77
        %p270 = pneg %p74
        %p271 = pneg %p98
        %p272 = pneg %p95
        %p273 = pneg %p119
        %p274 = pneg %p116
        %p275 = pneg %p140
        %p276 = pneg %p137
        %p277 = pneg %p166
        %p278 = pneg %p163
        %s279 = sand.u32 %s153, 1
        %s280 = scalar_lea.sflag [#allocation8], %s279
        %s281 = sand.u32 %s153, 1
        %s282 = smul.addr %s281, 256
        %s283 = scalar_lea.vmem [#allocation12], %s282
        %p285 = scmp.eq.s32.totalorder %s28, 0
        // Predicated region
        $region53: #{tpu_custom_call.1} parent=39 // pred_check
          %p286 = pneg %p285
        $region54: #{tpu_custom_call.1} parent=39 // pred_check_branch
          %288 = sbr.rel (%p286) target = $region56
        $region55: #{tpu_custom_call.1} parent=39 // pred_region
          %v289 = vld [vmem:[%s249] sm:$0xff]
          %v290 = vld [vmem:[%s249 + $0x8] sm:$0xff]
          %v291 = vld [vmem:[%s249 + $0x10] sm:$0xff]
          %v292 = vld [vmem:[%s249 + $0x18] sm:$0xff]
          %v293 = vld [vmem:[%s249 + $0x20] sm:$0xff]
          %v294 = vld [vmem:[%s249 + $0x28] sm:$0xff]
          %v295 = vld [vmem:[%s249 + $0x30] sm:$0xff]
          %v296 = vld [vmem:[%s249 + $0x38] sm:$0xff]
          %v297 = vld [vmem:[%s249 + $0x40] sm:$0xff]
          %v298 = vld [vmem:[%s249 + $0x48] sm:$0xff]
          %v299 = vld [vmem:[%s249 + $0x50] sm:$0xff]
          %v300 = vld [vmem:[%s249 + $0x58] sm:$0xff]
          %v301 = vld [vmem:[%s249 + $0x60] sm:$0xff]
          %v302 = vld [vmem:[%s249 + $0x68] sm:$0xff]
          %v303 = vld [vmem:[%s249 + $0x70] sm:$0xff]
          %v304 = vld [vmem:[%s249 + $0x78] sm:$0xff]
          %v305 = vld [vmem:[%s249 + $0x80] sm:$0xff]
          %v306 = vld [vmem:[%s249 + $0x88] sm:$0xff]
          %v307 = vld [vmem:[%s249 + $0x90] sm:$0xff]
          %v308 = vld [vmem:[%s249 + $0x98] sm:$0xff]
          %v309 = vld [vmem:[%s249 + $0xa0] sm:$0xff]
          %v310 = vld [vmem:[%s249 + $0xa8] sm:$0xff]
          %v311 = vld [vmem:[%s249 + $0xb0] sm:$0xff]
          %v312 = vld [vmem:[%s249 + $0xb8] sm:$0xff]
          %v313 = vld [vmem:[%s249 + $0xc0] sm:$0xff]
          %v314 = vld [vmem:[%s249 + $0xc8] sm:$0xff]
          %v315 = vld [vmem:[%s249 + $0xd0] sm:$0xff]
          %v316 = vld [vmem:[%s249 + $0xd8] sm:$0xff]
          %v317 = vld [vmem:[%s249 + $0xe0] sm:$0xff]
          %v318 = vld [vmem:[%s249 + $0xe8] sm:$0xff]
          %v319 = vld [vmem:[%s249 + $0xf0] sm:$0xff]
          %v320 = vld [vmem:[%s249 + $0xf8] sm:$0xff]
          %v321 = vpack.c.bf16 %v290, %v289
          %v322 = vpack.c.bf16 %v292, %v291
          %v323 = vpack.c.bf16 %v294, %v293
          %v324 = vpack.c.bf16 %v296, %v295
          %v325 = vpack.c.bf16 %v298, %v297
          %v326 = vpack.c.bf16 %v300, %v299
          %v327 = vpack.c.bf16 %v302, %v301
          %v328 = vpack.c.bf16 %v304, %v303
          %v329 = vpack.c.bf16 %v306, %v305
          %v330 = vpack.c.bf16 %v308, %v307
          %v331 = vpack.c.bf16 %v310, %v309
          %v332 = vpack.c.bf16 %v312, %v311
          %v333 = vpack.c.bf16 %v314, %v313
          %v334 = vpack.c.bf16 %v316, %v315
          %v335 = vpack.c.bf16 %v318, %v317
          %v336 = vpack.c.bf16 %v320, %v319
          %v337 = vld [vmem:[#allocation9] sm:$0xf]
          %v338 = vld [vmem:[#allocation9 + $0xc] sm:$0xf]
          %v339 = vld [vmem:[#allocation9 + $0x18] sm:$0xf]
          %v340 = vld [vmem:[#allocation9 + $0x24] sm:$0xf]
          %v341 = vld [vmem:[#allocation9 + $0x30] sm:$0xf]
          %v342 = vld [vmem:[#allocation9 + $0x3c] sm:$0xf]
          %v343 = vld [vmem:[#allocation9 + $0x48] sm:$0xf]
          %v344 = vld [vmem:[#allocation9 + $0x54] sm:$0xf]
          %v345 = vld [vmem:[#allocation9 + $0x60] sm:$0xf]
          %v346 = vld [vmem:[#allocation9 + $0x6c] sm:$0xf]
          %v347 = vld [vmem:[#allocation9 + $0x78] sm:$0xf]
          %v348 = vld [vmem:[#allocation9 + $0x84] sm:$0xf]
          %v349 = vld [vmem:[#allocation9 + $0x90] sm:$0xf]
          %v350 = vld [vmem:[#allocation9 + $0x9c] sm:$0xf]
          %v351 = vld [vmem:[#allocation9 + $0xa8] sm:$0xf]
          %v352 = vld [vmem:[#allocation9 + $0xb4] sm:$0xf]
          %v353 = vld [vmem:[%s2] sm:$0x1]
          %v355 = vlaneseq
          %v356 = vshrl.u32 %v355, 7
          %v357 = vsub.s32 0, %v356
          %v358 = vrot.slane %v353, %v357
          %v376 = vunpack.c.l.b16 %v337
          %v377 = vunpack.c.l.b16 %v338
          %v378 = vunpack.c.l.b16 %v339
          %v379 = vunpack.c.l.b16 %v340
          %v380 = vunpack.c.l.b16 %v341
          %v381 = vunpack.c.l.b16 %v342
          %v382 = vunpack.c.l.b16 %v343
          %v383 = vunpack.c.l.b16 %v344
          %v384 = vunpack.c.l.b16 %v345
          %v385 = vunpack.c.l.b16 %v346
          %v386 = vunpack.c.l.b16 %v347
          %v387 = vunpack.c.l.b16 %v348
          %v388 = vunpack.c.l.b16 %v349
          %v389 = vunpack.c.l.b16 %v350
          %v390 = vunpack.c.l.b16 %v351
          %v391 = vunpack.c.l.b16 %v352
          %v392 = vpack.c.b16 %v377, %v376
          %v393 = vpack.c.b16 %v379, %v378
          %v394 = vpack.c.b16 %v381, %v380
          %v395 = vpack.c.b16 %v383, %v382
          %v396 = vpack.c.b16 %v385, %v384
          %v397 = vpack.c.b16 %v387, %v386
          %v398 = vpack.c.b16 %v389, %v388
          %v399 = vpack.c.b16 %v391, %v390
          %408 = vmatprep.subr.bf16.mxu0 0
          %409 = vmatpush1.bf16.msra.mxu0 %v392
          %410 = vmatprep.subr.bf16.mxu0 0
          %411 = vmatpush1.bf16.msra.mxu0 %v393
          %412 = vmatprep.subr.bf16.mxu0 0
          %413 = vmatpush1.bf16.msra.mxu0 %v394
          %414 = vmatprep.subr.bf16.mxu0 0
          %415 = vmatpush1.bf16.msra.mxu0 %v395
          %416 = vmatprep.subr.bf16.mxu0 0
          %417 = vmatpush1.bf16.msra.mxu0 %v396
          %418 = vmatprep.subr.bf16.mxu0 0
          %419 = vmatpush1.bf16.msra.mxu0 %v397
          %420 = vmatprep.subr.bf16.mxu0 0
          %421 = vmatpush1.bf16.msra.mxu0 %v398
          %422 = vmatprep.subr.bf16.mxu0 0
          %423 = vmatpush1.bf16.msra.mxu0 %v399
          %424 = vmatprep.subr.bf16.mxu0 0
          %425 = vmatpush1.bf16.msra.mxu0 0
          %426 = vmatprep.subr.bf16.mxu0 0
          %427 = vmatpush1.bf16.msra.mxu0 0
          %428 = vmatprep.subr.bf16.mxu0 0
          %429 = vmatpush1.bf16.msra.mxu0 0
          %430 = vmatprep.subr.bf16.mxu0 0
          %431 = vmatpush1.bf16.msra.mxu0 0
          %432 = vmatprep.subr.bf16.mxu0 0
          %433 = vmatpush1.bf16.msra.mxu0 0
          %434 = vmatprep.subr.bf16.mxu0 0
          %435 = vmatpush1.bf16.msra.mxu0 0
          %436 = vmatprep.subr.bf16.mxu0 0
          %437 = vmatpush1.bf16.msra.mxu0 0
          %438 = vmatprep.subr.bf16.mxu0 0
          %439 = vmatpush1.bf16.msra.mxu0 0
          %440 = vmatprep.mubr.bf16.mxu0 0
          %441 = vmatmul.mubr.bf16.gmra.mrb[0].mxu0 %v321
          %v442 = vpop.f32.mrb[0].mxu0
          %v443 = vadd.f32 %v358, %v442
          %v444 = vpop.f32.mrb[0].mxu0
          %v445 = vpop.f32.mrb[0].mxu0
          %v446 = vadd.f32 %v358, %v445
          %v447 = vpop.f32.mrb[0].mxu0
          %448 = vmatprep.mubr.bf16.mxu0 0
          %449 = vmatmul.mubr.bf16.gmra.mrb[0].mxu0 %v322
          %v450 = vpop.f32.mrb[0].mxu0
          %v451 = vadd.f32 %v358, %v450
          %v452 = vpop.f32.mrb[0].mxu0
          %v453 = vpop.f32.mrb[0].mxu0
          %v454 = vadd.f32 %v358, %v453
          %v455 = vpop.f32.mrb[0].mxu0
          %456 = vmatprep.mubr.bf16.mxu0 0
          %457 = vmatmul.mubr.bf16.gmra.mrb[0].mxu0 %v323
          %v458 = vpop.f32.mrb[0].mxu0
          %v459 = vadd.f32 %v358, %v458
          %v460 = vpop.f32.mrb[0].mxu0
          %v461 = vpop.f32.mrb[0].mxu0
          %v462 = vadd.f32 %v358, %v461
          %v463 = vpop.f32.mrb[0].mxu0
          %464 = vmatprep.mubr.bf16.mxu0 0
          %465 = vmatmul.mubr.bf16.gmra.mrb[0].mxu0 %v324
          %v466 = vpop.f32.mrb[0].mxu0
          %v467 = vadd.f32 %v358, %v466
          %v468 = vpop.f32.mrb[0].mxu0
          %v469 = vpop.f32.mrb[0].mxu0
          %v470 = vadd.f32 %v358, %v469
          %v471 = vpop.f32.mrb[0].mxu0
          %472 = vmatprep.mubr.bf16.mxu0 0
          %473 = vmatmul.mubr.bf16.gmra.mrb[0].mxu0 %v325
          %v474 = vpop.f32.mrb[0].mxu0
          %v475 = vadd.f32 %v358, %v474
          %v476 = vpop.f32.mrb[0].mxu0
          %v477 = vpop.f32.mrb[0].mxu0
          %v478 = vadd.f32 %v358, %v477
          %v479 = vpop.f32.mrb[0].mxu0
          %480 = vmatprep.mubr.bf16.mxu0 0
          %481 = vmatmul.mubr.bf16.gmra.mrb[0].mxu0 %v326
          %v482 = vpop.f32.mrb[0].mxu0
          %v483 = vadd.f32 %v358, %v482
          %v484 = vpop.f32.mrb[0].mxu0
          %v485 = vpop.f32.mrb[0].mxu0
          %v486 = vadd.f32 %v358, %v485
          %v487 = vpop.f32.mrb[0].mxu0
          %488 = vmatprep.mubr.bf16.mxu0 0
          %489 = vmatmul.mubr.bf16.gmra.mrb[0].mxu0 %v327
          %v490 = vpop.f32.mrb[0].mxu0
          %v491 = vadd.f32 %v358, %v490
          %v492 = vpop.f32.mrb[0].mxu0
          %v493 = vpop.f32.mrb[0].mxu0
          %v494 = vadd.f32 %v358, %v493
          %v495 = vpop.f32.mrb[0].mxu0
          %496 = vmatprep.mubr.bf16.mxu0 0
          %497 = vmatmul.mubr.bf16.gmra.mrb[0].mxu0 %v328
          %v498 = vpop.f32.mrb[0].mxu0
          %v499 = vadd.f32 %v358, %v498
          %v500 = vpop.f32.mrb[0].mxu0
          %v501 = vpop.f32.mrb[0].mxu0
          %v502 = vadd.f32 %v358, %v501
          %v503 = vpop.f32.mrb[0].mxu0
          %504 = vmatprep.mubr.bf16.mxu0 0
          %505 = vmatmul.mubr.bf16.gmra.mrb[0].mxu0 %v329
          %v506 = vpop.f32.mrb[0].mxu0
          %v507 = vadd.f32 %v358, %v506
          %v508 = vpop.f32.mrb[0].mxu0
          %v509 = vpop.f32.mrb[0].mxu0
          %v510 = vadd.f32 %v358, %v509
          %v511 = vpop.f32.mrb[0].mxu0
          %512 = vmatprep.mubr.bf16.mxu0 0
          %513 = vmatmul.mubr.bf16.gmra.mrb[0].mxu0 %v330
          %v514 = vpop.f32.mrb[0].mxu0
          %v515 = vadd.f32 %v358, %v514
          %v516 = vpop.f32.mrb[0].mxu0
          %v517 = vpop.f32.mrb[0].mxu0
          %v518 = vadd.f32 %v358, %v517
          %v519 = vpop.f32.mrb[0].mxu0
          %520 = vmatprep.mubr.bf16.mxu0 0
          %521 = vmatmul.mubr.bf16.gmra.mrb[0].mxu0 %v331
          %v522 = vpop.f32.mrb[0].mxu0
          %v523 = vadd.f32 %v358, %v522
          %v524 = vpop.f32.mrb[0].mxu0
          %v525 = vpop.f32.mrb[0].mxu0
          %v526 = vadd.f32 %v358, %v525
          %v527 = vpop.f32.mrb[0].mxu0
          %528 = vmatprep.mubr.bf16.mxu0 0
          %529 = vmatmul.mubr.bf16.gmra.mrb[0].mxu0 %v332
          %v530 = vpop.f32.mrb[0].mxu0
          %v531 = vadd.f32 %v358, %v530
          %v532 = vpop.f32.mrb[0].mxu0
          %v533 = vpop.f32.mrb[0].mxu0
          %v534 = vadd.f32 %v358, %v533
          %v535 = vpop.f32.mrb[0].mxu0
          %536 = vmatprep.mubr.bf16.mxu0 0
          %537 = vmatmul.mubr.bf16.gmra.mrb[0].mxu0 %v333
          %v538 = vpop.f32.mrb[0].mxu0
          %v539 = vadd.f32 %v358, %v538
          %v540 = vpop.f32.mrb[0].mxu0
          %v541 = vpop.f32.mrb[0].mxu0
          %v542 = vadd.f32 %v358, %v541
          %v543 = vpop.f32.mrb[0].mxu0
          %544 = vmatprep.mubr.bf16.mxu0 0
          %545 = vmatmul.mubr.bf16.gmra.mrb[0].mxu0 %v334
          %v546 = vpop.f32.mrb[0].mxu0
          %v547 = vadd.f32 %v358, %v546
          %v548 = vpop.f32.mrb[0].mxu0
          %v549 = vpop.f32.mrb[0].mxu0
          %v550 = vadd.f32 %v358, %v549
          %v551 = vpop.f32.mrb[0].mxu0
          %552 = vmatprep.mubr.bf16.mxu0 0
          %553 = vmatmul.mubr.bf16.gmra.mrb[0].mxu0 %v335
          %v554 = vpop.f32.mrb[0].mxu0
          %v555 = vadd.f32 %v358, %v554
          %v556 = vpop.f32.mrb[0].mxu0
          %v557 = vpop.f32.mrb[0].mxu0
          %v558 = vadd.f32 %v358, %v557
          %v559 = vpop.f32.mrb[0].mxu0
          %560 = vmatprep.mubr.bf16.mxu0 0
          %561 = vmatmul.mubr.bf16.gmra.mrb[0].mxu0 %v336
          %v562 = vpop.f32.mrb[0].mxu0
          %v563 = vadd.f32 %v358, %v562
          %v564 = vpop.f32.mrb[0].mxu0
          %v565 = vpop.f32.mrb[0].mxu0
          %v566 = vadd.f32 %v358, %v565
          %v567 = vpop.f32.mrb[0].mxu0
          %568 = vdwg.mxu0
          %v569 = vpack.c.bf16 %v446, %v443
          %v570 = vpack.c.bf16 %v454, %v451
          %v571 = vpack.c.bf16 %v462, %v459
          %v572 = vpack.c.bf16 %v470, %v467
          %v573 = vpack.c.bf16 %v478, %v475
          %v574 = vpack.c.bf16 %v486, %v483
          %v575 = vpack.c.bf16 %v494, %v491
          %v576 = vpack.c.bf16 %v502, %v499
          %v577 = vpack.c.bf16 %v510, %v507
          %v578 = vpack.c.bf16 %v518, %v515
          %v579 = vpack.c.bf16 %v526, %v523
          %v580 = vpack.c.bf16 %v534, %v531
          %v581 = vpack.c.bf16 %v542, %v539
          %v582 = vpack.c.bf16 %v550, %v547
          %v583 = vpack.c.bf16 %v558, %v555
          %v584 = vpack.c.bf16 %v566, %v563
          %585 = vst [vmem:[#allocation2] sm:$0xff] %v569
          %586 = vst [vmem:[#allocation2 + $0x8] sm:$0xff] %v570
          %587 = vst [vmem:[#allocation2 + $0x10] sm:$0xff] %v571
          %588 = vst [vmem:[#allocation2 + $0x18] sm:$0xff] %v572
          %589 = vst [vmem:[#allocation2 + $0x20] sm:$0xff] %v573
          %590 = vst [vmem:[#allocation2 + $0x28] sm:$0xff] %v574
          %591 = vst [vmem:[#allocation2 + $0x30] sm:$0xff] %v575
          %592 = vst [vmem:[#allocation2 + $0x38] sm:$0xff] %v576
          %593 = vst [vmem:[#allocation2 + $0x40] sm:$0xff] %v577
          %594 = vst [vmem:[#allocation2 + $0x48] sm:$0xff] %v578
          %595 = vst [vmem:[#allocation2 + $0x50] sm:$0xff] %v579
          %596 = vst [vmem:[#allocation2 + $0x58] sm:$0xff] %v580
          %597 = vst [vmem:[#allocation2 + $0x60] sm:$0xff] %v581
          %598 = vst [vmem:[#allocation2 + $0x68] sm:$0xff] %v582
          %599 = vst [vmem:[#allocation2 + $0x70] sm:$0xff] %v583
          %600 = vst [vmem:[#allocation2 + $0x78] sm:$0xff] %v584
          %v601 = vld [vmem:[#allocation9 + $0x4] sm:$0xf]
          %v602 = vld [vmem:[#allocation9 + $0x10] sm:$0xf]
          %v603 = vld [vmem:[#allocation9 + $0x1c] sm:$0xf]
          %v604 = vld [vmem:[#allocation9 + $0x28] sm:$0xf]
          %v605 = vld [vmem:[#allocation9 + $0x34] sm:$0xf]
          %v606 = vld [vmem:[#allocation9 + $0x40] sm:$0xf]
          %v607 = vld [vmem:[#allocation9 + $0x4c] sm:$0xf]
          %v608 = vld [vmem:[#allocation9 + $0x58] sm:$0xf]
          %v609 = vld [vmem:[#allocation9 + $0x64] sm:$0xf]
          %v610 = vld [vmem:[#allocation9 + $0x70] sm:$0xf]
          %v611 = vld [vmem:[#allocation9 + $0x7c] sm:$0xf]
          %v612 = vld [vmem:[#allocation9 + $0x88] sm:$0xf]
          %v613 = vld [vmem:[#allocation9 + $0x94] sm:$0xf]
          %v614 = vld [vmem:[#allocation9 + $0xa0] sm:$0xf]
          %v615 = vld [vmem:[#allocation9 + $0xac] sm:$0xf]
          %v616 = vld [vmem:[#allocation9 + $0xb8] sm:$0xf]
          %v617 = vld [vmem:[%s2 + $0x1] sm:$0x1]
          %v619 = vlaneseq
          %v620 = vshrl.u32 %v619, 7
          %v621 = vsub.s32 0, %v620
          %v622 = vrot.slane %v617, %v621
          %v640 = vunpack.c.l.b16 %v601
          %v641 = vunpack.c.l.b16 %v602
          %v642 = vunpack.c.l.b16 %v603
          %v643 = vunpack.c.l.b16 %v604
          %v644 = vunpack.c.l.b16 %v605
          %v645 = vunpack.c.l.b16 %v606
          %v646 = vunpack.c.l.b16 %v607
          %v647 = vunpack.c.l.b16 %v608
          %v648 = vunpack.c.l.b16 %v609
          %v649 = vunpack.c.l.b16 %v610
          %v650 = vunpack.c.l.b16 %v611
          %v651 = vunpack.c.l.b16 %v612
          %v652 = vunpack.c.l.b16 %v613
          %v653 = vunpack.c.l.b16 %v614
          %v654 = vunpack.c.l.b16 %v615
          %v655 = vunpack.c.l.b16 %v616
          %v656 = vpack.c.b16 %v641, %v640
          %v657 = vpack.c.b16 %v643, %v642
          %v658 = vpack.c.b16 %v645, %v644
          %v659 = vpack.c.b16 %v647, %v646
          %v660 = vpack.c.b16 %v649, %v648
          %v661 = vpack.c.b16 %v651, %v650
          %v662 = vpack.c.b16 %v653, %v652
          %v663 = vpack.c.b16 %v655, %v654
          %672 = vmatprep.subr.bf16.mxu0 0
          %673 = vmatpush1.bf16.msra.mxu0 %v656
          %674 = vmatprep.subr.bf16.mxu0 0
          %675 = vmatpush1.bf16.msra.mxu0 %v657
          %676 = vmatprep.subr.bf16.mxu0 0
          %677 = vmatpush1.bf16.msra.mxu0 %v658
          %678 = vmatprep.subr.bf16.mxu0 0
          %679 = vmatpush1.bf16.msra.mxu0 %v659
          %680 = vmatprep.subr.bf16.mxu0 0
          %681 = vmatpush1.bf16.msra.mxu0 %v660
          %682 = vmatprep.subr.bf16.mxu0 0
          %683 = vmatpush1.bf16.msra.mxu0 %v661
          %684 = vmatprep.subr.bf16.mxu0 0
          %685 = vmatpush1.bf16.msra.mxu0 %v662
          %686 = vmatprep.subr.bf16.mxu0 0
          %687 = vmatpush1.bf16.msra.mxu0 %v663
          %688 = vmatprep.subr.bf16.mxu0 0
          %689 = vmatpush1.bf16.msra.mxu0 0
          %690 = vmatprep.subr.bf16.mxu0 0
          %691 = vmatpush1.bf16.msra.mxu0 0
          %692 = vmatprep.subr.bf16.mxu0 0
          %693 = vmatpush1.bf16.msra.mxu0 0
          %694 = vmatprep.subr.bf16.mxu0 0
          %695 = vmatpush1.bf16.msra.mxu0 0
          %696 = vmatprep.subr.bf16.mxu0 0
          %697 = vmatpush1.bf16.msra.mxu0 0
          %698 = vmatprep.subr.bf16.mxu0 0
          %699 = vmatpush1.bf16.msra.mxu0 0
          %700 = vmatprep.subr.bf16.mxu0 0
          %701 = vmatpush1.bf16.msra.mxu0 0
          %702 = vmatprep.subr.bf16.mxu0 0
          %703 = vmatpush1.bf16.msra.mxu0 0
          %704 = vmatprep.mubr.bf16.mxu0 0
          %705 = vmatmul.mubr.bf16.gmra.mrb[0].mxu0 %v321
          %v706 = vpop.f32.mrb[0].mxu0
          %v707 = vadd.f32 %v622, %v706
          %v708 = vpop.f32.mrb[0].mxu0
          %v709 = vpop.f32.mrb[0].mxu0
          %v710 = vadd.f32 %v622, %v709
          %v711 = vpop.f32.mrb[0].mxu0
          %712 = vmatprep.mubr.bf16.mxu0 0
          %713 = vmatmul.mubr.bf16.gmra.mrb[0].mxu0 %v322
          %v714 = vpop.f32.mrb[0].mxu0
          %v715 = vadd.f32 %v622, %v714
          %v716 = vpop.f32.mrb[0].mxu0
          %v717 = vpop.f32.mrb[0].mxu0
          %v718 = vadd.f32 %v622, %v717
          %v719 = vpop.f32.mrb[0].mxu0
          %720 = vmatprep.mubr.bf16.mxu0 0
          %721 = vmatmul.mubr.bf16.gmra.mrb[0].mxu0 %v323
          %v722 = vpop.f32.mrb[0].mxu0
          %v723 = vadd.f32 %v622, %v722
          %v724 = vpop.f32.mrb[0].mxu0
          %v725 = vpop.f32.mrb[0].mxu0
          %v726 = vadd.f32 %v622, %v725
          %v727 = vpop.f32.mrb[0].mxu0
          %728 = vmatprep.mubr.bf16.mxu0 0
          %729 = vmatmul.mubr.bf16.gmra.mrb[0].mxu0 %v324
          %v730 = vpop.f32.mrb[0].mxu0
          %v731 = vadd.f32 %v622, %v730
          %v732 = vpop.f32.mrb[0].mxu0
          %v733 = vpop.f32.mrb[0].mxu0
          %v734 = vadd.f32 %v622, %v733
          %v735 = vpop.f32.mrb[0].mxu0
          %736 = vmatprep.mubr.bf16.mxu0 0
          %737 = vmatmul.mubr.bf16.gmra.mrb[0].mxu0 %v325
          %v738 = vpop.f32.mrb[0].mxu0
          %v739 = vadd.f32 %v622, %v738
          %v740 = vpop.f32.mrb[0].mxu0
          %v741 = vpop.f32.mrb[0].mxu0
          %v742 = vadd.f32 %v622, %v741
          %v743 = vpop.f32.mrb[0].mxu0
          %744 = vmatprep.mubr.bf16.mxu0 0
          %745 = vmatmul.mubr.bf16.gmra.mrb[0].mxu0 %v326
          %v746 = vpop.f32.mrb[0].mxu0
          %v747 = vadd.f32 %v622, %v746
          %v748 = vpop.f32.mrb[0].mxu0
          %v749 = vpop.f32.mrb[0].mxu0
          %v750 = vadd.f32 %v622, %v749
          %v751 = vpop.f32.mrb[0].mxu0
          %752 = vmatprep.mubr.bf16.mxu0 0
          %753 = vmatmul.mubr.bf16.gmra.mrb[0].mxu0 %v327
          %v754 = vpop.f32.mrb[0].mxu0
          %v755 = vadd.f32 %v622, %v754
          %v756 = vpop.f32.mrb[0].mxu0
          %v757 = vpop.f32.mrb[0].mxu0
          %v758 = vadd.f32 %v622, %v757
          %v759 = vpop.f32.mrb[0].mxu0
          %760 = vmatprep.mubr.bf16.mxu0 0
          %761 = vmatmul.mubr.bf16.gmra.mrb[0].mxu0 %v328
          %v762 = vpop.f32.mrb[0].mxu0
          %v763 = vadd.f32 %v622, %v762
          %v764 = vpop.f32.mrb[0].mxu0
          %v765 = vpop.f32.mrb[0].mxu0
          %v766 = vadd.f32 %v622, %v765
          %v767 = vpop.f32.mrb[0].mxu0
          %768 = vmatprep.mubr.bf16.mxu0 0
          %769 = vmatmul.mubr.bf16.gmra.mrb[0].mxu0 %v329
          %v770 = vpop.f32.mrb[0].mxu0
          %v771 = vadd.f32 %v622, %v770
          %v772 = vpop.f32.mrb[0].mxu0
          %v773 = vpop.f32.mrb[0].mxu0
          %v774 = vadd.f32 %v622, %v773
          %v775 = vpop.f32.mrb[0].mxu0
          %776 = vmatprep.mubr.bf16.mxu0 0
          %777 = vmatmul.mubr.bf16.gmra.mrb[0].mxu0 %v330
          %v778 = vpop.f32.mrb[0].mxu0
          %v779 = vadd.f32 %v622, %v778
          %v780 = vpop.f32.mrb[0].mxu0
          %v781 = vpop.f32.mrb[0].mxu0
          %v782 = vadd.f32 %v622, %v781
          %v783 = vpop.f32.mrb[0].mxu0
          %784 = vmatprep.mubr.bf16.mxu0 0
          %785 = vmatmul.mubr.bf16.gmra.mrb[0].mxu0 %v331
          %v786 = vpop.f32.mrb[0].mxu0
          %v787 = vadd.f32 %v622, %v786
          %v788 = vpop.f32.mrb[0].mxu0
          %v789 = vpop.f32.mrb[0].mxu0
          %v790 = vadd.f32 %v622, %v789
          %v791 = vpop.f32.mrb[0].mxu0
          %792 = vmatprep.mubr.bf16.mxu0 0
          %793 = vmatmul.mubr.bf16.gmra.mrb[0].mxu0 %v332
          %v794 = vpop.f32.mrb[0].mxu0
          %v795 = vadd.f32 %v622, %v794
          %v796 = vpop.f32.mrb[0].mxu0
          %v797 = vpop.f32.mrb[0].mxu0
          %v798 = vadd.f32 %v622, %v797
          %v799 = vpop.f32.mrb[0].mxu0
          %800 = vmatprep.mubr.bf16.mxu0 0
          %801 = vmatmul.mubr.bf16.gmra.mrb[0].mxu0 %v333
          %v802 = vpop.f32.mrb[0].mxu0
          %v803 = vadd.f32 %v622, %v802
          %v804 = vpop.f32.mrb[0].mxu0
          %v805 = vpop.f32.mrb[0].mxu0
          %v806 = vadd.f32 %v622, %v805
          %v807 = vpop.f32.mrb[0].mxu0
          %808 = vmatprep.mubr.bf16.mxu0 0
          %809 = vmatmul.mubr.bf16.gmra.mrb[0].mxu0 %v334
          %v810 = vpop.f32.mrb[0].mxu0
          %v811 = vadd.f32 %v622, %v810
          %v812 = vpop.f32.mrb[0].mxu0
          %v813 = vpop.f32.mrb[0].mxu0
          %v814 = vadd.f32 %v622, %v813
          %v815 = vpop.f32.mrb[0].mxu0
          %816 = vmatprep.mubr.bf16.mxu0 0
          %817 = vmatmul.mubr.bf16.gmra.mrb[0].mxu0 %v335
          %v818 = vpop.f32.mrb[0].mxu0
          %v819 = vadd.f32 %v622, %v818
          %v820 = vpop.f32.mrb[0].mxu0
          %v821 = vpop.f32.mrb[0].mxu0
          %v822 = vadd.f32 %v622, %v821
          %v823 = vpop.f32.mrb[0].mxu0
          %824 = vmatprep.mubr.bf16.mxu0 0
          %825 = vmatmul.mubr.bf16.gmra.mrb[0].mxu0 %v336
          %v826 = vpop.f32.mrb[0].mxu0
          %v827 = vadd.f32 %v622, %v826
          %v828 = vpop.f32.mrb[0].mxu0
          %v829 = vpop.f32.mrb[0].mxu0
          %v830 = vadd.f32 %v622, %v829
          %v831 = vpop.f32.mrb[0].mxu0
          %832 = vdwg.mxu0
          %v833 = vpack.c.bf16 %v710, %v707
          %v834 = vpack.c.bf16 %v718, %v715
          %v835 = vpack.c.bf16 %v726, %v723
          %v836 = vpack.c.bf16 %v734, %v731
          %v837 = vpack.c.bf16 %v742, %v739
          %v838 = vpack.c.bf16 %v750, %v747
          %v839 = vpack.c.bf16 %v758, %v755
          %v840 = vpack.c.bf16 %v766, %v763
          %v841 = vpack.c.bf16 %v774, %v771
          %v842 = vpack.c.bf16 %v782, %v779
          %v843 = vpack.c.bf16 %v790, %v787
          %v844 = vpack.c.bf16 %v798, %v795
          %v845 = vpack.c.bf16 %v806, %v803
          %v846 = vpack.c.bf16 %v814, %v811
          %v847 = vpack.c.bf16 %v822, %v819
          %v848 = vpack.c.bf16 %v830, %v827
          %849 = vst [vmem:[#allocation3] sm:$0xff] %v833
          %850 = vst [vmem:[#allocation3 + $0x8] sm:$0xff] %v834
          %851 = vst [vmem:[#allocation3 + $0x10] sm:$0xff] %v835
          %852 = vst [vmem:[#allocation3 + $0x18] sm:$0xff] %v836
          %853 = vst [vmem:[#allocation3 + $0x20] sm:$0xff] %v837
          %854 = vst [vmem:[#allocation3 + $0x28] sm:$0xff] %v838
          %855 = vst [vmem:[#allocation3 + $0x30] sm:$0xff] %v839
          %856 = vst [vmem:[#allocation3 + $0x38] sm:$0xff] %v840
          %857 = vst [vmem:[#allocation3 + $0x40] sm:$0xff] %v841
          %858 = vst [vmem:[#allocation3 + $0x48] sm:$0xff] %v842
          %859 = vst [vmem:[#allocation3 + $0x50] sm:$0xff] %v843
          %860 = vst [vmem:[#allocation3 + $0x58] sm:$0xff] %v844
          %861 = vst [vmem:[#allocation3 + $0x60] sm:$0xff] %v845
          %862 = vst [vmem:[#allocation3 + $0x68] sm:$0xff] %v846
          %863 = vst [vmem:[#allocation3 + $0x70] sm:$0xff] %v847
          %864 = vst [vmem:[#allocation3 + $0x78] sm:$0xff] %v848
          %v865 = vld [vmem:[#allocation9 + $0x8] sm:$0xf]
          %v866 = vld [vmem:[#allocation9 + $0x14] sm:$0xf]
          %v867 = vld [vmem:[#allocation9 + $0x20] sm:$0xf]
          %v868 = vld [vmem:[#allocation9 + $0x2c] sm:$0xf]
          %v869 = vld [vmem:[#allocation9 + $0x38] sm:$0xf]
          %v870 = vld [vmem:[#allocation9 + $0x44] sm:$0xf]
          %v871 = vld [vmem:[#allocation9 + $0x50] sm:$0xf]
          %v872 = vld [vmem:[#allocation9 + $0x5c] sm:$0xf]
          %v873 = vld [vmem:[#allocation9 + $0x68] sm:$0xf]
          %v874 = vld [vmem:[#allocation9 + $0x74] sm:$0xf]
          %v875 = vld [vmem:[#allocation9 + $0x80] sm:$0xf]
          %v876 = vld [vmem:[#allocation9 + $0x8c] sm:$0xf]
          %v877 = vld [vmem:[#allocation9 + $0x98] sm:$0xf]
          %v878 = vld [vmem:[#allocation9 + $0xa4] sm:$0xf]
          %v879 = vld [vmem:[#allocation9 + $0xb0] sm:$0xf]
          %v880 = vld [vmem:[#allocation9 + $0xbc] sm:$0xf]
          %v881 = vld [vmem:[%s2 + $0x2] sm:$0x1]
          %v883 = vlaneseq
          %v884 = vshrl.u32 %v883, 7
          %v885 = vsub.s32 0, %v884
          %v886 = vrot.slane %v881, %v885
          %v904 = vunpack.c.l.b16 %v865
          %v905 = vunpack.c.l.b16 %v866
          %v906 = vunpack.c.l.b16 %v867
          %v907 = vunpack.c.l.b16 %v868
          %v908 = vunpack.c.l.b16 %v869
          %v909 = vunpack.c.l.b16 %v870
          %v910 = vunpack.c.l.b16 %v871
          %v911 = vunpack.c.l.b16 %v872
          %v912 = vunpack.c.l.b16 %v873
          %v913 = vunpack.c.l.b16 %v874
          %v914 = vunpack.c.l.b16 %v875
          %v915 = vunpack.c.l.b16 %v876
          %v916 = vunpack.c.l.b16 %v877
          %v917 = vunpack.c.l.b16 %v878
          %v918 = vunpack.c.l.b16 %v879
          %v919 = vunpack.c.l.b16 %v880
          %v920 = vpack.c.b16 %v905, %v904
          %v921 = vpack.c.b16 %v907, %v906
          %v922 = vpack.c.b16 %v909, %v908
          %v923 = vpack.c.b16 %v911, %v910
          %v924 = vpack.c.b16 %v913, %v912
          %v925 = vpack.c.b16 %v915, %v914
          %v926 = vpack.c.b16 %v917, %v916
          %v927 = vpack.c.b16 %v919, %v918
          %936 = vmatprep.subr.bf16.mxu0 0
          %937 = vmatpush1.bf16.msra.mxu0 %v920
          %938 = vmatprep.subr.bf16.mxu0 0
          %939 = vmatpush1.bf16.msra.mxu0 %v921
          %940 = vmatprep.subr.bf16.mxu0 0
          %941 = vmatpush1.bf16.msra.mxu0 %v922
          %942 = vmatprep.subr.bf16.mxu0 0
          %943 = vmatpush1.bf16.msra.mxu0 %v923
          %944 = vmatprep.subr.bf16.mxu0 0
          %945 = vmatpush1.bf16.msra.mxu0 %v924
          %946 = vmatprep.subr.bf16.mxu0 0
          %947 = vmatpush1.bf16.msra.mxu0 %v925
          %948 = vmatprep.subr.bf16.mxu0 0
          %949 = vmatpush1.bf16.msra.mxu0 %v926
          %950 = vmatprep.subr.bf16.mxu0 0
          %951 = vmatpush1.bf16.msra.mxu0 %v927
          %952 = vmatprep.subr.bf16.mxu0 0
          %953 = vmatpush1.bf16.msra.mxu0 0
          %954 = vmatprep.subr.bf16.mxu0 0
          %955 = vmatpush1.bf16.msra.mxu0 0
          %956 = vmatprep.subr.bf16.mxu0 0
          %957 = vmatpush1.bf16.msra.mxu0 0
          %958 = vmatprep.subr.bf16.mxu0 0
          %959 = vmatpush1.bf16.msra.mxu0 0
          %960 = vmatprep.subr.bf16.mxu0 0
          %961 = vmatpush1.bf16.msra.mxu0 0
          %962 = vmatprep.subr.bf16.mxu0 0
          %963 = vmatpush1.bf16.msra.mxu0 0
          %964 = vmatprep.subr.bf16.mxu0 0
          %965 = vmatpush1.bf16.msra.mxu0 0
          %966 = vmatprep.subr.bf16.mxu0 0
          %967 = vmatpush1.bf16.msra.mxu0 0
          %968 = vmatprep.mubr.bf16.mxu0 0
          %969 = vmatmul.mubr.bf16.gmra.mrb[0].mxu0 %v321
          %v970 = vpop.f32.mrb[0].mxu0
          %v971 = vadd.f32 %v886, %v970
          %v972 = vpop.f32.mrb[0].mxu0
          %v973 = vpop.f32.mrb[0].mxu0
          %v974 = vadd.f32 %v886, %v973
          %v975 = vpop.f32.mrb[0].mxu0
          %976 = vmatprep.mubr.bf16.mxu0 0
          %977 = vmatmul.mubr.bf16.gmra.mrb[0].mxu0 %v322
          %v978 = vpop.f32.mrb[0].mxu0
          %v979 = vadd.f32 %v886, %v978
          %v980 = vpop.f32.mrb[0].mxu0
          %v981 = vpop.f32.mrb[0].mxu0
          %v982 = vadd.f32 %v886, %v981
          %v983 = vpop.f32.mrb[0].mxu0
          %984 = vmatprep.mubr.bf16.mxu0 0
          %985 = vmatmul.mubr.bf16.gmra.mrb[0].mxu0 %v323
          %v986 = vpop.f32.mrb[0].mxu0
          %v987 = vadd.f32 %v886, %v986
          %v988 = vpop.f32.mrb[0].mxu0
          %v989 = vpop.f32.mrb[0].mxu0
          %v990 = vadd.f32 %v886, %v989
          %v991 = vpop.f32.mrb[0].mxu0
          %992 = vmatprep.mubr.bf16.mxu0 0
          %993 = vmatmul.mubr.bf16.gmra.mrb[0].mxu0 %v324
          %v994 = vpop.f32.mrb[0].mxu0
          %v995 = vadd.f32 %v886, %v994
          %v996 = vpop.f32.mrb[0].mxu0
          %v997 = vpop.f32.mrb[0].mxu0
          %v998 = vadd.f32 %v886, %v997
          %v999 = vpop.f32.mrb[0].mxu0
          %1000 = vmatprep.mubr.bf16.mxu0 0
          %1001 = vmatmul.mubr.bf16.gmra.mrb[0].mxu0 %v325
          %v1002 = vpop.f32.mrb[0].mxu0
          %v1003 = vadd.f32 %v886, %v1002
          %v1004 = vpop.f32.mrb[0].mxu0
          %v1005 = vpop.f32.mrb[0].mxu0
          %v1006 = vadd.f32 %v886, %v1005
          %v1007 = vpop.f32.mrb[0].mxu0
          %1008 = vmatprep.mubr.bf16.mxu0 0
          %1009 = vmatmul.mubr.bf16.gmra.mrb[0].mxu0 %v326
          %v1010 = vpop.f32.mrb[0].mxu0
          %v1011 = vadd.f32 %v886, %v1010
          %v1012 = vpop.f32.mrb[0].mxu0
          %v1013 = vpop.f32.mrb[0].mxu0
          %v1014 = vadd.f32 %v886, %v1013
          %v1015 = vpop.f32.mrb[0].mxu0
          %1016 = vmatprep.mubr.bf16.mxu0 0
          %1017 = vmatmul.mubr.bf16.gmra.mrb[0].mxu0 %v327
          %v1018 = vpop.f32.mrb[0].mxu0
          %v1019 = vadd.f32 %v886, %v1018
          %v1020 = vpop.f32.mrb[0].mxu0
          %v1021 = vpop.f32.mrb[0].mxu0
          %v1022 = vadd.f32 %v886, %v1021
          %v1023 = vpop.f32.mrb[0].mxu0
          %1024 = vmatprep.mubr.bf16.mxu0 0
          %1025 = vmatmul.mubr.bf16.gmra.mrb[0].mxu0 %v328
          %v1026 = vpop.f32.mrb[0].mxu0
          %v1027 = vadd.f32 %v886, %v1026
          %v1028 = vpop.f32.mrb[0].mxu0
          %v1029 = vpop.f32.mrb[0].mxu0
          %v1030 = vadd.f32 %v886, %v1029
          %v1031 = vpop.f32.mrb[0].mxu0
          %1032 = vmatprep.mubr.bf16.mxu0 0
          %1033 = vmatmul.mubr.bf16.gmra.mrb[0].mxu0 %v329
          %v1034 = vpop.f32.mrb[0].mxu0
          %v1035 = vadd.f32 %v886, %v1034
          %v1036 = vpop.f32.mrb[0].mxu0
          %v1037 = vpop.f32.mrb[0].mxu0
          %v1038 = vadd.f32 %v886, %v1037
          %v1039 = vpop.f32.mrb[0].mxu0
          %1040 = vmatprep.mubr.bf16.mxu0 0
          %1041 = vmatmul.mubr.bf16.gmra.mrb[0].mxu0 %v330
          %v1042 = vpop.f32.mrb[0].mxu0
          %v1043 = vadd.f32 %v886, %v1042
          %v1044 = vpop.f32.mrb[0].mxu0
          %v1045 = vpop.f32.mrb[0].mxu0
          %v1046 = vadd.f32 %v886, %v1045
          %v1047 = vpop.f32.mrb[0].mxu0
          %1048 = vmatprep.mubr.bf16.mxu0 0
          %1049 = vmatmul.mubr.bf16.gmra.mrb[0].mxu0 %v331
          %v1050 = vpop.f32.mrb[0].mxu0
          %v1051 = vadd.f32 %v886, %v1050
          %v1052 = vpop.f32.mrb[0].mxu0
          %v1053 = vpop.f32.mrb[0].mxu0
          %v1054 = vadd.f32 %v886, %v1053
          %v1055 = vpop.f32.mrb[0].mxu0
          %1056 = vmatprep.mubr.bf16.mxu0 0
          %1057 = vmatmul.mubr.bf16.gmra.mrb[0].mxu0 %v332
          %v1058 = vpop.f32.mrb[0].mxu0
          %v1059 = vadd.f32 %v886, %v1058
          %v1060 = vpop.f32.mrb[0].mxu0
          %v1061 = vpop.f32.mrb[0].mxu0
          %v1062 = vadd.f32 %v886, %v1061
          %v1063 = vpop.f32.mrb[0].mxu0
          %1064 = vmatprep.mubr.bf16.mxu0 0
          %1065 = vmatmul.mubr.bf16.gmra.mrb[0].mxu0 %v333
          %v1066 = vpop.f32.mrb[0].mxu0
          %v1067 = vadd.f32 %v886, %v1066
          %v1068 = vpop.f32.mrb[0].mxu0
          %v1069 = vpop.f32.mrb[0].mxu0
          %v1070 = vadd.f32 %v886, %v1069
          %v1071 = vpop.f32.mrb[0].mxu0
          %1072 = vmatprep.mubr.bf16.mxu0 0
          %1073 = vmatmul.mubr.bf16.gmra.mrb[0].mxu0 %v334
          %v1074 = vpop.f32.mrb[0].mxu0
          %v1075 = vadd.f32 %v886, %v1074
          %v1076 = vpop.f32.mrb[0].mxu0
          %v1077 = vpop.f32.mrb[0].mxu0
          %v1078 = vadd.f32 %v886, %v1077
          %v1079 = vpop.f32.mrb[0].mxu0
          %1080 = vmatprep.mubr.bf16.mxu0 0
          %1081 = vmatmul.mubr.bf16.gmra.mrb[0].mxu0 %v335
          %v1082 = vpop.f32.mrb[0].mxu0
          %v1083 = vadd.f32 %v886, %v1082
          %v1084 = vpop.f32.mrb[0].mxu0
          %v1085 = vpop.f32.mrb[0].mxu0
          %v1086 = vadd.f32 %v886, %v1085
          %v1087 = vpop.f32.mrb[0].mxu0
          %1088 = vmatprep.mubr.bf16.mxu0 0
          %1089 = vmatmul.mubr.bf16.gmra.mrb[0].mxu0 %v336
          %v1090 = vpop.f32.mrb[0].mxu0
          %v1091 = vadd.f32 %v886, %v1090
          %v1092 = vpop.f32.mrb[0].mxu0
          %v1093 = vpop.f32.mrb[0].mxu0
          %v1094 = vadd.f32 %v886, %v1093
          %v1095 = vpop.f32.mrb[0].mxu0
          %1096 = vdwg.mxu0
          %v1097 = vpack.c.bf16 %v974, %v971
          %v1098 = vpack.c.bf16 %v982, %v979
          %v1099 = vpack.c.bf16 %v990, %v987
          %v1100 = vpack.c.bf16 %v998, %v995
          %v1101 = vpack.c.bf16 %v1006, %v1003
          %v1102 = vpack.c.bf16 %v1014, %v1011
          %v1103 = vpack.c.bf16 %v1022, %v1019
          %v1104 = vpack.c.bf16 %v1030, %v1027
          %v1105 = vpack.c.bf16 %v1038, %v1035
          %v1106 = vpack.c.bf16 %v1046, %v1043
          %v1107 = vpack.c.bf16 %v1054, %v1051
          %v1108 = vpack.c.bf16 %v1062, %v1059
          %v1109 = vpack.c.bf16 %v1070, %v1067
          %v1110 = vpack.c.bf16 %v1078, %v1075
          %v1111 = vpack.c.bf16 %v1086, %v1083
          %v1112 = vpack.c.bf16 %v1094, %v1091
          %1113 = vst [vmem:[#allocation4] sm:$0xff] %v1097
          %1114 = vst [vmem:[#allocation4 + $0x8] sm:$0xff] %v1098
          %1115 = vst [vmem:[#allocation4 + $0x10] sm:$0xff] %v1099
          %1116 = vst [vmem:[#allocation4 + $0x18] sm:$0xff] %v1100
          %1117 = vst [vmem:[#allocation4 + $0x20] sm:$0xff] %v1101
          %1118 = vst [vmem:[#allocation4 + $0x28] sm:$0xff] %v1102
          %1119 = vst [vmem:[#allocation4 + $0x30] sm:$0xff] %v1103
          %1120 = vst [vmem:[#allocation4 + $0x38] sm:$0xff] %v1104
          %1121 = vst [vmem:[#allocation4 + $0x40] sm:$0xff] %v1105
          %1122 = vst [vmem:[#allocation4 + $0x48] sm:$0xff] %v1106
          %1123 = vst [vmem:[#allocation4 + $0x50] sm:$0xff] %v1107
          %1124 = vst [vmem:[#allocation4 + $0x58] sm:$0xff] %v1108
          %1125 = vst [vmem:[#allocation4 + $0x60] sm:$0xff] %v1109
          %1126 = vst [vmem:[#allocation4 + $0x68] sm:$0xff] %v1110
          %1127 = vst [vmem:[#allocation4 + $0x70] sm:$0xff] %v1111
          %1128 = vst [vmem:[#allocation4 + $0x78] sm:$0xff] %v1112
          %1129 = vst [vmem:[#allocation5] sm:$0xff] 0.0
          %1130 = vst [vmem:[#allocation5 + $0x8] sm:$0xff] 0.0
          %1131 = vst [vmem:[#allocation5 + $0x10] sm:$0xff] 0.0
          %1132 = vst [vmem:[#allocation5 + $0x18] sm:$0xff] 0.0
          %1133 = vst [vmem:[#allocation5 + $0x20] sm:$0xff] 0.0
          %1134 = vst [vmem:[#allocation5 + $0x28] sm:$0xff] 0.0
          %1135 = vst [vmem:[#allocation5 + $0x30] sm:$0xff] 0.0
          %1136 = vst [vmem:[#allocation5 + $0x38] sm:$0xff] 0.0
          %1137 = vst [vmem:[#allocation5 + $0x40] sm:$0xff] 0.0
          %1138 = vst [vmem:[#allocation5 + $0x48] sm:$0xff] 0.0
          %1139 = vst [vmem:[#allocation5 + $0x50] sm:$0xff] 0.0
          %1140 = vst [vmem:[#allocation5 + $0x58] sm:$0xff] 0.0
          %1141 = vst [vmem:[#allocation5 + $0x60] sm:$0xff] 0.0
          %1142 = vst [vmem:[#allocation5 + $0x68] sm:$0xff] 0.0
          %1143 = vst [vmem:[#allocation5 + $0x70] sm:$0xff] 0.0
          %1144 = vst [vmem:[#allocation5 + $0x78] sm:$0xff] 0.0
          %1145 = vst [vmem:[#allocation5 + $0x80] sm:$0xff] 0.0
          %1146 = vst [vmem:[#allocation5 + $0x88] sm:$0xff] 0.0
          %1147 = vst [vmem:[#allocation5 + $0x90] sm:$0xff] 0.0
          %1148 = vst [vmem:[#allocation5 + $0x98] sm:$0xff] 0.0
          %1149 = vst [vmem:[#allocation5 + $0xa0] sm:$0xff] 0.0
          %1150 = vst [vmem:[#allocation5 + $0xa8] sm:$0xff] 0.0
          %1151 = vst [vmem:[#allocation5 + $0xb0] sm:$0xff] 0.0
          %1152 = vst [vmem:[#allocation5 + $0xb8] sm:$0xff] 0.0
          %1153 = vst [vmem:[#allocation5 + $0xc0] sm:$0xff] 0.0
          %1154 = vst [vmem:[#allocation5 + $0xc8] sm:$0xff] 0.0
          %1155 = vst [vmem:[#allocation5 + $0xd0] sm:$0xff] 0.0
          %1156 = vst [vmem:[#allocation5 + $0xd8] sm:$0xff] 0.0
          %1157 = vst [vmem:[#allocation5 + $0xe0] sm:$0xff] 0.0
          %1158 = vst [vmem:[#allocation5 + $0xe8] sm:$0xff] 0.0
          %1159 = vst [vmem:[#allocation5 + $0xf0] sm:$0xff] 0.0
          %1160 = vst [vmem:[#allocation5 + $0xf8] sm:$0xff] 0.0
        $region56: #{tpu_custom_call.1} parent=39 // pred_fallthru
          _
        %s1161 = smul.u32 %s28, 128
        %s1162 = sshra.s32 %s1161, 4
        %s1163 = sand.u32 %s1161, 15
        %s1164 = smul.addr %s1162, 8
        %s1165 = scalar_lea.vmem [#allocation2], %s1164
        %v1166 = vld [vmem:[%s1165] sm:$0xff]
        %v1167 = vld [vmem:[%s1165 + $0x8] sm:$0xff]
        %v1168 = vld [vmem:[%s1165 + $0x10] sm:$0xff]
        %v1169 = vld [vmem:[%s1165 + $0x18] sm:$0xff]
        %v1170 = vld [vmem:[%s1165 + $0x20] sm:$0xff]
        %v1171 = vld [vmem:[%s1165 + $0x28] sm:$0xff]
        %v1172 = vld [vmem:[%s1165 + $0x30] sm:$0xff]
        %v1173 = vld [vmem:[%s1165 + $0x38] sm:$0xff]
        %s1174 = smul.addr %s1162, 8
        %s1175 = scalar_lea.vmem [#allocation4], %s1174
        %v1176 = vld [vmem:[%s1175] sm:$0xff]
        %v1177 = vld [vmem:[%s1175 + $0x8] sm:$0xff]
        %v1178 = vld [vmem:[%s1175 + $0x10] sm:$0xff]
        %v1179 = vld [vmem:[%s1175 + $0x18] sm:$0xff]
        %v1180 = vld [vmem:[%s1175 + $0x20] sm:$0xff]
        %v1181 = vld [vmem:[%s1175 + $0x28] sm:$0xff]
        %v1182 = vld [vmem:[%s1175 + $0x30] sm:$0xff]
        %v1183 = vld [vmem:[%s1175 + $0x38] sm:$0xff]
        %v1184 = vld [vmem:[#allocation3] sm:$0xff]
        %v1185 = vld [vmem:[#allocation3 + $0x8] sm:$0xff]
        %v1186 = vld [vmem:[#allocation3 + $0x10] sm:$0xff]
        %v1187 = vld [vmem:[#allocation3 + $0x18] sm:$0xff]
        %v1188 = vld [vmem:[#allocation3 + $0x20] sm:$0xff]
        %v1189 = vld [vmem:[#allocation3 + $0x28] sm:$0xff]
        %v1190 = vld [vmem:[#allocation3 + $0x30] sm:$0xff]
        %v1191 = vld [vmem:[#allocation3 + $0x38] sm:$0xff]
        %v1192 = vld [vmem:[#allocation3 + $0x40] sm:$0xff]
        %v1193 = vld [vmem:[#allocation3 + $0x48] sm:$0xff]
        %v1194 = vld [vmem:[#allocation3 + $0x50] sm:$0xff]
        %v1195 = vld [vmem:[#allocation3 + $0x58] sm:$0xff]
        %v1196 = vld [vmem:[#allocation3 + $0x60] sm:$0xff]
        %v1197 = vld [vmem:[#allocation3 + $0x68] sm:$0xff]
        %v1198 = vld [vmem:[#allocation3 + $0x70] sm:$0xff]
        %v1199 = vld [vmem:[#allocation3 + $0x78] sm:$0xff]
        %1200 = vmatprep.subr.bf16.mxu0 0
        %1201 = vmatpush1.bf16.xpose.msra.mxu0 %v1166
        %1202 = vmatprep.subr.bf16.mxu0 0
        %1203 = vmatpush1.bf16.xpose.msra.mxu0 %v1167
        %1204 = vmatprep.subr.bf16.mxu0 0
        %1205 = vmatpush1.bf16.xpose.msra.mxu0 %v1168
        %1206 = vmatprep.subr.bf16.mxu0 0
        %1207 = vmatpush1.bf16.xpose.msra.mxu0 %v1169
        %1208 = vmatprep.subr.bf16.mxu0 0
        %1209 = vmatpush1.bf16.xpose.msra.mxu0 %v1170
        %1210 = vmatprep.subr.bf16.mxu0 0
        %1211 = vmatpush1.bf16.xpose.msra.mxu0 %v1171
        %1212 = vmatprep.subr.bf16.mxu0 0
        %1213 = vmatpush1.bf16.xpose.msra.mxu0 %v1172
        %1214 = vmatprep.subr.bf16.mxu0 0
        %1215 = vmatpush1.bf16.xpose.msra.mxu0 %v1173
        %1216 = vmatprep.subr.bf16.mxu0 0
        %1217 = vmatpush1.bf16.xpose.msra.mxu0 0
        %1218 = vmatprep.subr.bf16.mxu0 0
        %1219 = vmatpush1.bf16.xpose.msra.mxu0 0
        %1220 = vmatprep.subr.bf16.mxu0 0
        %1221 = vmatpush1.bf16.xpose.msra.mxu0 0
        %1222 = vmatprep.subr.bf16.mxu0 0
        %1223 = vmatpush1.bf16.xpose.msra.mxu0 0
        %1224 = vmatprep.subr.bf16.mxu0 0
        %1225 = vmatpush1.bf16.xpose.msra.mxu0 0
        %1226 = vmatprep.subr.bf16.mxu0 0
        %1227 = vmatpush1.bf16.xpose.msra.mxu0 0
        %1228 = vmatprep.subr.bf16.mxu0 0
        %1229 = vmatpush1.bf16.xpose.msra.mxu0 0
        %1230 = vmatprep.subr.bf16.mxu0 0
        %1231 = vmatpush1.bf16.xpose.msra.mxu0 0
        %1232 = vmatprep.mubr.bf16.mxu0 0
        %1233 = vmatmul.mubr.bf16.gmra.mrb[0].mxu0 %v1184
        %v1234 = vpop.f32.mrb[0].mxu0
        %v1235 = vadd.f32 0.0, %v1234
        %v1236 = vpop.f32.mrb[0].mxu0
        %v1237 = vpop.f32.mrb[0].mxu0
        %v1238 = vadd.f32 0.0, %v1237
        %v1239 = vpop.f32.mrb[0].mxu0
        %1240 = vmatprep.mubr.bf16.mxu0 0
        %1241 = vmatmul.mubr.bf16.gmra.mrb[0].mxu0 %v1185
        %v1242 = vpop.f32.mrb[0].mxu0
        %v1243 = vadd.f32 0.0, %v1242
        %v1244 = vpop.f32.mrb[0].mxu0
        %v1245 = vpop.f32.mrb[0].mxu0
        %v1246 = vadd.f32 0.0, %v1245
        %v1247 = vpop.f32.mrb[0].mxu0
        %1248 = vmatprep.mubr.bf16.mxu0 0
        %1249 = vmatmul.mubr.bf16.gmra.mrb[0].mxu0 %v1186
        %v1250 = vpop.f32.mrb[0].mxu0
        %v1251 = vadd.f32 0.0, %v1250
        %v1252 = vpop.f32.mrb[0].mxu0
        %v1253 = vpop.f32.mrb[0].mxu0
        %v1254 = vadd.f32 0.0, %v1253
        %v1255 = vpop.f32.mrb[0].mxu0
        %1256 = vmatprep.mubr.bf16.mxu0 0
        %1257 = vmatmul.mubr.bf16.gmra.mrb[0].mxu0 %v1187
        %v1258 = vpop.f32.mrb[0].mxu0
        %v1259 = vadd.f32 0.0, %v1258
        %v1260 = vpop.f32.mrb[0].mxu0
        %v1261 = vpop.f32.mrb[0].mxu0
        %v1262 = vadd.f32 0.0, %v1261
        %v1263 = vpop.f32.mrb[0].mxu0
        %1264 = vmatprep.mubr.bf16.mxu0 0
        %1265 = vmatmul.mubr.bf16.gmra.mrb[0].mxu0 %v1188
        %v1266 = vpop.f32.mrb[0].mxu0
        %v1267 = vadd.f32 0.0, %v1266
        %v1268 = vpop.f32.mrb[0].mxu0
        %v1269 = vpop.f32.mrb[0].mxu0
        %v1270 = vadd.f32 0.0, %v1269
        %v1271 = vpop.f32.mrb[0].mxu0
        %1272 = vmatprep.mubr.bf16.mxu0 0
        %1273 = vmatmul.mubr.bf16.gmra.mrb[0].mxu0 %v1189
        %v1274 = vpop.f32.mrb[0].mxu0
        %v1275 = vadd.f32 0.0, %v1274
        %v1276 = vpop.f32.mrb[0].mxu0
        %v1277 = vpop.f32.mrb[0].mxu0
        %v1278 = vadd.f32 0.0, %v1277
        %v1279 = vpop.f32.mrb[0].mxu0
        %1280 = vmatprep.mubr.bf16.mxu0 0
        %1281 = vmatmul.mubr.bf16.gmra.mrb[0].mxu0 %v1190
        %v1282 = vpop.f32.mrb[0].mxu0
        %v1283 = vadd.f32 0.0, %v1282
        %v1284 = vpop.f32.mrb[0].mxu0
        %v1285 = vpop.f32.mrb[0].mxu0
        %v1286 = vadd.f32 0.0, %v1285
        %v1287 = vpop.f32.mrb[0].mxu0
        %1288 = vmatprep.mubr.bf16.mxu0 0
        %1289 = vmatmul.mubr.bf16.gmra.mrb[0].mxu0 %v1191
        %v1290 = vpop.f32.mrb[0].mxu0
        %v1291 = vadd.f32 0.0, %v1290
        %v1292 = vpop.f32.mrb[0].mxu0
        %v1293 = vpop.f32.mrb[0].mxu0
        %v1294 = vadd.f32 0.0, %v1293
        %v1295 = vpop.f32.mrb[0].mxu0
        %1296 = vmatprep.mubr.bf16.mxu0 0
        %1297 = vmatmul.mubr.bf16.gmra.mrb[0].mxu0 %v1192
        %v1298 = vpop.f32.mrb[0].mxu0
        %v1299 = vadd.f32 0.0, %v1298
        %v1300 = vpop.f32.mrb[0].mxu0
        %v1301 = vpop.f32.mrb[0].mxu0
        %v1302 = vadd.f32 0.0, %v1301
        %v1303 = vpop.f32.mrb[0].mxu0
        %1304 = vmatprep.mubr.bf16.mxu0 0
        %1305 = vmatmul.mubr.bf16.gmra.mrb[0].mxu0 %v1193
        %v1306 = vpop.f32.mrb[0].mxu0
        %v1307 = vadd.f32 0.0, %v1306
        %v1308 = vpop.f32.mrb[0].mxu0
        %v1309 = vpop.f32.mrb[0].mxu0
        %v1310 = vadd.f32 0.0, %v1309
        %v1311 = vpop.f32.mrb[0].mxu0
        %1312 = vmatprep.mubr.bf16.mxu0 0
        %1313 = vmatmul.mubr.bf16.gmra.mrb[0].mxu0 %v1194
        %v1314 = vpop.f32.mrb[0].mxu0
        %v1315 = vadd.f32 0.0, %v1314
        %v1316 = vpop.f32.mrb[0].mxu0
        %v1317 = vpop.f32.mrb[0].mxu0
        %v1318 = vadd.f32 0.0, %v1317
        %v1319 = vpop.f32.mrb[0].mxu0
        %1320 = vmatprep.mubr.bf16.mxu0 0
        %1321 = vmatmul.mubr.bf16.gmra.mrb[0].mxu0 %v1195
        %v1322 = vpop.f32.mrb[0].mxu0
        %v1323 = vadd.f32 0.0, %v1322
        %v1324 = vpop.f32.mrb[0].mxu0
        %v1325 = vpop.f32.mrb[0].mxu0
        %v1326 = vadd.f32 0.0, %v1325
        %v1327 = vpop.f32.mrb[0].mxu0
        %1328 = vmatprep.mubr.bf16.mxu0 0
        %1329 = vmatmul.mubr.bf16.gmra.mrb[0].mxu0 %v1196
        %v1330 = vpop.f32.mrb[0].mxu0
        %v1331 = vadd.f32 0.0, %v1330
        %v1332 = vpop.f32.mrb[0].mxu0
        %v1333 = vpop.f32.mrb[0].mxu0
        %v1334 = vadd.f32 0.0, %v1333
        %v1335 = vpop.f32.mrb[0].mxu0
        %1336 = vmatprep.mubr.bf16.mxu0 0
        %1337 = vmatmul.mubr.bf16.gmra.mrb[0].mxu0 %v1197
        %v1338 = vpop.f32.mrb[0].mxu0
        %v1339 = vadd.f32 0.0, %v1338
        %v1340 = vpop.f32.mrb[0].mxu0
        %v1341 = vpop.f32.mrb[0].mxu0
        %v1342 = vadd.f32 0.0, %v1341
        %v1343 = vpop.f32.mrb[0].mxu0
        %1344 = vmatprep.mubr.bf16.mxu0 0
        %1345 = vmatmul.mubr.bf16.gmra.mrb[0].mxu0 %v1198
        %v1346 = vpop.f32.mrb[0].mxu0
        %v1347 = vadd.f32 0.0, %v1346
        %v1348 = vpop.f32.mrb[0].mxu0
        %v1349 = vpop.f32.mrb[0].mxu0
        %v1350 = vadd.f32 0.0, %v1349
        %v1351 = vpop.f32.mrb[0].mxu0
        %1352 = vmatprep.mubr.bf16.mxu0 0
        %1353 = vmatmul.mubr.bf16.gmra.mrb[0].mxu0 %v1199
        %v1354 = vpop.f32.mrb[0].mxu0
        %v1355 = vadd.f32 0.0, %v1354
        %v1356 = vpop.f32.mrb[0].mxu0
        %v1357 = vpop.f32.mrb[0].mxu0
        %v1358 = vadd.f32 0.0, %v1357
        %v1359 = vpop.f32.mrb[0].mxu0
        %1360 = vdwg.mxu0
        %v1361 = vmax.f32 %v1235, %v1251
        %v1362 = vmax.f32 %v1238, %v1254
        %v1363 = vmax.f32 %v1243, %v1259
        %v1364 = vmax.f32 %v1246, %v1262
        %v1365 = vmax.f32 %v1361, %v1267
        %v1366 = vmax.f32 %v1362, %v1270
        %v1367 = vmax.f32 %v1363, %v1275
        %v1368 = vmax.f32 %v1364, %v1278
        %v1369 = vmax.f32 %v1365, %v1283
        %v1370 = vmax.f32 %v1366, %v1286
        %v1371 = vmax.f32 %v1367, %v1291
        %v1372 = vmax.f32 %v1368, %v1294
        %v1373 = vmax.f32 %v1369, %v1299
        %v1374 = vmax.f32 %v1370, %v1302
        %v1375 = vmax.f32 %v1371, %v1307
        %v1376 = vmax.f32 %v1372, %v1310
        %v1377 = vmax.f32 %v1373, %v1315
        %v1378 = vmax.f32 %v1374, %v1318
        %v1379 = vmax.f32 %v1375, %v1323
        %v1380 = vmax.f32 %v1376, %v1326
        %v1381 = vmax.f32 %v1377, %v1331
        %v1382 = vmax.f32 %v1378, %v1334
        %v1383 = vmax.f32 %v1379, %v1339
        %v1384 = vmax.f32 %v1380, %v1342
        %v1385 = vmax.f32 %v1381, %v1347
        %v1386 = vmax.f32 %v1382, %v1350
        %v1387 = vmax.f32 %v1383, %v1355
        %v1388 = vmax.f32 %v1384, %v1358
        %v1389 = vmax.f32 %v1385, %v1386
        %v1390 = vmax.f32 %v1387, %v1388
        %v1391 = vmax.f32 %v1389, %v1390
        %v1392 = vrot.slane %v1391, 4
        %v1393 = vmax.f32 %v1391, %v1392
        %v1394 = vrot.slane %v1393, 2
        %v1395 = vmax.f32 %v1393, %v1394
        %v1396 = vrot.slane %v1395, 1
        %v1397 = vmax.f32 %v1395, %v1396
        %v1398 = vsub.f32 %v1235, %v1397
        %v1399 = vsub.f32 %v1238, %v1397
        %v1400 = vsub.f32 %v1243, %v1397
        %v1401 = vsub.f32 %v1246, %v1397
        %v1402 = vsub.f32 %v1251, %v1397
        %v1403 = vsub.f32 %v1254, %v1397
        %v1404 = vsub.f32 %v1259, %v1397
        %v1405 = vsub.f32 %v1262, %v1397
        %v1406 = vsub.f32 %v1267, %v1397
        %v1407 = vsub.f32 %v1270, %v1397
        %v1408 = vsub.f32 %v1275, %v1397
        %v1409 = vsub.f32 %v1278, %v1397
        %v1410 = vsub.f32 %v1283, %v1397
        %v1411 = vsub.f32 %v1286, %v1397
        %v1412 = vsub.f32 %v1291, %v1397
        %v1413 = vsub.f32 %v1294, %v1397
        %v1414 = vsub.f32 %v1299, %v1397
        %v1415 = vsub.f32 %v1302, %v1397
        %v1416 = vsub.f32 %v1307, %v1397
        %v1417 = vsub.f32 %v1310, %v1397
        %v1418 = vsub.f32 %v1315, %v1397
        %v1419 = vsub.f32 %v1318, %v1397
        %v1420 = vsub.f32 %v1323, %v1397
        %v1421 = vsub.f32 %v1326, %v1397
        %v1422 = vsub.f32 %v1331, %v1397
        %v1423 = vsub.f32 %v1334, %v1397
        %v1424 = vsub.f32 %v1339, %v1397
        %v1425 = vsub.f32 %v1342, %v1397
        %v1426 = vsub.f32 %v1347, %v1397
        %v1427 = vsub.f32 %v1350, %v1397
        %v1428 = vsub.f32 %v1355, %v1397
        %v1429 = vsub.f32 %v1358, %v1397
        %v1430 = vmul.f32 %v1398, 1.442695
        %v1431 = vpow.pop %v1430
        %v1432 = vmul.f32 %v1399, 1.442695
        %v1433 = vpow.pop %v1432
        %v1434 = vmul.f32 %v1400, 1.442695
        %v1435 = vpow.pop %v1434
        %v1436 = vmul.f32 %v1401, 1.442695
        %v1437 = vpow.pop %v1436
        %v1438 = vmul.f32 %v1402, 1.442695
        %v1439 = vpow.pop %v1438
        %v1440 = vmul.f32 %v1403, 1.442695
        %v1441 = vpow.pop %v1440
        %v1442 = vmul.f32 %v1404, 1.442695
        %v1443 = vpow.pop %v1442
        %v1444 = vmul.f32 %v1405, 1.442695
        %v1445 = vpow.pop %v1444
        %v1446 = vmul.f32 %v1406, 1.442695
        %v1447 = vpow.pop %v1446
        %v1448 = vmul.f32 %v1407, 1.442695
        %v1449 = vpow.pop %v1448
        %v1450 = vmul.f32 %v1408, 1.442695
        %v1451 = vpow.pop %v1450
        %v1452 = vmul.f32 %v1409, 1.442695
        %v1453 = vpow.pop %v1452
        %v1454 = vmul.f32 %v1410, 1.442695
        %v1455 = vpow.pop %v1454
        %v1456 = vmul.f32 %v1411, 1.442695
        %v1457 = vpow.pop %v1456
        %v1458 = vmul.f32 %v1412, 1.442695
        %v1459 = vpow.pop %v1458
        %v1460 = vmul.f32 %v1413, 1.442695
        %v1461 = vpow.pop %v1460
        %v1462 = vmul.f32 %v1414, 1.442695
        %v1463 = vpow.pop %v1462
        %v1464 = vmul.f32 %v1415, 1.442695
        %v1465 = vpow.pop %v1464
        %v1466 = vmul.f32 %v1416, 1.442695
        %v1467 = vpow.pop %v1466
        %v1468 = vmul.f32 %v1417, 1.442695
        %v1469 = vpow.pop %v1468
        %v1470 = vmul.f32 %v1418, 1.442695
        %v1471 = vpow.pop %v1470
        %v1472 = vmul.f32 %v1419, 1.442695
        %v1473 = vpow.pop %v1472
        %v1474 = vmul.f32 %v1420, 1.442695
        %v1475 = vpow.pop %v1474
        %v1476 = vmul.f32 %v1421, 1.442695
        %v1477 = vpow.pop %v1476
        %v1478 = vmul.f32 %v1422, 1.442695
        %v1479 = vpow.pop %v1478
        %v1480 = vmul.f32 %v1423, 1.442695
        %v1481 = vpow.pop %v1480
        %v1482 = vmul.f32 %v1424, 1.442695
        %v1483 = vpow.pop %v1482
        %v1484 = vmul.f32 %v1425, 1.442695
        %v1485 = vpow.pop %v1484
        %v1486 = vmul.f32 %v1426, 1.442695
        %v1487 = vpow.pop %v1486
        %v1488 = vmul.f32 %v1427, 1.442695
        %v1489 = vpow.pop %v1488
        %v1490 = vmul.f32 %v1428, 1.442695
        %v1491 = vpow.pop %v1490
        %v1492 = vmul.f32 %v1429, 1.442695
        %v1493 = vpow.pop %v1492
        %v1494 = vadd.f32 %v1431, %v1433
        %v1495 = vadd.f32 %v1494, %v1435
        %v1496 = vadd.f32 %v1495, %v1437
        %v1497 = vadd.f32 %v1496, %v1439
        %v1498 = vadd.f32 %v1497, %v1441
        %v1499 = vadd.f32 %v1498, %v1443
        %v1500 = vadd.f32 %v1499, %v1445
        %v1501 = vadd.f32 %v1500, %v1447
        %v1502 = vadd.f32 %v1501, %v1449
        %v1503 = vadd.f32 %v1502, %v1451
        %v1504 = vadd.f32 %v1503, %v1453
        %v1505 = vadd.f32 %v1504, %v1455
        %v1506 = vadd.f32 %v1505, %v1457
        %v1507 = vadd.f32 %v1506, %v1459
        %v1508 = vadd.f32 %v1507, %v1461
        %v1509 = vadd.f32 %v1508, %v1463
        %v1510 = vadd.f32 %v1509, %v1465
        %v1511 = vadd.f32 %v1510, %v1467
        %v1512 = vadd.f32 %v1511, %v1469
        %v1513 = vadd.f32 %v1512, %v1471
        %v1514 = vadd.f32 %v1513, %v1473
        %v1515 = vadd.f32 %v1514, %v1475
        %v1516 = vadd.f32 %v1515, %v1477
        %v1517 = vadd.f32 %v1516, %v1479
        %v1518 = vadd.f32 %v1517, %v1481
        %v1519 = vadd.f32 %v1518, %v1483
        %v1520 = vadd.f32 %v1519, %v1485
        %v1521 = vadd.f32 %v1520, %v1487
        %v1522 = vadd.f32 %v1521, %v1489
        %v1523 = vadd.f32 %v1522, %v1491
        %v1524 = vadd.f32 %v1523, %v1493
        %v1525 = vrot.slane %v1524, 4
        %v1526 = vadd.f32 %v1524, %v1525
        %v1527 = vrot.slane %v1526, 2
        %v1528 = vadd.f32 %v1526, %v1527
        %v1529 = vrot.slane %v1528, 1
        %v1530 = vadd.f32 %v1528, %v1529
        %v1531 = vrcp.pop %v1530
        %v1532 = vlaneseq
        %v1533 = vshrl.u32 %v1532, 7
        %v1534 = vadd.s32 %v1533, 8
        %v1535 = vadd.s32 %v1533, 16
        %v1536 = vadd.s32 %v1533, 24
        %v1537 = vadd.s32 %v1533, 32
        %v1538 = vadd.s32 %v1533, 40
        %v1539 = vadd.s32 %v1533, 48
        %v1540 = vadd.s32 %v1533, 56
        %v1541 = vadd.s32 %v1533, 64
        %v1542 = vadd.s32 %v1533, 72
        %v1543 = vadd.s32 %v1533, 80
        %v1544 = vadd.s32 %v1533, 88
        %v1545 = vadd.s32 %v1533, 96
        %v1546 = vadd.s32 %v1533, 104
        %v1547 = vadd.s32 %v1533, 112
        %v1548 = vadd.s32 %v1533, 120
        %v1549 = vlaneseq
        %v1550 = vand.u32 %v1549, 127
        %vm1551 = vcmp.eq.s32.totalorder %v1533, %v1550
        %vm1552 = vcmp.eq.s32.totalorder %v1534, %v1550
        %vm1553 = vcmp.eq.s32.totalorder %v1535, %v1550
        %vm1554 = vcmp.eq.s32.totalorder %v1536, %v1550
        %vm1555 = vcmp.eq.s32.totalorder %v1537, %v1550
        %vm1556 = vcmp.eq.s32.totalorder %v1538, %v1550
        %vm1557 = vcmp.eq.s32.totalorder %v1539, %v1550
        %vm1558 = vcmp.eq.s32.totalorder %v1540, %v1550
        %vm1559 = vcmp.eq.s32.totalorder %v1541, %v1550
        %vm1560 = vcmp.eq.s32.totalorder %v1542, %v1550
        %vm1561 = vcmp.eq.s32.totalorder %v1543, %v1550
        %vm1562 = vcmp.eq.s32.totalorder %v1544, %v1550
        %vm1563 = vcmp.eq.s32.totalorder %v1545, %v1550
        %vm1564 = vcmp.eq.s32.totalorder %v1546, %v1550
        %vm1565 = vcmp.eq.s32.totalorder %v1547, %v1550
        %vm1566 = vcmp.eq.s32.totalorder %v1548, %v1550
        %v1567 = vsel %vm1551, 1, 0
        %v1568 = vsel %vm1552, 1, 0
        %v1569 = vsel %vm1553, 1, 0
        %v1570 = vsel %vm1554, 1, 0
        %v1571 = vsel %vm1555, 1, 0
        %v1572 = vsel %vm1556, 1, 0
        %v1573 = vsel %vm1557, 1, 0
        %v1574 = vsel %vm1558, 1, 0
        %v1575 = vsel %vm1559, 1, 0
        %v1576 = vsel %vm1560, 1, 0
        %v1577 = vsel %vm1561, 1, 0
        %v1578 = vsel %vm1562, 1, 0
        %v1579 = vsel %vm1563, 1, 0
        %v1580 = vsel %vm1564, 1, 0
        %v1581 = vsel %vm1565, 1, 0
        %v1582 = vsel %vm1566, 1, 0
        %v1583 = vcvt.s32.f32 %v1567
        %v1584 = vcvt.s32.f32 %v1568
        %v1585 = vcvt.s32.f32 %v1569
        %v1586 = vcvt.s32.f32 %v1570
        %v1587 = vcvt.s32.f32 %v1571
        %v1588 = vcvt.s32.f32 %v1572
        %v1589 = vcvt.s32.f32 %v1573
        %v1590 = vcvt.s32.f32 %v1574
        %v1591 = vcvt.s32.f32 %v1575
        %v1592 = vcvt.s32.f32 %v1576
        %v1593 = vcvt.s32.f32 %v1577
        %v1594 = vcvt.s32.f32 %v1578
        %v1595 = vcvt.s32.f32 %v1579
        %v1596 = vcvt.s32.f32 %v1580
        %v1597 = vcvt.s32.f32 %v1581
        %v1598 = vcvt.s32.f32 %v1582
        %v1599 = vmul.f32 %v1583, %v1531
        %v1600 = vmul.f32 %v1584, %v1531
        %v1601 = vmul.f32 %v1585, %v1531
        %v1602 = vmul.f32 %v1586, %v1531
        %v1603 = vmul.f32 %v1587, %v1531
        %v1604 = vmul.f32 %v1588, %v1531
        %v1605 = vmul.f32 %v1589, %v1531
        %v1606 = vmul.f32 %v1590, %v1531
        %v1607 = vmul.f32 %v1591, %v1531
        %v1608 = vmul.f32 %v1592, %v1531
        %v1609 = vmul.f32 %v1593, %v1531
        %v1610 = vmul.f32 %v1594, %v1531
        %v1611 = vmul.f32 %v1595, %v1531
        %v1612 = vmul.f32 %v1596, %v1531
        %v1613 = vmul.f32 %v1597, %v1531
        %v1614 = vmul.f32 %v1598, %v1531
        %1615 = vadd.xlane.f32.xlu0 %v1599
        %v1616 = vpop.xlane.xlu0 %1615
        %1617 = vadd.xlane.f32.xlu0 %v1600
        %v1618 = vpop.xlane.xlu0 %1617
        %1619 = vadd.xlane.f32.xlu0 %v1601
        %v1620 = vpop.xlane.xlu0 %1619
        %1621 = vadd.xlane.f32.xlu0 %v1602
        %v1622 = vpop.xlane.xlu0 %1621
        %1623 = vadd.xlane.f32.xlu0 %v1603
        %v1624 = vpop.xlane.xlu0 %1623
        %1625 = vadd.xlane.f32.xlu0 %v1604
        %v1626 = vpop.xlane.xlu0 %1625
        %1627 = vadd.xlane.f32.xlu0 %v1605
        %v1628 = vpop.xlane.xlu0 %1627
        %1629 = vadd.xlane.f32.xlu0 %v1606
        %v1630 = vpop.xlane.xlu0 %1629
        %1631 = vadd.xlane.f32.xlu0 %v1607
        %v1632 = vpop.xlane.xlu0 %1631
        %1633 = vadd.xlane.f32.xlu0 %v1608
        %v1634 = vpop.xlane.xlu0 %1633
        %1635 = vadd.xlane.f32.xlu0 %v1609
        %v1636 = vpop.xlane.xlu0 %1635
        %1637 = vadd.xlane.f32.xlu0 %v1610
        %v1638 = vpop.xlane.xlu0 %1637
        %1639 = vadd.xlane.f32.xlu0 %v1611
        %v1640 = vpop.xlane.xlu0 %1639
        %1641 = vadd.xlane.f32.xlu0 %v1612
        %v1642 = vpop.xlane.xlu0 %1641
        %1643 = vadd.xlane.f32.xlu0 %v1613
        %v1644 = vpop.xlane.xlu0 %1643
        %1645 = vadd.xlane.f32.xlu0 %v1614
        %v1646 = vpop.xlane.xlu0 %1645
        %v1647 = vunpack.c.l.bf16 %v1176
        %v1648 = vunpack.c.h.bf16 %v1176
        %v1649 = vunpack.c.l.bf16 %v1177
        %v1650 = vunpack.c.h.bf16 %v1177
        %v1651 = vunpack.c.l.bf16 %v1178
        %v1652 = vunpack.c.h.bf16 %v1178
        %v1653 = vunpack.c.l.bf16 %v1179
        %v1654 = vunpack.c.h.bf16 %v1179
        %v1655 = vunpack.c.l.bf16 %v1180
        %v1656 = vunpack.c.h.bf16 %v1180
        %v1657 = vunpack.c.l.bf16 %v1181
        %v1658 = vunpack.c.h.bf16 %v1181
        %v1659 = vunpack.c.l.bf16 %v1182
        %v1660 = vunpack.c.h.bf16 %v1182
        %v1661 = vunpack.c.l.bf16 %v1183
        %v1662 = vunpack.c.h.bf16 %v1183
        %v1663 = vmul.f32 %v1647, %v1616
        %v1664 = vmul.f32 %v1648, %v1618
        %v1665 = vmul.f32 %v1649, %v1620
        %v1666 = vmul.f32 %v1650, %v1622
        %v1667 = vmul.f32 %v1651, %v1624
        %v1668 = vmul.f32 %v1652, %v1626
        %v1669 = vmul.f32 %v1653, %v1628
        %v1670 = vmul.f32 %v1654, %v1630
        %v1671 = vmul.f32 %v1655, %v1632
        %v1672 = vmul.f32 %v1656, %v1634
        %v1673 = vmul.f32 %v1657, %v1636
        %v1674 = vmul.f32 %v1658, %v1638
        %v1675 = vmul.f32 %v1659, %v1640
        %v1676 = vmul.f32 %v1660, %v1642
        %v1677 = vmul.f32 %v1661, %v1644
        %v1678 = vmul.f32 %v1662, %v1646
        %v1679 = vpack.c.bf16 %v1664, %v1663
        %v1680 = vpack.c.bf16 %v1666, %v1665
        %v1681 = vpack.c.bf16 %v1668, %v1667
        %v1682 = vpack.c.bf16 %v1670, %v1669
        %v1683 = vpack.c.bf16 %v1672, %v1671
        %v1684 = vpack.c.bf16 %v1674, %v1673
        %v1685 = vpack.c.bf16 %v1676, %v1675
        %v1686 = vpack.c.bf16 %v1678, %v1677
        %v1687 = vld [vmem:[#allocation5] sm:$0xff]
        %v1688 = vld [vmem:[#allocation5 + $0x8] sm:$0xff]
        %v1689 = vld [vmem:[#allocation5 + $0x10] sm:$0xff]
        %v1690 = vld [vmem:[#allocation5 + $0x18] sm:$0xff]
        %v1691 = vld [vmem:[#allocation5 + $0x20] sm:$0xff]
        %v1692 = vld [vmem:[#allocation5 + $0x28] sm:$0xff]
        %v1693 = vld [vmem:[#allocation5 + $0x30] sm:$0xff]
        %v1694 = vld [vmem:[#allocation5 + $0x38] sm:$0xff]
        %v1695 = vld [vmem:[#allocation5 + $0x40] sm:$0xff]
        %v1696 = vld [vmem:[#allocation5 + $0x48] sm:$0xff]
        %v1697 = vld [vmem:[#allocation5 + $0x50] sm:$0xff]
        %v1698 = vld [vmem:[#allocation5 + $0x58] sm:$0xff]
        %v1699 = vld [vmem:[#allocation5 + $0x60] sm:$0xff]
        %v1700 = vld [vmem:[#allocation5 + $0x68] sm:$0xff]
        %v1701 = vld [vmem:[#allocation5 + $0x70] sm:$0xff]
        %v1702 = vld [vmem:[#allocation5 + $0x78] sm:$0xff]
        %v1703 = vld [vmem:[#allocation5 + $0x80] sm:$0xff]
        %v1704 = vld [vmem:[#allocation5 + $0x88] sm:$0xff]
        %v1705 = vld [vmem:[#allocation5 + $0x90] sm:$0xff]
        %v1706 = vld [vmem:[#allocation5 + $0x98] sm:$0xff]
        %v1707 = vld [vmem:[#allocation5 + $0xa0] sm:$0xff]
        %v1708 = vld [vmem:[#allocation5 + $0xa8] sm:$0xff]
        %v1709 = vld [vmem:[#allocation5 + $0xb0] sm:$0xff]
        %v1710 = vld [vmem:[#allocation5 + $0xb8] sm:$0xff]
        %v1711 = vld [vmem:[#allocation5 + $0xc0] sm:$0xff]
        %v1712 = vld [vmem:[#allocation5 + $0xc8] sm:$0xff]
        %v1713 = vld [vmem:[#allocation5 + $0xd0] sm:$0xff]
        %v1714 = vld [vmem:[#allocation5 + $0xd8] sm:$0xff]
        %v1715 = vld [vmem:[#allocation5 + $0xe0] sm:$0xff]
        %v1716 = vld [vmem:[#allocation5 + $0xe8] sm:$0xff]
        %v1717 = vld [vmem:[#allocation5 + $0xf0] sm:$0xff]
        %v1718 = vld [vmem:[#allocation5 + $0xf8] sm:$0xff]
        %v1719 = vpack.c.bf16 %v1433, %v1431
        %v1720 = vpack.c.bf16 %v1437, %v1435
        %v1721 = vpack.c.bf16 %v1441, %v1439
        %v1722 = vpack.c.bf16 %v1445, %v1443
        %v1723 = vpack.c.bf16 %v1449, %v1447
        %v1724 = vpack.c.bf16 %v1453, %v1451
        %v1725 = vpack.c.bf16 %v1457, %v1455
        %v1726 = vpack.c.bf16 %v1461, %v1459
        %v1727 = vpack.c.bf16 %v1465, %v1463
        %v1728 = vpack.c.bf16 %v1469, %v1467
        %v1729 = vpack.c.bf16 %v1473, %v1471
        %v1730 = vpack.c.bf16 %v1477, %v1475
        %v1731 = vpack.c.bf16 %v1481, %v1479
        %v1732 = vpack.c.bf16 %v1485, %v1483
        %v1733 = vpack.c.bf16 %v1489, %v1487
        %v1734 = vpack.c.bf16 %v1493, %v1491
        %1735 = vmatprep.subr.bf16.mxu0 0
        %1736 = vmatpush1.bf16.msra.mxu0 %v1679
        %1737 = vmatprep.subr.bf16.mxu0 0
        %1738 = vmatpush1.bf16.msra.mxu0 %v1680
        %1739 = vmatprep.subr.bf16.mxu0 0
        %1740 = vmatpush1.bf16.msra.mxu0 %v1681
        %1741 = vmatprep.subr.bf16.mxu0 0
        %1742 = vmatpush1.bf16.msra.mxu0 %v1682
        %1743 = vmatprep.subr.bf16.mxu0 0
        %1744 = vmatpush1.bf16.msra.mxu0 %v1683
        %1745 = vmatprep.subr.bf16.mxu0 0
        %1746 = vmatpush1.bf16.msra.mxu0 %v1684
        %1747 = vmatprep.subr.bf16.mxu0 0
        %1748 = vmatpush1.bf16.msra.mxu0 %v1685
        %1749 = vmatprep.subr.bf16.mxu0 0
        %1750 = vmatpush1.bf16.msra.mxu0 %v1686
        %1751 = vmatprep.subr.bf16.mxu0 0
        %1752 = vmatpush1.bf16.msra.mxu0 0
        %1753 = vmatprep.subr.bf16.mxu0 0
        %1754 = vmatpush1.bf16.msra.mxu0 0
        %1755 = vmatprep.subr.bf16.mxu0 0
        %1756 = vmatpush1.bf16.msra.mxu0 0
        %1757 = vmatprep.subr.bf16.mxu0 0
        %1758 = vmatpush1.bf16.msra.mxu0 0
        %1759 = vmatprep.subr.bf16.mxu0 0
        %1760 = vmatpush1.bf16.msra.mxu0 0
        %1761 = vmatprep.subr.bf16.mxu0 0
        %1762 = vmatpush1.bf16.msra.mxu0 0
        %1763 = vmatprep.subr.bf16.mxu0 0
        %1764 = vmatpush1.bf16.msra.mxu0 0
        %1765 = vmatprep.subr.bf16.mxu0 0
        %1766 = vmatpush1.bf16.msra.mxu0 0
        %1767 = vmatprep.mubr.bf16.mxu0 0
        %1768 = vmatmul.mubr.bf16.gmra.mrb[0].mxu0 %v1719
        %v1769 = vpop.f32.mrb[0].mxu0
        %v1770 = vadd.f32 0.0, %v1769
        %v1771 = vpop.f32.mrb[0].mxu0
        %v1772 = vpop.f32.mrb[0].mxu0
        %v1773 = vadd.f32 0.0, %v1772
        %v1774 = vpop.f32.mrb[0].mxu0
        %1775 = vmatprep.mubr.bf16.mxu0 0
        %1776 = vmatmul.mubr.bf16.gmra.mrb[0].mxu0 %v1720
        %v1777 = vpop.f32.mrb[0].mxu0
        %v1778 = vadd.f32 0.0, %v1777
        %v1779 = vpop.f32.mrb[0].mxu0
        %v1780 = vpop.f32.mrb[0].mxu0
        %v1781 = vadd.f32 0.0, %v1780
        %v1782 = vpop.f32.mrb[0].mxu0
        %1783 = vmatprep.mubr.bf16.mxu0 0
        %1784 = vmatmul.mubr.bf16.gmra.mrb[0].mxu0 %v1721
        %v1785 = vpop.f32.mrb[0].mxu0
        %v1786 = vadd.f32 0.0, %v1785
        %v1787 = vpop.f32.mrb[0].mxu0
        %v1788 = vpop.f32.mrb[0].mxu0
        %v1789 = vadd.f32 0.0, %v1788
        %v1790 = vpop.f32.mrb[0].mxu0
        %1791 = vmatprep.mubr.bf16.mxu0 0
        %1792 = vmatmul.mubr.bf16.gmra.mrb[0].mxu0 %v1722
        %v1793 = vpop.f32.mrb[0].mxu0
        %v1794 = vadd.f32 0.0, %v1793
        %v1795 = vpop.f32.mrb[0].mxu0
        %v1796 = vpop.f32.mrb[0].mxu0
        %v1797 = vadd.f32 0.0, %v1796
        %v1798 = vpop.f32.mrb[0].mxu0
        %1799 = vmatprep.mubr.bf16.mxu0 0
        %1800 = vmatmul.mubr.bf16.gmra.mrb[0].mxu0 %v1723
        %v1801 = vpop.f32.mrb[0].mxu0
        %v1802 = vadd.f32 0.0, %v1801
        %v1803 = vpop.f32.mrb[0].mxu0
        %v1804 = vpop.f32.mrb[0].mxu0
        %v1805 = vadd.f32 0.0, %v1804
        %v1806 = vpop.f32.mrb[0].mxu0
        %1807 = vmatprep.mubr.bf16.mxu0 0
        %1808 = vmatmul.mubr.bf16.gmra.mrb[0].mxu0 %v1724
        %v1809 = vpop.f32.mrb[0].mxu0
        %v1810 = vadd.f32 0.0, %v1809
        %v1811 = vpop.f32.mrb[0].mxu0
        %v1812 = vpop.f32.mrb[0].mxu0
        %v1813 = vadd.f32 0.0, %v1812
        %v1814 = vpop.f32.mrb[0].mxu0
        %1815 = vmatprep.mubr.bf16.mxu0 0
        %1816 = vmatmul.mubr.bf16.gmra.mrb[0].mxu0 %v1725
        %v1817 = vpop.f32.mrb[0].mxu0
        %v1818 = vadd.f32 0.0, %v1817
        %v1819 = vpop.f32.mrb[0].mxu0
        %v1820 = vpop.f32.mrb[0].mxu0
        %v1821 = vadd.f32 0.0, %v1820
        %v1822 = vpop.f32.mrb[0].mxu0
        %1823 = vmatprep.mubr.bf16.mxu0 0
        %1824 = vmatmul.mubr.bf16.gmra.mrb[0].mxu0 %v1726
        %v1825 = vpop.f32.mrb[0].mxu0
        %v1826 = vadd.f32 0.0, %v1825
        %v1827 = vpop.f32.mrb[0].mxu0
        %v1828 = vpop.f32.mrb[0].mxu0
        %v1829 = vadd.f32 0.0, %v1828
        %v1830 = vpop.f32.mrb[0].mxu0
        %1831 = vmatprep.mubr.bf16.mxu0 0
        %1832 = vmatmul.mubr.bf16.gmra.mrb[0].mxu0 %v1727
        %v1833 = vpop.f32.mrb[0].mxu0
        %v1834 = vadd.f32 0.0, %v1833
        %v1835 = vpop.f32.mrb[0].mxu0
        %v1836 = vpop.f32.mrb[0].mxu0
        %v1837 = vadd.f32 0.0, %v1836
        %v1838 = vpop.f32.mrb[0].mxu0
        %1839 = vmatprep.mubr.bf16.mxu0 0
        %1840 = vmatmul.mubr.bf16.gmra.mrb[0].mxu0 %v1728
        %v1841 = vpop.f32.mrb[0].mxu0
        %v1842 = vadd.f32 0.0, %v1841
        %v1843 = vpop.f32.mrb[0].mxu0
        %v1844 = vpop.f32.mrb[0].mxu0
        %v1845 = vadd.f32 0.0, %v1844
        %v1846 = vpop.f32.mrb[0].mxu0
        %1847 = vmatprep.mubr.bf16.mxu0 0
        %1848 = vmatmul.mubr.bf16.gmra.mrb[0].mxu0 %v1729
        %v1849 = vpop.f32.mrb[0].mxu0
        %v1850 = vadd.f32 0.0, %v1849
        %v1851 = vpop.f32.mrb[0].mxu0
        %v1852 = vpop.f32.mrb[0].mxu0
        %v1853 = vadd.f32 0.0, %v1852
        %v1854 = vpop.f32.mrb[0].mxu0
        %1855 = vmatprep.mubr.bf16.mxu0 0
        %1856 = vmatmul.mubr.bf16.gmra.mrb[0].mxu0 %v1730
        %v1857 = vpop.f32.mrb[0].mxu0
        %v1858 = vadd.f32 0.0, %v1857
        %v1859 = vpop.f32.mrb[0].mxu0
        %v1860 = vpop.f32.mrb[0].mxu0
        %v1861 = vadd.f32 0.0, %v1860
        %v1862 = vpop.f32.mrb[0].mxu0
        %1863 = vmatprep.mubr.bf16.mxu0 0
        %1864 = vmatmul.mubr.bf16.gmra.mrb[0].mxu0 %v1731
        %v1865 = vpop.f32.mrb[0].mxu0
        %v1866 = vadd.f32 0.0, %v1865
        %v1867 = vpop.f32.mrb[0].mxu0
        %v1868 = vpop.f32.mrb[0].mxu0
        %v1869 = vadd.f32 0.0, %v1868
        %v1870 = vpop.f32.mrb[0].mxu0
        %1871 = vmatprep.mubr.bf16.mxu0 0
        %1872 = vmatmul.mubr.bf16.gmra.mrb[0].mxu0 %v1732
        %v1873 = vpop.f32.mrb[0].mxu0
        %v1874 = vadd.f32 0.0, %v1873
        %v1875 = vpop.f32.mrb[0].mxu0
        %v1876 = vpop.f32.mrb[0].mxu0
        %v1877 = vadd.f32 0.0, %v1876
        %v1878 = vpop.f32.mrb[0].mxu0
        %1879 = vmatprep.mubr.bf16.mxu0 0
        %1880 = vmatmul.mubr.bf16.gmra.mrb[0].mxu0 %v1733
        %v1881 = vpop.f32.mrb[0].mxu0
        %v1882 = vadd.f32 0.0, %v1881
        %v1883 = vpop.f32.mrb[0].mxu0
        %v1884 = vpop.f32.mrb[0].mxu0
        %v1885 = vadd.f32 0.0, %v1884
        %v1886 = vpop.f32.mrb[0].mxu0
        %1887 = vmatprep.mubr.bf16.mxu0 0
        %1888 = vmatmul.mubr.bf16.gmra.mrb[0].mxu0 %v1734
        %v1889 = vpop.f32.mrb[0].mxu0
        %v1890 = vadd.f32 0.0, %v1889
        %v1891 = vpop.f32.mrb[0].mxu0
        %v1892 = vpop.f32.mrb[0].mxu0
        %v1893 = vadd.f32 0.0, %v1892
        %v1894 = vpop.f32.mrb[0].mxu0
        %1895 = vdwg.mxu0
        %v1896 = vadd.f32 %v1687, %v1770
        %v1897 = vadd.f32 %v1688, %v1773
        %v1898 = vadd.f32 %v1689, %v1778
        %v1899 = vadd.f32 %v1690, %v1781
        %v1900 = vadd.f32 %v1691, %v1786
        %v1901 = vadd.f32 %v1692, %v1789
        %v1902 = vadd.f32 %v1693, %v1794
        %v1903 = vadd.f32 %v1694, %v1797
        %v1904 = vadd.f32 %v1695, %v1802
        %v1905 = vadd.f32 %v1696, %v1805
        %v1906 = vadd.f32 %v1697, %v1810
        %v1907 = vadd.f32 %v1698, %v1813
        %v1908 = vadd.f32 %v1699, %v1818
        %v1909 = vadd.f32 %v1700, %v1821
        %v1910 = vadd.f32 %v1701, %v1826
        %v1911 = vadd.f32 %v1702, %v1829
        %v1912 = vadd.f32 %v1703, %v1834
        %v1913 = vadd.f32 %v1704, %v1837
        %v1914 = vadd.f32 %v1705, %v1842
        %v1915 = vadd.f32 %v1706, %v1845
        %v1916 = vadd.f32 %v1707, %v1850
        %v1917 = vadd.f32 %v1708, %v1853
        %v1918 = vadd.f32 %v1709, %v1858
        %v1919 = vadd.f32 %v1710, %v1861
        %v1920 = vadd.f32 %v1711, %v1866
        %v1921 = vadd.f32 %v1712, %v1869
        %v1922 = vadd.f32 %v1713, %v1874
        %v1923 = vadd.f32 %v1714, %v1877
        %v1924 = vadd.f32 %v1715, %v1882
        %v1925 = vadd.f32 %v1716, %v1885
        %v1926 = vadd.f32 %v1717, %v1890
        %v1927 = vadd.f32 %v1718, %v1893
        %1928 = vst [vmem:[#allocation5] sm:$0xff] %v1896
        %1929 = vst [vmem:[#allocation5 + $0x8] sm:$0xff] %v1897
        %1930 = vst [vmem:[#allocation5 + $0x10] sm:$0xff] %v1898
        %1931 = vst [vmem:[#allocation5 + $0x18] sm:$0xff] %v1899
        %1932 = vst [vmem:[#allocation5 + $0x20] sm:$0xff] %v1900
        %1933 = vst [vmem:[#allocation5 + $0x28] sm:$0xff] %v1901
        %1934 = vst [vmem:[#allocation5 + $0x30] sm:$0xff] %v1902
        %1935 = vst [vmem:[#allocation5 + $0x38] sm:$0xff] %v1903
        %1936 = vst [vmem:[#allocation5 + $0x40] sm:$0xff] %v1904
        %1937 = vst [vmem:[#allocation5 + $0x48] sm:$0xff] %v1905
        %1938 = vst [vmem:[#allocation5 + $0x50] sm:$0xff] %v1906
        %1939 = vst [vmem:[#allocation5 + $0x58] sm:$0xff] %v1907
        %1940 = vst [vmem:[#allocation5 + $0x60] sm:$0xff] %v1908
        %1941 = vst [vmem:[#allocation5 + $0x68] sm:$0xff] %v1909
        %1942 = vst [vmem:[#allocation5 + $0x70] sm:$0xff] %v1910
        %1943 = vst [vmem:[#allocation5 + $0x78] sm:$0xff] %v1911
        %1944 = vst [vmem:[#allocation5 + $0x80] sm:$0xff] %v1912
        %1945 = vst [vmem:[#allocation5 + $0x88] sm:$0xff] %v1913
        %1946 = vst [vmem:[#allocation5 + $0x90] sm:$0xff] %v1914
        %1947 = vst [vmem:[#allocation5 + $0x98] sm:$0xff] %v1915
        %1948 = vst [vmem:[#allocation5 + $0xa0] sm:$0xff] %v1916
        %1949 = vst [vmem:[#allocation5 + $0xa8] sm:$0xff] %v1917
        %1950 = vst [vmem:[#allocation5 + $0xb0] sm:$0xff] %v1918
        %1951 = vst [vmem:[#allocation5 + $0xb8] sm:$0xff] %v1919
        %1952 = vst [vmem:[#allocation5 + $0xc0] sm:$0xff] %v1920
        %1953 = vst [vmem:[#allocation5 + $0xc8] sm:$0xff] %v1921
        %1954 = vst [vmem:[#allocation5 + $0xd0] sm:$0xff] %v1922
        %1955 = vst [vmem:[#allocation5 + $0xd8] sm:$0xff] %v1923
        %1956 = vst [vmem:[#allocation5 + $0xe0] sm:$0xff] %v1924
        %1957 = vst [vmem:[#allocation5 + $0xe8] sm:$0xff] %v1925
        %1958 = vst [vmem:[#allocation5 + $0xf0] sm:$0xff] %v1926
        %1959 = vst [vmem:[#allocation5 + $0xf8] sm:$0xff] %v1927
        %p1960 = scmp.eq.s32.totalorder %s28, 1
        // Predicated region
        $region57: #{tpu_custom_call.1} parent=39 // pred_check
          %p1961 = pneg %p1960
        $region58: #{tpu_custom_call.1} parent=39 // pred_check_branch
          %1963 = sbr.rel (%p1961) target = $region60
        $region59: #{tpu_custom_call.1} parent=39 // pred_region
          %v1964 = vld [vmem:[#allocation5] sm:$0xff]
          %v1965 = vld [vmem:[#allocation5 + $0x8] sm:$0xff]
          %v1966 = vld [vmem:[#allocation5 + $0x10] sm:$0xff]
          %v1967 = vld [vmem:[#allocation5 + $0x18] sm:$0xff]
          %v1968 = vld [vmem:[#allocation5 + $0x20] sm:$0xff]
          %v1969 = vld [vmem:[#allocation5 + $0x28] sm:$0xff]
          %v1970 = vld [vmem:[#allocation5 + $0x30] sm:$0xff]
          %v1971 = vld [vmem:[#allocation5 + $0x38] sm:$0xff]
          %v1972 = vld [vmem:[#allocation5 + $0x40] sm:$0xff]
          %v1973 = vld [vmem:[#allocation5 + $0x48] sm:$0xff]
          %v1974 = vld [vmem:[#allocation5 + $0x50] sm:$0xff]
          %v1975 = vld [vmem:[#allocation5 + $0x58] sm:$0xff]
          %v1976 = vld [vmem:[#allocation5 + $0x60] sm:$0xff]
          %v1977 = vld [vmem:[#allocation5 + $0x68] sm:$0xff]
          %v1978 = vld [vmem:[#allocation5 + $0x70] sm:$0xff]
          %v1979 = vld [vmem:[#allocation5 + $0x78] sm:$0xff]
          %v1980 = vld [vmem:[#allocation5 + $0x80] sm:$0xff]
          %v1981 = vld [vmem:[#allocation5 + $0x88] sm:$0xff]
          %v1982 = vld [vmem:[#allocation5 + $0x90] sm:$0xff]
          %v1983 = vld [vmem:[#allocation5 + $0x98] sm:$0xff]
          %v1984 = vld [vmem:[#allocation5 + $0xa0] sm:$0xff]
          %v1985 = vld [vmem:[#allocation5 + $0xa8] sm:$0xff]
          %v1986 = vld [vmem:[#allocation5 + $0xb0] sm:$0xff]
          %v1987 = vld [vmem:[#allocation5 + $0xb8] sm:$0xff]
          %v1988 = vld [vmem:[#allocation5 + $0xc0] sm:$0xff]
          %v1989 = vld [vmem:[#allocation5 + $0xc8] sm:$0xff]
          %v1990 = vld [vmem:[#allocation5 + $0xd0] sm:$0xff]
          %v1991 = vld [vmem:[#allocation5 + $0xd8] sm:$0xff]
          %v1992 = vld [vmem:[#allocation5 + $0xe0] sm:$0xff]
          %v1993 = vld [vmem:[#allocation5 + $0xe8] sm:$0xff]
          %v1994 = vld [vmem:[#allocation5 + $0xf0] sm:$0xff]
          %v1995 = vld [vmem:[#allocation5 + $0xf8] sm:$0xff]
          %v1996 = vpack.c.bf16 %v1965, %v1964
          %v1997 = vpack.c.bf16 %v1967, %v1966
          %v1998 = vpack.c.bf16 %v1969, %v1968
          %v1999 = vpack.c.bf16 %v1971, %v1970
          %v2000 = vpack.c.bf16 %v1973, %v1972
          %v2001 = vpack.c.bf16 %v1975, %v1974
          %v2002 = vpack.c.bf16 %v1977, %v1976
          %v2003 = vpack.c.bf16 %v1979, %v1978
          %v2004 = vpack.c.bf16 %v1981, %v1980
          %v2005 = vpack.c.bf16 %v1983, %v1982
          %v2006 = vpack.c.bf16 %v1985, %v1984
          %v2007 = vpack.c.bf16 %v1987, %v1986
          %v2008 = vpack.c.bf16 %v1989, %v1988
          %v2009 = vpack.c.bf16 %v1991, %v1990
          %v2010 = vpack.c.bf16 %v1993, %v1992
          %v2011 = vpack.c.bf16 %v1995, %v1994
          %v2012 = vld [vmem:[#allocation11] sm:$0xf]
          %v2013 = vld [vmem:[#allocation11 + $0x4] sm:$0xf]
          %v2014 = vld [vmem:[#allocation11 + $0x8] sm:$0xf]
          %v2015 = vld [vmem:[#allocation11 + $0xc] sm:$0xf]
          %v2016 = vld [vmem:[#allocation11 + $0x10] sm:$0xf]
          %v2017 = vld [vmem:[#allocation11 + $0x14] sm:$0xf]
          %v2018 = vld [vmem:[#allocation11 + $0x18] sm:$0xf]
          %v2019 = vld [vmem:[#allocation11 + $0x1c] sm:$0xf]
          %v2020 = vld [vmem:[#allocation11 + $0x20] sm:$0xf]
          %v2021 = vld [vmem:[#allocation11 + $0x24] sm:$0xf]
          %v2022 = vld [vmem:[#allocation11 + $0x28] sm:$0xf]
          %v2023 = vld [vmem:[#allocation11 + $0x2c] sm:$0xf]
          %v2024 = vld [vmem:[#allocation11 + $0x30] sm:$0xf]
          %v2025 = vld [vmem:[#allocation11 + $0x34] sm:$0xf]
          %v2026 = vld [vmem:[#allocation11 + $0x38] sm:$0xf]
          %v2027 = vld [vmem:[#allocation11 + $0x3c] sm:$0xf]
          %v2028 = vld [vmem:[%s4] sm:$0x1]
          %v2030 = vlaneseq
          %v2031 = vshrl.u32 %v2030, 7
          %v2032 = vsub.s32 0, %v2031
          %v2033 = vrot.slane %v2028, %v2032
          %v2051 = vunpack.c.l.b16 %v2012
          %v2052 = vunpack.c.l.b16 %v2013
          %v2053 = vunpack.c.l.b16 %v2014
          %v2054 = vunpack.c.l.b16 %v2015
          %v2055 = vunpack.c.l.b16 %v2016
          %v2056 = vunpack.c.l.b16 %v2017
          %v2057 = vunpack.c.l.b16 %v2018
          %v2058 = vunpack.c.l.b16 %v2019
          %v2059 = vunpack.c.l.b16 %v2020
          %v2060 = vunpack.c.l.b16 %v2021
          %v2061 = vunpack.c.l.b16 %v2022
          %v2062 = vunpack.c.l.b16 %v2023
          %v2063 = vunpack.c.l.b16 %v2024
          %v2064 = vunpack.c.l.b16 %v2025
          %v2065 = vunpack.c.l.b16 %v2026
          %v2066 = vunpack.c.l.b16 %v2027
          %v2067 = vpack.c.b16 %v2052, %v2051
          %v2068 = vpack.c.b16 %v2054, %v2053
          %v2069 = vpack.c.b16 %v2056, %v2055
          %v2070 = vpack.c.b16 %v2058, %v2057
          %v2071 = vpack.c.b16 %v2060, %v2059
          %v2072 = vpack.c.b16 %v2062, %v2061
          %v2073 = vpack.c.b16 %v2064, %v2063
          %v2074 = vpack.c.b16 %v2066, %v2065
          %2083 = vmatprep.subr.bf16.mxu0 0
          %2084 = vmatpush1.bf16.msra.mxu0 %v2067
          %2085 = vmatprep.subr.bf16.mxu0 0
          %2086 = vmatpush1.bf16.msra.mxu0 %v2068
          %2087 = vmatprep.subr.bf16.mxu0 0
          %2088 = vmatpush1.bf16.msra.mxu0 %v2069
          %2089 = vmatprep.subr.bf16.mxu0 0
          %2090 = vmatpush1.bf16.msra.mxu0 %v2070
          %2091 = vmatprep.subr.bf16.mxu0 0
          %2092 = vmatpush1.bf16.msra.mxu0 %v2071
          %2093 = vmatprep.subr.bf16.mxu0 0
          %2094 = vmatpush1.bf16.msra.mxu0 %v2072
          %2095 = vmatprep.subr.bf16.mxu0 0
          %2096 = vmatpush1.bf16.msra.mxu0 %v2073
          %2097 = vmatprep.subr.bf16.mxu0 0
          %2098 = vmatpush1.bf16.msra.mxu0 %v2074
          %2099 = vmatprep.subr.bf16.mxu0 0
          %2100 = vmatpush1.bf16.msra.mxu0 0
          %2101 = vmatprep.subr.bf16.mxu0 0
          %2102 = vmatpush1.bf16.msra.mxu0 0
          %2103 = vmatprep.subr.bf16.mxu0 0
          %2104 = vmatpush1.bf16.msra.mxu0 0
          %2105 = vmatprep.subr.bf16.mxu0 0
          %2106 = vmatpush1.bf16.msra.mxu0 0
          %2107 = vmatprep.subr.bf16.mxu0 0
          %2108 = vmatpush1.bf16.msra.mxu0 0
          %2109 = vmatprep.subr.bf16.mxu0 0
          %2110 = vmatpush1.bf16.msra.mxu0 0
          %2111 = vmatprep.subr.bf16.mxu0 0
          %2112 = vmatpush1.bf16.msra.mxu0 0
          %2113 = vmatprep.subr.bf16.mxu0 0
          %2114 = vmatpush1.bf16.msra.mxu0 0
          %2115 = vmatprep.mubr.bf16.mxu0 0
          %2116 = vmatmul.mubr.bf16.gmra.mrb[0].mxu0 %v1996
          %v2117 = vpop.f32.mrb[0].mxu0
          %v2118 = vadd.f32 %v2033, %v2117
          %v2119 = vpop.f32.mrb[0].mxu0
          %v2120 = vpop.f32.mrb[0].mxu0
          %v2121 = vadd.f32 %v2033, %v2120
          %v2122 = vpop.f32.mrb[0].mxu0
          %2123 = vmatprep.mubr.bf16.mxu0 0
          %2124 = vmatmul.mubr.bf16.gmra.mrb[0].mxu0 %v1997
          %v2125 = vpop.f32.mrb[0].mxu0
          %v2126 = vadd.f32 %v2033, %v2125
          %v2127 = vpop.f32.mrb[0].mxu0
          %v2128 = vpop.f32.mrb[0].mxu0
          %v2129 = vadd.f32 %v2033, %v2128
          %v2130 = vpop.f32.mrb[0].mxu0
          %2131 = vmatprep.mubr.bf16.mxu0 0
          %2132 = vmatmul.mubr.bf16.gmra.mrb[0].mxu0 %v1998
          %v2133 = vpop.f32.mrb[0].mxu0
          %v2134 = vadd.f32 %v2033, %v2133
          %v2135 = vpop.f32.mrb[0].mxu0
          %v2136 = vpop.f32.mrb[0].mxu0
          %v2137 = vadd.f32 %v2033, %v2136
          %v2138 = vpop.f32.mrb[0].mxu0
          %2139 = vmatprep.mubr.bf16.mxu0 0
          %2140 = vmatmul.mubr.bf16.gmra.mrb[0].mxu0 %v1999
          %v2141 = vpop.f32.mrb[0].mxu0
          %v2142 = vadd.f32 %v2033, %v2141
          %v2143 = vpop.f32.mrb[0].mxu0
          %v2144 = vpop.f32.mrb[0].mxu0
          %v2145 = vadd.f32 %v2033, %v2144
          %v2146 = vpop.f32.mrb[0].mxu0
          %2147 = vmatprep.mubr.bf16.mxu0 0
          %2148 = vmatmul.mubr.bf16.gmra.mrb[0].mxu0 %v2000
          %v2149 = vpop.f32.mrb[0].mxu0
          %v2150 = vadd.f32 %v2033, %v2149
          %v2151 = vpop.f32.mrb[0].mxu0
          %v2152 = vpop.f32.mrb[0].mxu0
          %v2153 = vadd.f32 %v2033, %v2152
          %v2154 = vpop.f32.mrb[0].mxu0
          %2155 = vmatprep.mubr.bf16.mxu0 0
          %2156 = vmatmul.mubr.bf16.gmra.mrb[0].mxu0 %v2001
          %v2157 = vpop.f32.mrb[0].mxu0
          %v2158 = vadd.f32 %v2033, %v2157
          %v2159 = vpop.f32.mrb[0].mxu0
          %v2160 = vpop.f32.mrb[0].mxu0
          %v2161 = vadd.f32 %v2033, %v2160
          %v2162 = vpop.f32.mrb[0].mxu0
          %2163 = vmatprep.mubr.bf16.mxu0 0
          %2164 = vmatmul.mubr.bf16.gmra.mrb[0].mxu0 %v2002
          %v2165 = vpop.f32.mrb[0].mxu0
          %v2166 = vadd.f32 %v2033, %v2165
          %v2167 = vpop.f32.mrb[0].mxu0
          %v2168 = vpop.f32.mrb[0].mxu0
          %v2169 = vadd.f32 %v2033, %v2168
          %v2170 = vpop.f32.mrb[0].mxu0
          %2171 = vmatprep.mubr.bf16.mxu0 0
          %2172 = vmatmul.mubr.bf16.gmra.mrb[0].mxu0 %v2003
          %v2173 = vpop.f32.mrb[0].mxu0
          %v2174 = vadd.f32 %v2033, %v2173
          %v2175 = vpop.f32.mrb[0].mxu0
          %v2176 = vpop.f32.mrb[0].mxu0
          %v2177 = vadd.f32 %v2033, %v2176
          %v2178 = vpop.f32.mrb[0].mxu0
          %2179 = vmatprep.mubr.bf16.mxu0 0
          %2180 = vmatmul.mubr.bf16.gmra.mrb[0].mxu0 %v2004
          %v2181 = vpop.f32.mrb[0].mxu0
          %v2182 = vadd.f32 %v2033, %v2181
          %v2183 = vpop.f32.mrb[0].mxu0
          %v2184 = vpop.f32.mrb[0].mxu0
          %v2185 = vadd.f32 %v2033, %v2184
          %v2186 = vpop.f32.mrb[0].mxu0
          %2187 = vmatprep.mubr.bf16.mxu0 0
          %2188 = vmatmul.mubr.bf16.gmra.mrb[0].mxu0 %v2005
          %v2189 = vpop.f32.mrb[0].mxu0
          %v2190 = vadd.f32 %v2033, %v2189
          %v2191 = vpop.f32.mrb[0].mxu0
          %v2192 = vpop.f32.mrb[0].mxu0
          %v2193 = vadd.f32 %v2033, %v2192
          %v2194 = vpop.f32.mrb[0].mxu0
          %2195 = vmatprep.mubr.bf16.mxu0 0
          %2196 = vmatmul.mubr.bf16.gmra.mrb[0].mxu0 %v2006
          %v2197 = vpop.f32.mrb[0].mxu0
          %v2198 = vadd.f32 %v2033, %v2197
          %v2199 = vpop.f32.mrb[0].mxu0
          %v2200 = vpop.f32.mrb[0].mxu0
          %v2201 = vadd.f32 %v2033, %v2200
          %v2202 = vpop.f32.mrb[0].mxu0
          %2203 = vmatprep.mubr.bf16.mxu0 0
          %2204 = vmatmul.mubr.bf16.gmra.mrb[0].mxu0 %v2007
          %v2205 = vpop.f32.mrb[0].mxu0
          %v2206 = vadd.f32 %v2033, %v2205
          %v2207 = vpop.f32.mrb[0].mxu0
          %v2208 = vpop.f32.mrb[0].mxu0
          %v2209 = vadd.f32 %v2033, %v2208
          %v2210 = vpop.f32.mrb[0].mxu0
          %2211 = vmatprep.mubr.bf16.mxu0 0
          %2212 = vmatmul.mubr.bf16.gmra.mrb[0].mxu0 %v2008
          %v2213 = vpop.f32.mrb[0].mxu0
          %v2214 = vadd.f32 %v2033, %v2213
          %v2215 = vpop.f32.mrb[0].mxu0
          %v2216 = vpop.f32.mrb[0].mxu0
          %v2217 = vadd.f32 %v2033, %v2216
          %v2218 = vpop.f32.mrb[0].mxu0
          %2219 = vmatprep.mubr.bf16.mxu0 0
          %2220 = vmatmul.mubr.bf16.gmra.mrb[0].mxu0 %v2009
          %v2221 = vpop.f32.mrb[0].mxu0
          %v2222 = vadd.f32 %v2033, %v2221
          %v2223 = vpop.f32.mrb[0].mxu0
          %v2224 = vpop.f32.mrb[0].mxu0
          %v2225 = vadd.f32 %v2033, %v2224
          %v2226 = vpop.f32.mrb[0].mxu0
          %2227 = vmatprep.mubr.bf16.mxu0 0
          %2228 = vmatmul.mubr.bf16.gmra.mrb[0].mxu0 %v2010
          %v2229 = vpop.f32.mrb[0].mxu0
          %v2230 = vadd.f32 %v2033, %v2229
          %v2231 = vpop.f32.mrb[0].mxu0
          %v2232 = vpop.f32.mrb[0].mxu0
          %v2233 = vadd.f32 %v2033, %v2232
          %v2234 = vpop.f32.mrb[0].mxu0
          %2235 = vmatprep.mubr.bf16.mxu0 0
          %2236 = vmatmul.mubr.bf16.gmra.mrb[0].mxu0 %v2011
          %v2237 = vpop.f32.mrb[0].mxu0
          %v2238 = vadd.f32 %v2033, %v2237
          %v2239 = vpop.f32.mrb[0].mxu0
          %v2240 = vpop.f32.mrb[0].mxu0
          %v2241 = vadd.f32 %v2033, %v2240
          %v2242 = vpop.f32.mrb[0].mxu0
          %2243 = vdwg.mxu0
          %v2244 = vld [vmem:[%s249] sm:$0xff]
          %v2245 = vld [vmem:[%s249 + $0x8] sm:$0xff]
          %v2246 = vld [vmem:[%s249 + $0x10] sm:$0xff]
          %v2247 = vld [vmem:[%s249 + $0x18] sm:$0xff]
          %v2248 = vld [vmem:[%s249 + $0x20] sm:$0xff]
          %v2249 = vld [vmem:[%s249 + $0x28] sm:$0xff]
          %v2250 = vld [vmem:[%s249 + $0x30] sm:$0xff]
          %v2251 = vld [vmem:[%s249 + $0x38] sm:$0xff]
          %v2252 = vld [vmem:[%s249 + $0x40] sm:$0xff]
          %v2253 = vld [vmem:[%s249 + $0x48] sm:$0xff]
          %v2254 = vld [vmem:[%s249 + $0x50] sm:$0xff]
          %v2255 = vld [vmem:[%s249 + $0x58] sm:$0xff]
          %v2256 = vld [vmem:[%s249 + $0x60] sm:$0xff]
          %v2257 = vld [vmem:[%s249 + $0x68] sm:$0xff]
          %v2258 = vld [vmem:[%s249 + $0x70] sm:$0xff]
          %v2259 = vld [vmem:[%s249 + $0x78] sm:$0xff]
          %v2260 = vld [vmem:[%s249 + $0x80] sm:$0xff]
          %v2261 = vld [vmem:[%s249 + $0x88] sm:$0xff]
          %v2262 = vld [vmem:[%s249 + $0x90] sm:$0xff]
          %v2263 = vld [vmem:[%s249 + $0x98] sm:$0xff]
          %v2264 = vld [vmem:[%s249 + $0xa0] sm:$0xff]
          %v2265 = vld [vmem:[%s249 + $0xa8] sm:$0xff]
          %v2266 = vld [vmem:[%s249 + $0xb0] sm:$0xff]
          %v2267 = vld [vmem:[%s249 + $0xb8] sm:$0xff]
          %v2268 = vld [vmem:[%s249 + $0xc0] sm:$0xff]
          %v2269 = vld [vmem:[%s249 + $0xc8] sm:$0xff]
          %v2270 = vld [vmem:[%s249 + $0xd0] sm:$0xff]
          %v2271 = vld [vmem:[%s249 + $0xd8] sm:$0xff]
          %v2272 = vld [vmem:[%s249 + $0xe0] sm:$0xff]
          %v2273 = vld [vmem:[%s249 + $0xe8] sm:$0xff]
          %v2274 = vld [vmem:[%s249 + $0xf0] sm:$0xff]
          %v2275 = vld [vmem:[%s249 + $0xf8] sm:$0xff]
          %v2276 = vadd.f32 %v2244, %v2118
          %v2277 = vadd.f32 %v2245, %v2121
          %v2278 = vadd.f32 %v2246, %v2126
          %v2279 = vadd.f32 %v2247, %v2129
          %v2280 = vadd.f32 %v2248, %v2134
          %v2281 = vadd.f32 %v2249, %v2137
          %v2282 = vadd.f32 %v2250, %v2142
          %v2283 = vadd.f32 %v2251, %v2145
          %v2284 = vadd.f32 %v2252, %v2150
          %v2285 = vadd.f32 %v2253, %v2153
          %v2286 = vadd.f32 %v2254, %v2158
          %v2287 = vadd.f32 %v2255, %v2161
          %v2288 = vadd.f32 %v2256, %v2166
          %v2289 = vadd.f32 %v2257, %v2169
          %v2290 = vadd.f32 %v2258, %v2174
          %v2291 = vadd.f32 %v2259, %v2177
          %v2292 = vadd.f32 %v2260, %v2182
          %v2293 = vadd.f32 %v2261, %v2185
          %v2294 = vadd.f32 %v2262, %v2190
          %v2295 = vadd.f32 %v2263, %v2193
          %v2296 = vadd.f32 %v2264, %v2198
          %v2297 = vadd.f32 %v2265, %v2201
          %v2298 = vadd.f32 %v2266, %v2206
          %v2299 = vadd.f32 %v2267, %v2209
          %v2300 = vadd.f32 %v2268, %v2214
          %v2301 = vadd.f32 %v2269, %v2217
          %v2302 = vadd.f32 %v2270, %v2222
          %v2303 = vadd.f32 %v2271, %v2225
          %v2304 = vadd.f32 %v2272, %v2230
          %v2305 = vadd.f32 %v2273, %v2233
          %v2306 = vadd.f32 %v2274, %v2238
          %v2307 = vadd.f32 %v2275, %v2241
          %2308 = vst [vmem:[%s283] sm:$0xff] %v2276
          %2309 = vst [vmem:[%s283 + $0x8] sm:$0xff] %v2277
          %2310 = vst [vmem:[%s283 + $0x10] sm:$0xff] %v2278
          %2311 = vst [vmem:[%s283 + $0x18] sm:$0xff] %v2279
          %2312 = vst [vmem:[%s283 + $0x20] sm:$0xff] %v2280
          %2313 = vst [vmem:[%s283 + $0x28] sm:$0xff] %v2281
          %2314 = vst [vmem:[%s283 + $0x30] sm:$0xff] %v2282
          %2315 = vst [vmem:[%s283 + $0x38] sm:$0xff] %v2283
          %2316 = vst [vmem:[%s283 + $0x40] sm:$0xff] %v2284
          %2317 = vst [vmem:[%s283 + $0x48] sm:$0xff] %v2285
          %2318 = vst [vmem:[%s283 + $0x50] sm:$0xff] %v2286
          %2319 = vst [vmem:[%s283 + $0x58] sm:$0xff] %v2287
          %2320 = vst [vmem:[%s283 + $0x60] sm:$0xff] %v2288
          %2321 = vst [vmem:[%s283 + $0x68] sm:$0xff] %v2289
          %2322 = vst [vmem:[%s283 + $0x70] sm:$0xff] %v2290
          %2323 = vst [vmem:[%s283 + $0x78] sm:$0xff] %v2291
          %2324 = vst [vmem:[%s283 + $0x80] sm:$0xff] %v2292
          %2325 = vst [vmem:[%s283 + $0x88] sm:$0xff] %v2293
          %2326 = vst [vmem:[%s283 + $0x90] sm:$0xff] %v2294
          %2327 = vst [vmem:[%s283 + $0x98] sm:$0xff] %v2295
          %2328 = vst [vmem:[%s283 + $0xa0] sm:$0xff] %v2296
          %2329 = vst [vmem:[%s283 + $0xa8] sm:$0xff] %v2297
          %2330 = vst [vmem:[%s283 + $0xb0] sm:$0xff] %v2298
          %2331 = vst [vmem:[%s283 + $0xb8] sm:$0xff] %v2299
          %2332 = vst [vmem:[%s283 + $0xc0] sm:$0xff] %v2300
          %2333 = vst [vmem:[%s283 + $0xc8] sm:$0xff] %v2301
          %2334 = vst [vmem:[%s283 + $0xd0] sm:$0xff] %v2302
          %2335 = vst [vmem:[%s283 + $0xd8] sm:$0xff] %v2303
          %2336 = vst [vmem:[%s283 + $0xe0] sm:$0xff] %v2304
          %2337 = vst [vmem:[%s283 + $0xe8] sm:$0xff] %v2305
          %2338 = vst [vmem:[%s283 + $0xf0] sm:$0xff] %v2306
          %2339 = vst [vmem:[%s283 + $0xf8] sm:$0xff] %v2307
        $region60: #{tpu_custom_call.1} parent=39 // pred_fallthru
          _
        %s2340 = sand.u32 %s153, 1
        %s2341 = scalar_lea.sflag [#allocation8], %s2340
        %s2342 = sand.u32 %s153, 1
        %s2343 = smul.addr %s2342, 256
        %s2344 = scalar_lea.vmem [#allocation12], %s2343
        // Predicated region
        $region61: #{tpu_custom_call.1} parent=39 // pred_check
          %p2345 = pneg %p163
        $region62: #{tpu_custom_call.1} parent=39 // pred_check_branch
          %2347 = sbr.rel (%p2345) target = $region64
        $region63: #{tpu_custom_call.1} parent=39 // pred_region
          %s2349 = ssub.s32 4096, 4096
          %2350 = vsyncadd %s2341, %s2349
          %s2351 = smul.addr %s27, 32
          %s2352 = smul.addr %s2351, 128
          %s2353 = scalar_lea.hbm %s5, %s2352
          %s2354 = sshll.u32 %s2344, 4
          %s2355 = int_to_ptr.vmem [resolvable:$true] %s2354
          %2360 = dma.vmem_to_hbm [thread:$0]  %s2355, 4096, %s2353, %s2341, 128, 128, 8
        $region64: #{tpu_custom_call.1} parent=39 // pred_fallthru
          _
      $region40: #{tpu_custom_call.1} parent=5 // pred_fallthru
        _
      %p2361 = scmp.le.s32.totalorder 2, %s18
      // Predicated region
      $region65: #{tpu_custom_call.1} parent=5 // pred_check
        %p2362 = pneg %p2361
      $region66: #{tpu_custom_call.1} parent=5 // pred_check_branch
        %2364 = sbr.rel (%p2362) target = $region68
      $region67: #{tpu_custom_call.1} parent=5 // pred_region
        %s2365 = ssub.s32 %s18, 2
        // Predicated region
        $region69: #{tpu_custom_call.1} parent=67 // pred_check
          %p2366 = pneg %p169
        $region70: #{tpu_custom_call.1} parent=67 // pred_check_branch
          %2368 = sbr.rel (%p2366) target = $region72
        $region71: #{tpu_custom_call.1} parent=67 // pred_region
          %s2369 = sand.u32 %s154, 1
          %s2370 = scalar_lea.sflag [#allocation8], %s2369
          %s2371 = sand.u32 %s154, 1
          %s2372 = smul.addr %s2371, 256
          %s2373 = scalar_lea.vmem [#allocation12], %s2372
          %2374 = dma.done %s2370, 4096
        $region72: #{tpu_custom_call.1} parent=67 // pred_fallthru
          _
      $region68: #{tpu_custom_call.1} parent=5 // pred_fallthru
        _
    $region6: #{tpu_custom_call.1} parent=1 // loop_footer
      %s22 = sadd.s32 1, %s18
    $region7: #{tpu_custom_call.1} parent=1 // loop_footer_branch
      %17 = sbr.rel target = $region3
    $region8: #{tpu_custom_call.1} parent=1 // loop_exit
      _
    %2375 = vsyncpa [#allocation7], 1
    %s2376 = scalar_lea.sflag [#allocation7], 1
    %2377 = vsyncpa %s2376, 1
    %2378 = vsyncpa [#allocation10], 1
    %2379 = vsyncpa [#allocation8], 1
    %s2380 = scalar_lea.sflag [#allocation8], 1
    %2381 = vsyncpa %s2380, 1

// kernel: tpu_custom_call.1
$region0: #{tpu_custom_call.1}
  #allocation0 [shape = 'u32[]', space=smem, size = 0x4, offset = 0x4, fixed_abs, tag = 'smem constant byte address 0x4 - core index']
  #allocation1 [shape = 'u32[144,128]{1,0:T(1,128)}', space=vmem, size = 0x12000, scoped, tag = 'internal scratch']
  #allocation2 [shape = 'bf16[256,128]{1,0:T(16,128)(2,1)}', space=vmem, size = 0x10000, scoped, tag = 'scratch operand']
  #allocation3 [shape = 'bf16[256,128]{1,0:T(16,128)(2,1)}', space=vmem, size = 0x10000, scoped, tag = 'scratch operand']
  #allocation4 [shape = 'bf16[256,128]{1,0:T(16,128)(2,1)}', space=vmem, size = 0x10000, scoped, tag = 'scratch operand']
  #allocation5 [shape = 'f32[256,128]{1,0:T(8,128)}', space=vmem, size = 0x20000, scoped, tag = 'scratch operand']
  %s0 = inlined_call_operand.hbm [shape: f32[2,256,128], index: 0, kind: input, shape index: {}]
  %s1 = inlined_call_operand.hbm [shape: bf16[128,384], index: 1, kind: input, shape index: {}]
  %s2 = inlined_call_operand.vmem [shape: f32[1,384], index: 2, kind: input, shape index: {}]
  %s3 = inlined_call_operand.hbm [shape: bf16[128,128], index: 3, kind: input, shape index: {}]
  %s4 = inlined_call_operand.vmem [shape: f32[1,128], index: 4, kind: input, shape index: {}]
  %s5 = inlined_call_operand.hbm [shape: f32[2,256,128], index: 5, kind: output, shape index: {}]
  %s6 = sld [smem:[#allocation0]]
  $region73: #{tpu_custom_call.1} parent=0
    _
  %s8 = ssub.s32 1, %s6
  %s9 = scalar_select 0, %s8, %s6
  $region1: #{tpu_custom_call.1} parent=0
    #allocation6 [shape = 'u8[262144]{0}', space=vmem, size = 0x40000, scoped, tag = 'input window, operand 0']
    #allocation7 [shape = 's32[2]{0}', space=sflag, size = 0x8, scoped, tag = 'scoped memory for tpu_custom_call.1']
    #allocation8 [shape = 's32[2]{0}', space=sflag, size = 0x8, scoped, tag = 'scoped memory for tpu_custom_call.1']
    #allocation9 [shape = 'u8[98304]{0}', space=vmem, size = 0x18000, scoped, tag = 'input window, operand 1, single buffered']
    #allocation10 [shape = 's32[1]{0}', space=sflag, size = 0x4, scoped, tag = 'scoped memory for tpu_custom_call.1']
    #allocation11 [shape = 'u8[32768]{0}', space=vmem, size = 0x8000, scoped, tag = 'input window, operand 3, single buffered']
    #allocation12 [shape = 'u8[262144]{0}', space=vmem, size = 0x40000, scoped, tag = 'output window, operand 0']
    %10 = vsyncpa [#allocation7], 0
    %s11 = scalar_lea.sflag [#allocation7], 1
    %12 = vsyncpa %s11, 0
    %13 = vsyncpa [#allocation10], 0
    %14 = vsyncpa [#allocation8], 0
    %s15 = scalar_lea.sflag [#allocation8], 1
    %16 = vsyncpa %s15, 0
    loop: start=0, step=1, limit=6
    $region2: #{tpu_custom_call.1} parent=1 // loop_pre_header
      _
    $region3: #{tpu_custom_call.1} parent=1 // loop_header
      %s18 = sphi 0, %s22
      %p19 = scmp.ge.s32.totalorder %s18, 6
      %s25 = sphi 0, %s37
      %s26 = sphi 0, %s33
      %s27 = sphi 0, %s25
      %s28 = sphi 0, %s26
      %s29 = sphi 0, %s27
      %s30 = sphi 0, %s28
      %s40 = sphi 0, %s42
      %s43 = sphi 0, %s40
      %s44 = sphi 0, %s43
      %s60 = sphi 0, %s44
      %s64 = sphi 0, %s64
      %s66 = sphi 0, %s64
      %s67 = sphi 0, %s66
      %s81 = sphi 0, %s67
      %s85 = sphi 0, %s85
      %s87 = sphi 0, %s85
      %s88 = sphi 0, %s87
      %s102 = sphi 0, %s88
      %s106 = sphi 0, %s106
      %s108 = sphi 0, %s106
      %s109 = sphi 0, %s108
      %s123 = sphi 0, %s109
      %s127 = sphi 0, %s127
      %s129 = sphi 0, %s127
      %s130 = sphi 0, %s129
      %s144 = sphi 0, %s130
      %s150 = sphi 0, %s152
      %s153 = sphi 0, %s150
      %s154 = sphi 0, %s153
      %s170 = sphi 0, %s154
    $region4: #{tpu_custom_call.1} parent=1 // loop_header_branch
      %21 = sbr.rel (%p19) target = $region8
    $region5: #{tpu_custom_call.1} parent=1 // loop_body
      %s23 = ssub.s32 %s18, 1
      %s24 = ssub.s32 %s18, 2
      %s31 = sadd.s32 1, %s26
      %p32 = scmp.ge.s32.totalorder %s31, 2
      %s33 = scalar_select %p32, 0, %s31
      %s34 = sadd.s32 1, %s25
      %s35 = scalar_select %p32, %s34, %s25
      %p36 = scmp.ge.s32.totalorder %s35, 2
      %s37 = scalar_select %p36, 0, %s35
      %s38 = ssub.s32 %s25, %s37
      %p39 = scmp.eq.s32.totalorder %s38, 0
      %s41 = sadd.s32 %s40, 1
      %s42 = scalar_select %p39, %s40, %s41
      %p45 = pneg %p39
      %p46 = scmp.eq.s32.totalorder %s18, 3
      %p47 = por %p45, %p46
      %p48 = scmp.ne.s32.totalorder %s40, %s43
      %p49 = scmp.eq.s32.totalorder %s18, 0
      %p50 = por %p48, %p49
      %p51 = scmp.ne.s32.totalorder %s40, %s43
      %p52 = scmp.eq.s32.totalorder %s23, 3
      %p53 = por %p51, %p52
      %p54 = scmp.ne.s32.totalorder %s43, %s44
      %p55 = scmp.eq.s32.totalorder %s23, 0
      %p56 = por %p54, %p55
      %p57 = scmp.ne.s32.totalorder %s43, %s44
      %p58 = scmp.eq.s32.totalorder %s24, 3
      %p59 = por %p57, %p58
      %p61 = scmp.ne.s32.totalorder %s44, %s60
      %p62 = scmp.eq.s32.totalorder %s24, 0
      %p63 = por %p61, %p62
      %s65 = sadd.s32 %s64, 1
      %p68 = scmp.eq.s32.totalorder %s18, 3
      %p69 = scmp.ne.s32.totalorder %s64, %s66
      %p70 = scmp.eq.s32.totalorder %s18, 0
      %p71 = por %p69, %p70
      %p72 = scmp.ne.s32.totalorder %s64, %s66
      %p73 = scmp.eq.s32.totalorder %s23, 3
      %p74 = por %p72, %p73
      %p75 = scmp.ne.s32.totalorder %s66, %s67
      %p76 = scmp.eq.s32.totalorder %s23, 0
      %p77 = por %p75, %p76
      %p78 = scmp.ne.s32.totalorder %s66, %s67
      %p79 = scmp.eq.s32.totalorder %s24, 3
      %p80 = por %p78, %p79
      %p82 = scmp.ne.s32.totalorder %s67, %s81
      %p83 = scmp.eq.s32.totalorder %s24, 0
      %p84 = por %p82, %p83
      %s86 = sadd.s32 %s85, 1
      %p89 = scmp.eq.s32.totalorder %s18, 3
      %p90 = scmp.ne.s32.totalorder %s85, %s87
      %p91 = scmp.eq.s32.totalorder %s18, 0
      %p92 = por %p90, %p91
      %p93 = scmp.ne.s32.totalorder %s85, %s87
      %p94 = scmp.eq.s32.totalorder %s23, 3
      %p95 = por %p93, %p94
      %p96 = scmp.ne.s32.totalorder %s87, %s88
      %p97 = scmp.eq.s32.totalorder %s23, 0
      %p98 = por %p96, %p97
      %p99 = scmp.ne.s32.totalorder %s87, %s88
      %p100 = scmp.eq.s32.totalorder %s24, 3
      %p101 = por %p99, %p100
      %p103 = scmp.ne.s32.totalorder %s88, %s102
      %p104 = scmp.eq.s32.totalorder %s24, 0
      %p105 = por %p103, %p104
      %s107 = sadd.s32 %s106, 1
      %p110 = scmp.eq.s32.totalorder %s18, 3
      %p111 = scmp.ne.s32.totalorder %s106, %s108
      %p112 = scmp.eq.s32.totalorder %s18, 0
      %p113 = por %p111, %p112
      %p114 = scmp.ne.s32.totalorder %s106, %s108
      %p115 = scmp.eq.s32.totalorder %s23, 3
      %p116 = por %p114, %p115
      %p117 = scmp.ne.s32.totalorder %s108, %s109
      %p118 = scmp.eq.s32.totalorder %s23, 0
      %p119 = por %p117, %p118
      %p120 = scmp.ne.s32.totalorder %s108, %s109
      %p121 = scmp.eq.s32.totalorder %s24, 3
      %p122 = por %p120, %p121
      %p124 = scmp.ne.s32.totalorder %s109, %s123
      %p125 = scmp.eq.s32.totalorder %s24, 0
      %p126 = por %p124, %p125
      %s128 = sadd.s32 %s127, 1
      %p131 = scmp.eq.s32.totalorder %s18, 3
      %p132 = scmp.ne.s32.totalorder %s127, %s129
      %p133 = scmp.eq.s32.totalorder %s18, 0
      %p134 = por %p132, %p133
      %p135 = scmp.ne.s32.totalorder %s127, %s129
      %p136 = scmp.eq.s32.totalorder %s23, 3
      %p137 = por %p135, %p136
      %p138 = scmp.ne.s32.totalorder %s129, %s130
      %p139 = scmp.eq.s32.totalorder %s23, 0
      %p140 = por %p138, %p139
      %p141 = scmp.ne.s32.totalorder %s129, %s130
      %p142 = scmp.eq.s32.totalorder %s24, 3
      %p143 = por %p141, %p142
      %p145 = scmp.ne.s32.totalorder %s130, %s144
      %p146 = scmp.eq.s32.totalorder %s24, 0
      %p147 = por %p145, %p146
      %s148 = ssub.s32 %s25, %s37
      %p149 = scmp.eq.s32.totalorder %s148, 0
      %s151 = sadd.s32 %s150, 1
      %s152 = scalar_select %p149, %s150, %s151
      %p155 = pneg %p149
      %p156 = scmp.eq.s32.totalorder %s18, 3
      %p157 = por %p155, %p156
      %p158 = scmp.ne.s32.totalorder %s150, %s153
      %p159 = scmp.eq.s32.totalorder %s18, 0
      %p160 = por %p158, %p159
      %p161 = scmp.ne.s32.totalorder %s150, %s153
      %p162 = scmp.eq.s32.totalorder %s23, 3
      %p163 = por %p161, %p162
      %p164 = scmp.ne.s32.totalorder %s153, %s154
      %p165 = scmp.eq.s32.totalorder %s23, 0
      %p166 = por %p164, %p165
      %p167 = scmp.ne.s32.totalorder %s153, %s154
      %p168 = scmp.eq.s32.totalorder %s24, 3
      %p169 = por %p167, %p168
      %p171 = scmp.ne.s32.totalorder %s154, %s170
      %p172 = scmp.eq.s32.totalorder %s24, 0
      %p173 = por %p171, %p172
      %p174 = scmp.le.s32.totalorder 1, %s18
      %p175 = scmp.lt.s32.totalorder %s18, 5
      %p176 = pnand %p174, %p175
      %p177 = pneg %p176
      // Predicated region
      $region9: #{tpu_custom_call.1} parent=5 // pred_check
        _
      $region10: #{tpu_custom_call.1} parent=5 // pred_check_branch
        %179 = sbr.rel (%p176) target = $region12
      $region11: #{tpu_custom_call.1} parent=5 // pred_region
        %s180 = ssub.s32 %s18, 1
        // Predicated region
        $region13: #{tpu_custom_call.1} parent=11 // pred_check
          %p181 = pneg %p77
        $region14: #{tpu_custom_call.1} parent=11 // pred_check_branch
          %183 = sbr.rel (%p181) target = $region16
        $region15: #{tpu_custom_call.1} parent=11 // pred_region
          %s185 = ssub.s32 3072, 3072
          %186 = vsyncadd [#allocation10], %s185
          %s187 = sshll.u32 [#allocation9], 4
          %s188 = int_to_ptr.vmem [resolvable:$true] %s187
          %193 = dma.hbm_to_vmem [thread:$0]  %s1, 3072, %s188, [#allocation10], 192, 192, 12
        $region16: #{tpu_custom_call.1} parent=11 // pred_fallthru
          _
        // Predicated region
        $region17: #{tpu_custom_call.1} parent=11 // pred_check
          %p194 = pneg %p98
        $region18: #{tpu_custom_call.1} parent=11 // pred_check_branch
          %196 = sbr.rel (%p194) target = $region20
        $region19: #{tpu_custom_call.1} parent=11 // pred_region
          _
        $region20: #{tpu_custom_call.1} parent=11 // pred_fallthru
          _
        // Predicated region
        $region21: #{tpu_custom_call.1} parent=11 // pred_check
          %p197 = pneg %p119
        $region22: #{tpu_custom_call.1} parent=11 // pred_check_branch
          %199 = sbr.rel (%p197) target = $region24
        $region23: #{tpu_custom_call.1} parent=11 // pred_region
          %s201 = ssub.s32 1024, 1024
          %202 = vsyncadd [#allocation10], %s201
          %s203 = sshll.u32 [#allocation11], 4
          %s204 = int_to_ptr.vmem [resolvable:$true] %s203
          %209 = dma.hbm_to_vmem [thread:$0]  %s3, 1024, %s204, [#allocation10], 64, 64, 4
        $region24: #{tpu_custom_call.1} parent=11 // pred_fallthru
          _
        // Predicated region
        $region25: #{tpu_custom_call.1} parent=11 // pred_check
          %p210 = pneg %p140
        $region26: #{tpu_custom_call.1} parent=11 // pred_check_branch
          %212 = sbr.rel (%p210) target = $region28
        $region27: #{tpu_custom_call.1} parent=11 // pred_region
          _
        $region28: #{tpu_custom_call.1} parent=11 // pred_fallthru
          _
      $region12: #{tpu_custom_call.1} parent=5 // pred_fallthru
        _
      %p213 = scmp.lt.s32.totalorder %s18, 4
      // Predicated region
      $region29: #{tpu_custom_call.1} parent=5 // pred_check
        %p214 = pneg %p213
      $region30: #{tpu_custom_call.1} parent=5 // pred_check_branch
        %216 = sbr.rel (%p214) target = $region32
      $region31: #{tpu_custom_call.1} parent=5 // pred_region
        // Predicated region
        $region33: #{tpu_custom_call.1} parent=31 // pred_check
          %p217 = pneg %p50
        $region34: #{tpu_custom_call.1} parent=31 // pred_check_branch
          %219 = sbr.rel (%p217) target = $region36
        $region35: #{tpu_custom_call.1} parent=31 // pred_region
          %s220 = sand.u32 %s40, 1
          %s221 = scalar_lea.sflag [#allocation7], %s220
          %s222 = sand.u32 %s40, 1
          %s223 = smul.addr %s222, 256
          %s224 = scalar_lea.vmem [#allocation6], %s223
          %s226 = ssub.s32 4096, 4096
          %227 = vsyncadd %s221, %s226
          %s228 = smul.addr %s25, 32
          %s229 = smul.addr %s228, 128
          %s230 = scalar_lea.hbm %s0, %s229
          %s231 = sshll.u32 %s224, 4
          %s232 = int_to_ptr.vmem [resolvable:$true] %s231
          %237 = dma.hbm_to_vmem [thread:$0]  %s230, 4096, %s232, %s221, 128, 128, 8
        $region36: #{tpu_custom_call.1} parent=31 // pred_fallthru
          _
      $region32: #{tpu_custom_call.1} parent=5 // pred_fallthru
        _
      %p238 = scmp.le.s32.totalorder 1, %s18
      %p239 = scmp.lt.s32.totalorder %s18, 5
      %p240 = pnand %p238, %p239
      %p241 = pneg %p240
      // Predicated region
      $region37: #{tpu_custom_call.1} parent=5 // pred_check
        _
      $region38: #{tpu_custom_call.1} parent=5 // pred_check_branch
        %243 = sbr.rel (%p240) target = $region40
      $region39: #{tpu_custom_call.1} parent=5 // pred_region
        %s244 = ssub.s32 %s18, 1
        %s245 = sand.u32 %s43, 1
        %s246 = scalar_lea.sflag [#allocation7], %s245
        %s247 = sand.u32 %s43, 1
        %s248 = smul.addr %s247, 256
        %s249 = scalar_lea.vmem [#allocation6], %s248
        // Predicated region
        $region41: #{tpu_custom_call.1} parent=39 // pred_check
          %p250 = pneg %p56
        $region42: #{tpu_custom_call.1} parent=39 // pred_check_branch
          %252 = sbr.rel (%p250) target = $region44
        $region43: #{tpu_custom_call.1} parent=39 // pred_region
          %253 = dma.done %s246, 4096
        $region44: #{tpu_custom_call.1} parent=39 // pred_fallthru
          _
        // Predicated region
        $region45: #{tpu_custom_call.1} parent=39 // pred_check
          %p254 = pneg %p77
        $region46: #{tpu_custom_call.1} parent=39 // pred_check_branch
          %256 = sbr.rel (%p254) target = $region48
        $region47: #{tpu_custom_call.1} parent=39 // pred_region
          %257 = dma.done [#allocation10], 3072
        $region48: #{tpu_custom_call.1} parent=39 // pred_fallthru
          _
        // Predicated region
        $region49: #{tpu_custom_call.1} parent=39 // pred_check
          %p258 = pneg %p119
        $region50: #{tpu_custom_call.1} parent=39 // pred_check_branch
          %260 = sbr.rel (%p258) target = $region52
        $region51: #{tpu_custom_call.1} parent=39 // pred_region
          %261 = dma.done [#allocation10], 1024
        $region52: #{tpu_custom_call.1} parent=39 // pred_fallthru
          _
        %s262 = sand.u32 %s43, 1
        %s263 = scalar_lea.sflag [#allocation7], %s262
        %s264 = sand.u32 %s43, 1
        %s265 = smul.addr %s264, 256
        %s266 = scalar_lea.vmem [#allocation6], %s265
        %p267 = pneg %p56
        %p268 = pneg %p53
        %p269 = pneg %p77
        %p270 = pneg %p74
        %p271 = pneg %p98
        %p272 = pneg %p95
        %p273 = pneg %p119
        %p274 = pneg %p116
        %p275 = pneg %p140
        %p276 = pneg %p137
        %p277 = pneg %p166
        %p278 = pneg %p163
        %s279 = sand.u32 %s153, 1
        %s280 = scalar_lea.sflag [#allocation8], %s279
        %s281 = sand.u32 %s153, 1
        %s282 = smul.addr %s281, 256
        %s283 = scalar_lea.vmem [#allocation12], %s282
        %p285 = scmp.eq.s32.totalorder %s28, 0
        // Predicated region
        $region53: #{tpu_custom_call.1} parent=39 // pred_check
          %p286 = pneg %p285
        $region54: #{tpu_custom_call.1} parent=39 // pred_check_branch
          %288 = sbr.rel (%p286) target = $region56
        $region55: #{tpu_custom_call.1} parent=39 // pred_region
          %v289 = vld [vmem:[%s249] sm:$0xff]
          %v290 = vld [vmem:[%s249 + $0x8] sm:$0xff]
          %v291 = vld [vmem:[%s249 + $0x10] sm:$0xff]
          %v292 = vld [vmem:[%s249 + $0x18] sm:$0xff]
          %v293 = vld [vmem:[%s249 + $0x20] sm:$0xff]
          %v294 = vld [vmem:[%s249 + $0x28] sm:$0xff]
          %v295 = vld [vmem:[%s249 + $0x30] sm:$0xff]
          %v296 = vld [vmem:[%s249 + $0x38] sm:$0xff]
          %v297 = vld [vmem:[%s249 + $0x40] sm:$0xff]
          %v298 = vld [vmem:[%s249 + $0x48] sm:$0xff]
          %v299 = vld [vmem:[%s249 + $0x50] sm:$0xff]
          %v300 = vld [vmem:[%s249 + $0x58] sm:$0xff]
          %v301 = vld [vmem:[%s249 + $0x60] sm:$0xff]
          %v302 = vld [vmem:[%s249 + $0x68] sm:$0xff]
          %v303 = vld [vmem:[%s249 + $0x70] sm:$0xff]
          %v304 = vld [vmem:[%s249 + $0x78] sm:$0xff]
          %v305 = vld [vmem:[%s249 + $0x80] sm:$0xff]
          %v306 = vld [vmem:[%s249 + $0x88] sm:$0xff]
          %v307 = vld [vmem:[%s249 + $0x90] sm:$0xff]
          %v308 = vld [vmem:[%s249 + $0x98] sm:$0xff]
          %v309 = vld [vmem:[%s249 + $0xa0] sm:$0xff]
          %v310 = vld [vmem:[%s249 + $0xa8] sm:$0xff]
          %v311 = vld [vmem:[%s249 + $0xb0] sm:$0xff]
          %v312 = vld [vmem:[%s249 + $0xb8] sm:$0xff]
          %v313 = vld [vmem:[%s249 + $0xc0] sm:$0xff]
          %v314 = vld [vmem:[%s249 + $0xc8] sm:$0xff]
          %v315 = vld [vmem:[%s249 + $0xd0] sm:$0xff]
          %v316 = vld [vmem:[%s249 + $0xd8] sm:$0xff]
          %v317 = vld [vmem:[%s249 + $0xe0] sm:$0xff]
          %v318 = vld [vmem:[%s249 + $0xe8] sm:$0xff]
          %v319 = vld [vmem:[%s249 + $0xf0] sm:$0xff]
          %v320 = vld [vmem:[%s249 + $0xf8] sm:$0xff]
          %v321 = vpack.c.bf16 %v290, %v289
          %v322 = vpack.c.bf16 %v292, %v291
          %v323 = vpack.c.bf16 %v294, %v293
          %v324 = vpack.c.bf16 %v296, %v295
          %v325 = vpack.c.bf16 %v298, %v297
          %v326 = vpack.c.bf16 %v300, %v299
          %v327 = vpack.c.bf16 %v302, %v301
          %v328 = vpack.c.bf16 %v304, %v303
          %v329 = vpack.c.bf16 %v306, %v305
          %v330 = vpack.c.bf16 %v308, %v307
          %v331 = vpack.c.bf16 %v310, %v309
          %v332 = vpack.c.bf16 %v312, %v311
          %v333 = vpack.c.bf16 %v314, %v313
          %v334 = vpack.c.bf16 %v316, %v315
          %v335 = vpack.c.bf16 %v318, %v317
          %v336 = vpack.c.bf16 %v320, %v319
          %v337 = vld [vmem:[#allocation9] sm:$0xf]
          %v338 = vld [vmem:[#allocation9 + $0xc] sm:$0xf]
          %v339 = vld [vmem:[#allocation9 + $0x18] sm:$0xf]
          %v340 = vld [vmem:[#allocation9 + $0x24] sm:$0xf]
          %v341 = vld [vmem:[#allocation9 + $0x30] sm:$0xf]
          %v342 = vld [vmem:[#allocation9 + $0x3c] sm:$0xf]
          %v343 = vld [vmem:[#allocation9 + $0x48] sm:$0xf]
          %v344 = vld [vmem:[#allocation9 + $0x54] sm:$0xf]
          %v345 = vld [vmem:[#allocation9 + $0x60] sm:$0xf]
          %v346 = vld [vmem:[#allocation9 + $0x6c] sm:$0xf]
          %v347 = vld [vmem:[#allocation9 + $0x78] sm:$0xf]
          %v348 = vld [vmem:[#allocation9 + $0x84] sm:$0xf]
          %v349 = vld [vmem:[#allocation9 + $0x90] sm:$0xf]
          %v350 = vld [vmem:[#allocation9 + $0x9c] sm:$0xf]
          %v351 = vld [vmem:[#allocation9 + $0xa8] sm:$0xf]
          %v352 = vld [vmem:[#allocation9 + $0xb4] sm:$0xf]
          %v353 = vld [vmem:[%s2] sm:$0x1]
          %v355 = vlaneseq
          %v356 = vshrl.u32 %v355, 7
          %v357 = vsub.s32 0, %v356
          %v358 = vrot.slane %v353, %v357
          %v376 = vunpack.c.l.b16 %v337
          %v377 = vunpack.c.l.b16 %v338
          %v378 = vunpack.c.l.b16 %v339
          %v379 = vunpack.c.l.b16 %v340
          %v380 = vunpack.c.l.b16 %v341
          %v381 = vunpack.c.l.b16 %v342
          %v382 = vunpack.c.l.b16 %v343
          %v383 = vunpack.c.l.b16 %v344
          %v384 = vunpack.c.l.b16 %v345
          %v385 = vunpack.c.l.b16 %v346
          %v386 = vunpack.c.l.b16 %v347
          %v387 = vunpack.c.l.b16 %v348
          %v388 = vunpack.c.l.b16 %v349
          %v389 = vunpack.c.l.b16 %v350
          %v390 = vunpack.c.l.b16 %v351
          %v391 = vunpack.c.l.b16 %v352
          %v392 = vpack.c.b16 %v377, %v376
          %v393 = vpack.c.b16 %v379, %v378
          %v394 = vpack.c.b16 %v381, %v380
          %v395 = vpack.c.b16 %v383, %v382
          %v396 = vpack.c.b16 %v385, %v384
          %v397 = vpack.c.b16 %v387, %v386
          %v398 = vpack.c.b16 %v389, %v388
          %v399 = vpack.c.b16 %v391, %v390
          %408 = vmatprep.subr.bf16.mxu0 0
          %409 = vmatpush1.bf16.msra.mxu0 %v392
          %410 = vmatprep.subr.bf16.mxu0 0
          %411 = vmatpush1.bf16.msra.mxu0 %v393
          %412 = vmatprep.subr.bf16.mxu0 0
          %413 = vmatpush1.bf16.msra.mxu0 %v394
          %414 = vmatprep.subr.bf16.mxu0 0
          %415 = vmatpush1.bf16.msra.mxu0 %v395
          %416 = vmatprep.subr.bf16.mxu0 0
          %417 = vmatpush1.bf16.msra.mxu0 %v396
          %418 = vmatprep.subr.bf16.mxu0 0
          %419 = vmatpush1.bf16.msra.mxu0 %v397
          %420 = vmatprep.subr.bf16.mxu0 0
          %421 = vmatpush1.bf16.msra.mxu0 %v398
          %422 = vmatprep.subr.bf16.mxu0 0
          %423 = vmatpush1.bf16.msra.mxu0 %v399
          %424 = vmatprep.subr.bf16.mxu0 0
          %425 = vmatpush1.bf16.msra.mxu0 0
          %426 = vmatprep.subr.bf16.mxu0 0
          %427 = vmatpush1.bf16.msra.mxu0 0
          %428 = vmatprep.subr.bf16.mxu0 0
          %429 = vmatpush1.bf16.msra.mxu0 0
          %430 = vmatprep.subr.bf16.mxu0 0
          %431 = vmatpush1.bf16.msra.mxu0 0
          %432 = vmatprep.subr.bf16.mxu0 0
          %433 = vmatpush1.bf16.msra.mxu0 0
          %434 = vmatprep.subr.bf16.mxu0 0
          %435 = vmatpush1.bf16.msra.mxu0 0
          %436 = vmatprep.subr.bf16.mxu0 0
          %437 = vmatpush1.bf16.msra.mxu0 0
          %438 = vmatprep.subr.bf16.mxu0 0
          %439 = vmatpush1.bf16.msra.mxu0 0
          %440 = vmatprep.mubr.bf16.mxu0 0
          %441 = vmatmul.mubr.bf16.gmra.mrb[0].mxu0 %v321
          %v442 = vpop.f32.mrb[0].mxu0
          %v443 = vadd.f32 %v358, %v442
          %v444 = vpop.f32.mrb[0].mxu0
          %v445 = vpop.f32.mrb[0].mxu0
          %v446 = vadd.f32 %v358, %v445
          %v447 = vpop.f32.mrb[0].mxu0
          %448 = vmatprep.mubr.bf16.mxu0 0
          %449 = vmatmul.mubr.bf16.gmra.mrb[0].mxu0 %v322
          %v450 = vpop.f32.mrb[0].mxu0
          %v451 = vadd.f32 %v358, %v450
          %v452 = vpop.f32.mrb[0].mxu0
          %v453 = vpop.f32.mrb[0].mxu0
          %v454 = vadd.f32 %v358, %v453
          %v455 = vpop.f32.mrb[0].mxu0
          %456 = vmatprep.mubr.bf16.mxu0 0
          %457 = vmatmul.mubr.bf16.gmra.mrb[0].mxu0 %v323
          %v458 = vpop.f32.mrb[0].mxu0
          %v459 = vadd.f32 %v358, %v458
          %v460 = vpop.f32.mrb[0].mxu0
          %v461 = vpop.f32.mrb[0].mxu0
          %v462 = vadd.f32 %v358, %v461
          %v463 = vpop.f32.mrb[0].mxu0
          %464 = vmatprep.mubr.bf16.mxu0 0
          %465 = vmatmul.mubr.bf16.gmra.mrb[0].mxu0 %v324
          %v466 = vpop.f32.mrb[0].mxu0
          %v467 = vadd.f32 %v358, %v466
          %v468 = vpop.f32.mrb[0].mxu0
          %v469 = vpop.f32.mrb[0].mxu0
          %v470 = vadd.f32 %v358, %v469
          %v471 = vpop.f32.mrb[0].mxu0
          %472 = vmatprep.mubr.bf16.mxu0 0
          %473 = vmatmul.mubr.bf16.gmra.mrb[0].mxu0 %v325
          %v474 = vpop.f32.mrb[0].mxu0
          %v475 = vadd.f32 %v358, %v474
          %v476 = vpop.f32.mrb[0].mxu0
          %v477 = vpop.f32.mrb[0].mxu0
          %v478 = vadd.f32 %v358, %v477
          %v479 = vpop.f32.mrb[0].mxu0
          %480 = vmatprep.mubr.bf16.mxu0 0
          %481 = vmatmul.mubr.bf16.gmra.mrb[0].mxu0 %v326
          %v482 = vpop.f32.mrb[0].mxu0
          %v483 = vadd.f32 %v358, %v482
          %v484 = vpop.f32.mrb[0].mxu0
          %v485 = vpop.f32.mrb[0].mxu0
          %v486 = vadd.f32 %v358, %v485
          %v487 = vpop.f32.mrb[0].mxu0
          %488 = vmatprep.mubr.bf16.mxu0 0
          %489 = vmatmul.mubr.bf16.gmra.mrb[0].mxu0 %v327
          %v490 = vpop.f32.mrb[0].mxu0
          %v491 = vadd.f32 %v358, %v490
          %v492 = vpop.f32.mrb[0].mxu0
          %v493 = vpop.f32.mrb[0].mxu0
          %v494 = vadd.f32 %v358, %v493
          %v495 = vpop.f32.mrb[0].mxu0
          %496 = vmatprep.mubr.bf16.mxu0 0
          %497 = vmatmul.mubr.bf16.gmra.mrb[0].mxu0 %v328
          %v498 = vpop.f32.mrb[0].mxu0
          %v499 = vadd.f32 %v358, %v498
          %v500 = vpop.f32.mrb[0].mxu0
          %v501 = vpop.f32.mrb[0].mxu0
          %v502 = vadd.f32 %v358, %v501
          %v503 = vpop.f32.mrb[0].mxu0
          %504 = vmatprep.mubr.bf16.mxu0 0
          %505 = vmatmul.mubr.bf16.gmra.mrb[0].mxu0 %v329
          %v506 = vpop.f32.mrb[0].mxu0
          %v507 = vadd.f32 %v358, %v506
          %v508 = vpop.f32.mrb[0].mxu0
          %v509 = vpop.f32.mrb[0].mxu0
          %v510 = vadd.f32 %v358, %v509
          %v511 = vpop.f32.mrb[0].mxu0
          %512 = vmatprep.mubr.bf16.mxu0 0
          %513 = vmatmul.mubr.bf16.gmra.mrb[0].mxu0 %v330
          %v514 = vpop.f32.mrb[0].mxu0
          %v515 = vadd.f32 %v358, %v514
          %v516 = vpop.f32.mrb[0].mxu0
          %v517 = vpop.f32.mrb[0].mxu0
          %v518 = vadd.f32 %v358, %v517
          %v519 = vpop.f32.mrb[0].mxu0
          %520 = vmatprep.mubr.bf16.mxu0 0
          %521 = vmatmul.mubr.bf16.gmra.mrb[0].mxu0 %v331
          %v522 = vpop.f32.mrb[0].mxu0
          %v523 = vadd.f32 %v358, %v522
          %v524 = vpop.f32.mrb[0].mxu0
          %v525 = vpop.f32.mrb[0].mxu0
          %v526 = vadd.f32 %v358, %v525
          %v527 = vpop.f32.mrb[0].mxu0
          %528 = vmatprep.mubr.bf16.mxu0 0
          %529 = vmatmul.mubr.bf16.gmra.mrb[0].mxu0 %v332
          %v530 = vpop.f32.mrb[0].mxu0
          %v531 = vadd.f32 %v358, %v530
          %v532 = vpop.f32.mrb[0].mxu0
          %v533 = vpop.f32.mrb[0].mxu0
          %v534 = vadd.f32 %v358, %v533
          %v535 = vpop.f32.mrb[0].mxu0
          %536 = vmatprep.mubr.bf16.mxu0 0
          %537 = vmatmul.mubr.bf16.gmra.mrb[0].mxu0 %v333
          %v538 = vpop.f32.mrb[0].mxu0
          %v539 = vadd.f32 %v358, %v538
          %v540 = vpop.f32.mrb[0].mxu0
          %v541 = vpop.f32.mrb[0].mxu0
          %v542 = vadd.f32 %v358, %v541
          %v543 = vpop.f32.mrb[0].mxu0
          %544 = vmatprep.mubr.bf16.mxu0 0
          %545 = vmatmul.mubr.bf16.gmra.mrb[0].mxu0 %v334
          %v546 = vpop.f32.mrb[0].mxu0
          %v547 = vadd.f32 %v358, %v546
          %v548 = vpop.f32.mrb[0].mxu0
          %v549 = vpop.f32.mrb[0].mxu0
          %v550 = vadd.f32 %v358, %v549
          %v551 = vpop.f32.mrb[0].mxu0
          %552 = vmatprep.mubr.bf16.mxu0 0
          %553 = vmatmul.mubr.bf16.gmra.mrb[0].mxu0 %v335
          %v554 = vpop.f32.mrb[0].mxu0
          %v555 = vadd.f32 %v358, %v554
          %v556 = vpop.f32.mrb[0].mxu0
          %v557 = vpop.f32.mrb[0].mxu0
          %v558 = vadd.f32 %v358, %v557
          %v559 = vpop.f32.mrb[0].mxu0
          %560 = vmatprep.mubr.bf16.mxu0 0
          %561 = vmatmul.mubr.bf16.gmra.mrb[0].mxu0 %v336
          %v562 = vpop.f32.mrb[0].mxu0
          %v563 = vadd.f32 %v358, %v562
          %v564 = vpop.f32.mrb[0].mxu0
          %v565 = vpop.f32.mrb[0].mxu0
          %v566 = vadd.f32 %v358, %v565
          %v567 = vpop.f32.mrb[0].mxu0
          %568 = vdwg.mxu0
          %v569 = vpack.c.bf16 %v446, %v443
          %v570 = vpack.c.bf16 %v454, %v451
          %v571 = vpack.c.bf16 %v462, %v459
          %v572 = vpack.c.bf16 %v470, %v467
          %v573 = vpack.c.bf16 %v478, %v475
          %v574 = vpack.c.bf16 %v486, %v483
          %v575 = vpack.c.bf16 %v494, %v491
          %v576 = vpack.c.bf16 %v502, %v499
          %v577 = vpack.c.bf16 %v510, %v507
          %v578 = vpack.c.bf16 %v518, %v515
          %v579 = vpack.c.bf16 %v526, %v523
          %v580 = vpack.c.bf16 %v534, %v531
          %v581 = vpack.c.bf16 %v542, %v539
          %v582 = vpack.c.bf16 %v550, %v547
          %v583 = vpack.c.bf16 %v558, %v555
          %v584 = vpack.c.bf16 %v566, %v563
          %585 = vst [vmem:[#allocation2] sm:$0xff] %v569
          %586 = vst [vmem:[#allocation2 + $0x8] sm:$0xff] %v570
          %587 = vst [vmem:[#allocation2 + $0x10] sm:$0xff] %v571
          %588 = vst [vmem:[#allocation2 + $0x18] sm:$0xff] %v572
          %589 = vst [vmem:[#allocation2 + $0x20] sm:$0xff] %v573
          %590 = vst [vmem:[#allocation2 + $0x28] sm:$0xff] %v574
          %591 = vst [vmem:[#allocation2 + $0x30] sm:$0xff] %v575
          %592 = vst [vmem:[#allocation2 + $0x38] sm:$0xff] %v576
          %593 = vst [vmem:[#allocation2 + $0x40] sm:$0xff] %v577
          %594 = vst [vmem:[#allocation2 + $0x48] sm:$0xff] %v578
          %595 = vst [vmem:[#allocation2 + $0x50] sm:$0xff] %v579
          %596 = vst [vmem:[#allocation2 + $0x58] sm:$0xff] %v580
          %597 = vst [vmem:[#allocation2 + $0x60] sm:$0xff] %v581
          %598 = vst [vmem:[#allocation2 + $0x68] sm:$0xff] %v582
          %599 = vst [vmem:[#allocation2 + $0x70] sm:$0xff] %v583
          %600 = vst [vmem:[#allocation2 + $0x78] sm:$0xff] %v584
          %v601 = vld [vmem:[#allocation9 + $0x4] sm:$0xf]
          %v602 = vld [vmem:[#allocation9 + $0x10] sm:$0xf]
          %v603 = vld [vmem:[#allocation9 + $0x1c] sm:$0xf]
          %v604 = vld [vmem:[#allocation9 + $0x28] sm:$0xf]
          %v605 = vld [vmem:[#allocation9 + $0x34] sm:$0xf]
          %v606 = vld [vmem:[#allocation9 + $0x40] sm:$0xf]
          %v607 = vld [vmem:[#allocation9 + $0x4c] sm:$0xf]
          %v608 = vld [vmem:[#allocation9 + $0x58] sm:$0xf]
          %v609 = vld [vmem:[#allocation9 + $0x64] sm:$0xf]
          %v610 = vld [vmem:[#allocation9 + $0x70] sm:$0xf]
          %v611 = vld [vmem:[#allocation9 + $0x7c] sm:$0xf]
          %v612 = vld [vmem:[#allocation9 + $0x88] sm:$0xf]
          %v613 = vld [vmem:[#allocation9 + $0x94] sm:$0xf]
          %v614 = vld [vmem:[#allocation9 + $0xa0] sm:$0xf]
          %v615 = vld [vmem:[#allocation9 + $0xac] sm:$0xf]
          %v616 = vld [vmem:[#allocation9 + $0xb8] sm:$0xf]
          %v617 = vld [vmem:[%s2 + $0x1] sm:$0x1]
          %v619 = vlaneseq
          %v620 = vshrl.u32 %v619, 7
          %v621 = vsub.s32 0, %v620
          %v622 = vrot.slane %v617, %v621
          %v640 = vunpack.c.l.b16 %v601
          %v641 = vunpack.c.l.b16 %v602
          %v642 = vunpack.c.l.b16 %v603
          %v643 = vunpack.c.l.b16 %v604
          %v644 = vunpack.c.l.b16 %v605
          %v645 = vunpack.c.l.b16 %v606
          %v646 = vunpack.c.l.b16 %v607
          %v647 = vunpack.c.l.b16 %v608
          %v648 = vunpack.c.l.b16 %v609
          %v649 = vunpack.c.l.b16 %v610
          %v650 = vunpack.c.l.b16 %v611
          %v651 = vunpack.c.l.b16 %v612
          %v652 = vunpack.c.l.b16 %v613
          %v653 = vunpack.c.l.b16 %v614
          %v654 = vunpack.c.l.b16 %v615
          %v655 = vunpack.c.l.b16 %v616
          %v656 = vpack.c.b16 %v641, %v640
          %v657 = vpack.c.b16 %v643, %v642
          %v658 = vpack.c.b16 %v645, %v644
          %v659 = vpack.c.b16 %v647, %v646
          %v660 = vpack.c.b16 %v649, %v648
          %v661 = vpack.c.b16 %v651, %v650
          %v662 = vpack.c.b16 %v653, %v652
          %v663 = vpack.c.b16 %v655, %v654
          %672 = vmatprep.subr.bf16.mxu0 0
          %673 = vmatpush1.bf16.msra.mxu0 %v656
          %674 = vmatprep.subr.bf16.mxu0 0
          %675 = vmatpush1.bf16.msra.mxu0 %v657
          %676 = vmatprep.subr.bf16.mxu0 0
          %677 = vmatpush1.bf16.msra.mxu0 %v658
          %678 = vmatprep.subr.bf16.mxu0 0
          %679 = vmatpush1.bf16.msra.mxu0 %v659
          %680 = vmatprep.subr.bf16.mxu0 0
          %681 = vmatpush1.bf16.msra.mxu0 %v660
          %682 = vmatprep.subr.bf16.mxu0 0
          %683 = vmatpush1.bf16.msra.mxu0 %v661
          %684 = vmatprep.subr.bf16.mxu0 0
          %685 = vmatpush1.bf16.msra.mxu0 %v662
          %686 = vmatprep.subr.bf16.mxu0 0
          %687 = vmatpush1.bf16.msra.mxu0 %v663
          %688 = vmatprep.subr.bf16.mxu0 0
          %689 = vmatpush1.bf16.msra.mxu0 0
          %690 = vmatprep.subr.bf16.mxu0 0
          %691 = vmatpush1.bf16.msra.mxu0 0
          %692 = vmatprep.subr.bf16.mxu0 0
          %693 = vmatpush1.bf16.msra.mxu0 0
          %694 = vmatprep.subr.bf16.mxu0 0
          %695 = vmatpush1.bf16.msra.mxu0 0
          %696 = vmatprep.subr.bf16.mxu0 0
          %697 = vmatpush1.bf16.msra.mxu0 0
          %698 = vmatprep.subr.bf16.mxu0 0
          %699 = vmatpush1.bf16.msra.mxu0 0
          %700 = vmatprep.subr.bf16.mxu0 0
          %701 = vmatpush1.bf16.msra.mxu0 0
          %702 = vmatprep.subr.bf16.mxu0 0
          %703 = vmatpush1.bf16.msra.mxu0 0
          %704 = vmatprep.mubr.bf16.mxu0 0
          %705 = vmatmul.mubr.bf16.gmra.mrb[0].mxu0 %v321
          %v706 = vpop.f32.mrb[0].mxu0
          %v707 = vadd.f32 %v622, %v706
          %v708 = vpop.f32.mrb[0].mxu0
          %v709 = vpop.f32.mrb[0].mxu0
          %v710 = vadd.f32 %v622, %v709
          %v711 = vpop.f32.mrb[0].mxu0
          %712 = vmatprep.mubr.bf16.mxu0 0
          %713 = vmatmul.mubr.bf16.gmra.mrb[0].mxu0 %v322
          %v714 = vpop.f32.mrb[0].mxu0
          %v715 = vadd.f32 %v622, %v714
          %v716 = vpop.f32.mrb[0].mxu0
          %v717 = vpop.f32.mrb[0].mxu0
          %v718 = vadd.f32 %v622, %v717
          %v719 = vpop.f32.mrb[0].mxu0
          %720 = vmatprep.mubr.bf16.mxu0 0
          %721 = vmatmul.mubr.bf16.gmra.mrb[0].mxu0 %v323
          %v722 = vpop.f32.mrb[0].mxu0
          %v723 = vadd.f32 %v622, %v722
          %v724 = vpop.f32.mrb[0].mxu0
          %v725 = vpop.f32.mrb[0].mxu0
          %v726 = vadd.f32 %v622, %v725
          %v727 = vpop.f32.mrb[0].mxu0
          %728 = vmatprep.mubr.bf16.mxu0 0
          %729 = vmatmul.mubr.bf16.gmra.mrb[0].mxu0 %v324
          %v730 = vpop.f32.mrb[0].mxu0
          %v731 = vadd.f32 %v622, %v730
          %v732 = vpop.f32.mrb[0].mxu0
          %v733 = vpop.f32.mrb[0].mxu0
          %v734 = vadd.f32 %v622, %v733
          %v735 = vpop.f32.mrb[0].mxu0
          %736 = vmatprep.mubr.bf16.mxu0 0
          %737 = vmatmul.mubr.bf16.gmra.mrb[0].mxu0 %v325
          %v738 = vpop.f32.mrb[0].mxu0
          %v739 = vadd.f32 %v622, %v738
          %v740 = vpop.f32.mrb[0].mxu0
          %v741 = vpop.f32.mrb[0].mxu0
          %v742 = vadd.f32 %v622, %v741
          %v743 = vpop.f32.mrb[0].mxu0
          %744 = vmatprep.mubr.bf16.mxu0 0
          %745 = vmatmul.mubr.bf16.gmra.mrb[0].mxu0 %v326
          %v746 = vpop.f32.mrb[0].mxu0
          %v747 = vadd.f32 %v622, %v746
          %v748 = vpop.f32.mrb[0].mxu0
          %v749 = vpop.f32.mrb[0].mxu0
          %v750 = vadd.f32 %v622, %v749
          %v751 = vpop.f32.mrb[0].mxu0
          %752 = vmatprep.mubr.bf16.mxu0 0
          %753 = vmatmul.mubr.bf16.gmra.mrb[0].mxu0 %v327
          %v754 = vpop.f32.mrb[0].mxu0
          %v755 = vadd.f32 %v622, %v754
          %v756 = vpop.f32.mrb[0].mxu0
          %v757 = vpop.f32.mrb[0].mxu0
          %v758 = vadd.f32 %v622, %v757
          %v759 = vpop.f32.mrb[0].mxu0
          %760 = vmatprep.mubr.bf16.mxu0 0
          %761 = vmatmul.mubr.bf16.gmra.mrb[0].mxu0 %v328
          %v762 = vpop.f32.mrb[0].mxu0
          %v763 = vadd.f32 %v622, %v762
          %v764 = vpop.f32.mrb[0].mxu0
          %v765 = vpop.f32.mrb[0].mxu0
          %v766 = vadd.f32 %v622, %v765
          %v767 = vpop.f32.mrb[0].mxu0
          %768 = vmatprep.mubr.bf16.mxu0 0
          %769 = vmatmul.mubr.bf16.gmra.mrb[0].mxu0 %v329
          %v770 = vpop.f32.mrb[0].mxu0
          %v771 = vadd.f32 %v622, %v770
          %v772 = vpop.f32.mrb[0].mxu0
          %v773 = vpop.f32.mrb[0].mxu0
          %v774 = vadd.f32 %v622, %v773
          %v775 = vpop.f32.mrb[0].mxu0
          %776 = vmatprep.mubr.bf16.mxu0 0
          %777 = vmatmul.mubr.bf16.gmra.mrb[0].mxu0 %v330
          %v778 = vpop.f32.mrb[0].mxu0
          %v779 = vadd.f32 %v622, %v778
          %v780 = vpop.f32.mrb[0].mxu0
          %v781 = vpop.f32.mrb[0].mxu0
          %v782 = vadd.f32 %v622, %v781
          %v783 = vpop.f32.mrb[0].mxu0
          %784 = vmatprep.mubr.bf16.mxu0 0
          %785 = vmatmul.mubr.bf16.gmra.mrb[0].mxu0 %v331
          %v786 = vpop.f32.mrb[0].mxu0
          %v787 = vadd.f32 %v622, %v786
          %v788 = vpop.f32.mrb[0].mxu0
          %v789 = vpop.f32.mrb[0].mxu0
          %v790 = vadd.f32 %v622, %v789
          %v791 = vpop.f32.mrb[0].mxu0
          %792 = vmatprep.mubr.bf16.mxu0 0
          %793 = vmatmul.mubr.bf16.gmra.mrb[0].mxu0 %v332
          %v794 = vpop.f32.mrb[0].mxu0
          %v795 = vadd.f32 %v622, %v794
          %v796 = vpop.f32.mrb[0].mxu0
          %v797 = vpop.f32.mrb[0].mxu0
          %v798 = vadd.f32 %v622, %v797
          %v799 = vpop.f32.mrb[0].mxu0
          %800 = vmatprep.mubr.bf16.mxu0 0
          %801 = vmatmul.mubr.bf16.gmra.mrb[0].mxu0 %v333
          %v802 = vpop.f32.mrb[0].mxu0
          %v803 = vadd.f32 %v622, %v802
          %v804 = vpop.f32.mrb[0].mxu0
          %v805 = vpop.f32.mrb[0].mxu0
          %v806 = vadd.f32 %v622, %v805
          %v807 = vpop.f32.mrb[0].mxu0
          %808 = vmatprep.mubr.bf16.mxu0 0
          %809 = vmatmul.mubr.bf16.gmra.mrb[0].mxu0 %v334
          %v810 = vpop.f32.mrb[0].mxu0
          %v811 = vadd.f32 %v622, %v810
          %v812 = vpop.f32.mrb[0].mxu0
          %v813 = vpop.f32.mrb[0].mxu0
          %v814 = vadd.f32 %v622, %v813
          %v815 = vpop.f32.mrb[0].mxu0
          %816 = vmatprep.mubr.bf16.mxu0 0
          %817 = vmatmul.mubr.bf16.gmra.mrb[0].mxu0 %v335
          %v818 = vpop.f32.mrb[0].mxu0
          %v819 = vadd.f32 %v622, %v818
          %v820 = vpop.f32.mrb[0].mxu0
          %v821 = vpop.f32.mrb[0].mxu0
          %v822 = vadd.f32 %v622, %v821
          %v823 = vpop.f32.mrb[0].mxu0
          %824 = vmatprep.mubr.bf16.mxu0 0
          %825 = vmatmul.mubr.bf16.gmra.mrb[0].mxu0 %v336
          %v826 = vpop.f32.mrb[0].mxu0
          %v827 = vadd.f32 %v622, %v826
          %v828 = vpop.f32.mrb[0].mxu0
          %v829 = vpop.f32.mrb[0].mxu0
          %v830 = vadd.f32 %v622, %v829
          %v831 = vpop.f32.mrb[0].mxu0
          %832 = vdwg.mxu0
          %v833 = vpack.c.bf16 %v710, %v707
          %v834 = vpack.c.bf16 %v718, %v715
          %v835 = vpack.c.bf16 %v726, %v723
          %v836 = vpack.c.bf16 %v734, %v731
          %v837 = vpack.c.bf16 %v742, %v739
          %v838 = vpack.c.bf16 %v750, %v747
          %v839 = vpack.c.bf16 %v758, %v755
          %v840 = vpack.c.bf16 %v766, %v763
          %v841 = vpack.c.bf16 %v774, %v771
          %v842 = vpack.c.bf16 %v782, %v779
          %v843 = vpack.c.bf16 %v790, %v787
          %v844 = vpack.c.bf16 %v798, %v795
          %v845 = vpack.c.bf16 %v806, %v803
          %v846 = vpack.c.bf16 %v814, %v811
          %v847 = vpack.c.bf16 %v822, %v819
          %v848 = vpack.c.bf16 %v830, %v827
          %849 = vst [vmem:[#allocation3] sm:$0xff] %v833
          %850 = vst [vmem:[#allocation3 + $0x8] sm:$0xff] %v834
          %851 = vst [vmem:[#allocation3 + $0x10] sm:$0xff] %v835
          %852 = vst [vmem:[#allocation3 + $0x18] sm:$0xff] %v836
          %853 = vst [vmem:[#allocation3 + $0x20] sm:$0xff] %v837
          %854 = vst [vmem:[#allocation3 + $0x28] sm:$0xff] %v838
          %855 = vst [vmem:[#allocation3 + $0x30] sm:$0xff] %v839
          %856 = vst [vmem:[#allocation3 + $0x38] sm:$0xff] %v840
          %857 = vst [vmem:[#allocation3 + $0x40] sm:$0xff] %v841
          %858 = vst [vmem:[#allocation3 + $0x48] sm:$0xff] %v842
          %859 = vst [vmem:[#allocation3 + $0x50] sm:$0xff] %v843
          %860 = vst [vmem:[#allocation3 + $0x58] sm:$0xff] %v844
          %861 = vst [vmem:[#allocation3 + $0x60] sm:$0xff] %v845
          %862 = vst [vmem:[#allocation3 + $0x68] sm:$0xff] %v846
          %863 = vst [vmem:[#allocation3 + $0x70] sm:$0xff] %v847
          %864 = vst [vmem:[#allocation3 + $0x78] sm:$0xff] %v848
          %v865 = vld [vmem:[#allocation9 + $0x8] sm:$0xf]
          %v866 = vld [vmem:[#allocation9 + $0x14] sm:$0xf]
          %v867 = vld [vmem:[#allocation9 + $0x20] sm:$0xf]
          %v868 = vld [vmem:[#allocation9 + $0x2c] sm:$0xf]
          %v869 = vld [vmem:[#allocation9 + $0x38] sm:$0xf]
          %v870 = vld [vmem:[#allocation9 + $0x44] sm:$0xf]
          %v871 = vld [vmem:[#allocation9 + $0x50] sm:$0xf]
          %v872 = vld [vmem:[#allocation9 + $0x5c] sm:$0xf]
          %v873 = vld [vmem:[#allocation9 + $0x68] sm:$0xf]
          %v874 = vld [vmem:[#allocation9 + $0x74] sm:$0xf]
          %v875 = vld [vmem:[#allocation9 + $0x80] sm:$0xf]
          %v876 = vld [vmem:[#allocation9 + $0x8c] sm:$0xf]
          %v877 = vld [vmem:[#allocation9 + $0x98] sm:$0xf]
          %v878 = vld [vmem:[#allocation9 + $0xa4] sm:$0xf]
          %v879 = vld [vmem:[#allocation9 + $0xb0] sm:$0xf]
          %v880 = vld [vmem:[#allocation9 + $0xbc] sm:$0xf]
          %v881 = vld [vmem:[%s2 + $0x2] sm:$0x1]
          %v883 = vlaneseq
          %v884 = vshrl.u32 %v883, 7
          %v885 = vsub.s32 0, %v884
          %v886 = vrot.slane %v881, %v885
          %v904 = vunpack.c.l.b16 %v865
          %v905 = vunpack.c.l.b16 %v866
          %v906 = vunpack.c.l.b16 %v867
          %v907 = vunpack.c.l.b16 %v868
          %v908 = vunpack.c.l.b16 %v869
          %v909 = vunpack.c.l.b16 %v870
          %v910 = vunpack.c.l.b16 %v871
          %v911 = vunpack.c.l.b16 %v872
          %v912 = vunpack.c.l.b16 %v873
          %v913 = vunpack.c.l.b16 %v874
          %v914 = vunpack.c.l.b16 %v875
          %v915 = vunpack.c.l.b16 %v876
          %v916 = vunpack.c.l.b16 %v877
          %v917 = vunpack.c.l.b16 %v878
          %v918 = vunpack.c.l.b16 %v879
          %v919 = vunpack.c.l.b16 %v880
          %v920 = vpack.c.b16 %v905, %v904
          %v921 = vpack.c.b16 %v907, %v906
          %v922 = vpack.c.b16 %v909, %v908
          %v923 = vpack.c.b16 %v911, %v910
          %v924 = vpack.c.b16 %v913, %v912
          %v925 = vpack.c.b16 %v915, %v914
          %v926 = vpack.c.b16 %v917, %v916
          %v927 = vpack.c.b16 %v919, %v918
          %936 = vmatprep.subr.bf16.mxu0 0
          %937 = vmatpush1.bf16.msra.mxu0 %v920
          %938 = vmatprep.subr.bf16.mxu0 0
          %939 = vmatpush1.bf16.msra.mxu0 %v921
          %940 = vmatprep.subr.bf16.mxu0 0
          %941 = vmatpush1.bf16.msra.mxu0 %v922
          %942 = vmatprep.subr.bf16.mxu0 0
          %943 = vmatpush1.bf16.msra.mxu0 %v923
          %944 = vmatprep.subr.bf16.mxu0 0
          %945 = vmatpush1.bf16.msra.mxu0 %v924
          %946 = vmatprep.subr.bf16.mxu0 0
          %947 = vmatpush1.bf16.msra.mxu0 %v925
          %948 = vmatprep.subr.bf16.mxu0 0
          %949 = vmatpush1.bf16.msra.mxu0 %v926
          %950 = vmatprep.subr.bf16.mxu0 0
          %951 = vmatpush1.bf16.msra.mxu0 %v927
          %952 = vmatprep.subr.bf16.mxu0 0
          %953 = vmatpush1.bf16.msra.mxu0 0
          %954 = vmatprep.subr.bf16.mxu0 0
          %955 = vmatpush1.bf16.msra.mxu0 0
          %956 = vmatprep.subr.bf16.mxu0 0
          %957 = vmatpush1.bf16.msra.mxu0 0
          %958 = vmatprep.subr.bf16.mxu0 0
          %959 = vmatpush1.bf16.msra.mxu0 0
          %960 = vmatprep.subr.bf16.mxu0 0
          %961 = vmatpush1.bf16.msra.mxu0 0
          %962 = vmatprep.subr.bf16.mxu0 0
          %963 = vmatpush1.bf16.msra.mxu0 0
          %964 = vmatprep.subr.bf16.mxu0 0
          %965 = vmatpush1.bf16.msra.mxu0 0
          %966 = vmatprep.subr.bf16.mxu0 0
          %967 = vmatpush1.bf16.msra.mxu0 0
          %968 = vmatprep.mubr.bf16.mxu0 0
          %969 = vmatmul.mubr.bf16.gmra.mrb[0].mxu0 %v321
          %v970 = vpop.f32.mrb[0].mxu0
          %v971 = vadd.f32 %v886, %v970
          %v972 = vpop.f32.mrb[0].mxu0
          %v973 = vpop.f32.mrb[0].mxu0
          %v974 = vadd.f32 %v886, %v973
          %v975 = vpop.f32.mrb[0].mxu0
          %976 = vmatprep.mubr.bf16.mxu0 0
          %977 = vmatmul.mubr.bf16.gmra.mrb[0].mxu0 %v322
          %v978 = vpop.f32.mrb[0].mxu0
          %v979 = vadd.f32 %v886, %v978
          %v980 = vpop.f32.mrb[0].mxu0
          %v981 = vpop.f32.mrb[0].mxu0
          %v982 = vadd.f32 %v886, %v981
          %v983 = vpop.f32.mrb[0].mxu0
          %984 = vmatprep.mubr.bf16.mxu0 0
          %985 = vmatmul.mubr.bf16.gmra.mrb[0].mxu0 %v323
          %v986 = vpop.f32.mrb[0].mxu0
          %v987 = vadd.f32 %v886, %v986
          %v988 = vpop.f32.mrb[0].mxu0
          %v989 = vpop.f32.mrb[0].mxu0
          %v990 = vadd.f32 %v886, %v989
          %v991 = vpop.f32.mrb[0].mxu0
          %992 = vmatprep.mubr.bf16.mxu0 0
          %993 = vmatmul.mubr.bf16.gmra.mrb[0].mxu0 %v324
          %v994 = vpop.f32.mrb[0].mxu0
          %v995 = vadd.f32 %v886, %v994
          %v996 = vpop.f32.mrb[0].mxu0
          %v997 = vpop.f32.mrb[0].mxu0
          %v998 = vadd.f32 %v886, %v997
          %v999 = vpop.f32.mrb[0].mxu0
          %1000 = vmatprep.mubr.bf16.mxu0 0
          %1001 = vmatmul.mubr.bf16.gmra.mrb[0].mxu0 %v325
          %v1002 = vpop.f32.mrb[0].mxu0
          %v1003 = vadd.f32 %v886, %v1002
          %v1004 = vpop.f32.mrb[0].mxu0
          %v1005 = vpop.f32.mrb[0].mxu0
          %v1006 = vadd.f32 %v886, %v1005
          %v1007 = vpop.f32.mrb[0].mxu0
          %1008 = vmatprep.mubr.bf16.mxu0 0
          %1009 = vmatmul.mubr.bf16.gmra.mrb[0].mxu0 %v326
          %v1010 = vpop.f32.mrb[0].mxu0
          %v1011 = vadd.f32 %v886, %v1010
          %v1012 = vpop.f32.mrb[0].mxu0
          %v1013 = vpop.f32.mrb[0].mxu0
          %v1014 = vadd.f32 %v886, %v1013
          %v1015 = vpop.f32.mrb[0].mxu0
          %1016 = vmatprep.mubr.bf16.mxu0 0
          %1017 = vmatmul.mubr.bf16.gmra.mrb[0].mxu0 %v327
          %v1018 = vpop.f32.mrb[0].mxu0
          %v1019 = vadd.f32 %v886, %v1018
          %v1020 = vpop.f32.mrb[0].mxu0
          %v1021 = vpop.f32.mrb[0].mxu0
          %v1022 = vadd.f32 %v886, %v1021
          %v1023 = vpop.f32.mrb[0].mxu0
          %1024 = vmatprep.mubr.bf16.mxu0 0
          %1025 = vmatmul.mubr.bf16.gmra.mrb[0].mxu0 %v328
          %v1026 = vpop.f32.mrb[0].mxu0
          %v1027 = vadd.f32 %v886, %v1026
          %v1028 = vpop.f32.mrb[0].mxu0
          %v1029 = vpop.f32.mrb[0].mxu0
          %v1030 = vadd.f32 %v886, %v1029
          %v1031 = vpop.f32.mrb[0].mxu0
          %1032 = vmatprep.mubr.bf16.mxu0 0
          %1033 = vmatmul.mubr.bf16.gmra.mrb[0].mxu0 %v329
          %v1034 = vpop.f32.mrb[0].mxu0
          %v1035 = vadd.f32 %v886, %v1034
          %v1036 = vpop.f32.mrb[0].mxu0
          %v1037 = vpop.f32.mrb[0].mxu0
          %v1038 = vadd.f32 %v886, %v1037
          %v1039 = vpop.f32.mrb[0].mxu0
          %1040 = vmatprep.mubr.bf16.mxu0 0
          %1041 = vmatmul.mubr.bf16.gmra.mrb[0].mxu0 %v330
          %v1042 = vpop.f32.mrb[0].mxu0
          %v1043 = vadd.f32 %v886, %v1042
          %v1044 = vpop.f32.mrb[0].mxu0
          %v1045 = vpop.f32.mrb[0].mxu0
          %v1046 = vadd.f32 %v886, %v1045
          %v1047 = vpop.f32.mrb[0].mxu0
          %1048 = vmatprep.mubr.bf16.mxu0 0
          %1049 = vmatmul.mubr.bf16.gmra.mrb[0].mxu0 %v331
          %v1050 = vpop.f32.mrb[0].mxu0
          %v1051 = vadd.f32 %v886, %v1050
          %v1052 = vpop.f32.mrb[0].mxu0
          %v1053 = vpop.f32.mrb[0].mxu0
          %v1054 = vadd.f32 %v886, %v1053
          %v1055 = vpop.f32.mrb[0].mxu0
          %1056 = vmatprep.mubr.bf16.mxu0 0
          %1057 = vmatmul.mubr.bf16.gmra.mrb[0].mxu0 %v332
          %v1058 = vpop.f32.mrb[0].mxu0
          %v1059 = vadd.f32 %v886, %v1058
          %v1060 = vpop.f32.mrb[0].mxu0
          %v1061 = vpop.f32.mrb[0].mxu0
          %v1062 = vadd.f32 %v886, %v1061
          %v1063 = vpop.f32.mrb[0].mxu0
          %1064 = vmatprep.mubr.bf16.mxu0 0
          %1065 = vmatmul.mubr.bf16.gmra.mrb[0].mxu0 %v333
          %v1066 = vpop.f32.mrb[0].mxu0
          %v1067 = vadd.f32 %v886, %v1066
          %v1068 = vpop.f32.mrb[0].mxu0
          %v1069 = vpop.f32.mrb[0].mxu0
          %v1070 = vadd.f32 %v886, %v1069
          %v1071 = vpop.f32.mrb[0].mxu0
          %1072 = vmatprep.mubr.bf16.mxu0 0
          %1073 = vmatmul.mubr.bf16.gmra.mrb[0].mxu0 %v334
          %v1074 = vpop.f32.mrb[0].mxu0
          %v1075 = vadd.f32 %v886, %v1074
          %v1076 = vpop.f32.mrb[0].mxu0
          %v1077 = vpop.f32.mrb[0].mxu0
          %v1078 = vadd.f32 %v886, %v1077
          %v1079 = vpop.f32.mrb[0].mxu0
          %1080 = vmatprep.mubr.bf16.mxu0 0
          %1081 = vmatmul.mubr.bf16.gmra.mrb[0].mxu0 %v335
          %v1082 = vpop.f32.mrb[0].mxu0
          %v1083 = vadd.f32 %v886, %v1082
          %v1084 = vpop.f32.mrb[0].mxu0
          %v1085 = vpop.f32.mrb[0].mxu0
          %v1086 = vadd.f32 %v886, %v1085
          %v1087 = vpop.f32.mrb[0].mxu0
          %1088 = vmatprep.mubr.bf16.mxu0 0
          %1089 = vmatmul.mubr.bf16.gmra.mrb[0].mxu0 %v336
          %v1090 = vpop.f32.mrb[0].mxu0
          %v1091 = vadd.f32 %v886, %v1090
          %v1092 = vpop.f32.mrb[0].mxu0
          %v1093 = vpop.f32.mrb[0].mxu0
          %v1094 = vadd.f32 %v886, %v1093
          %v1095 = vpop.f32.mrb[0].mxu0
          %1096 = vdwg.mxu0
          %v1097 = vpack.c.bf16 %v974, %v971
          %v1098 = vpack.c.bf16 %v982, %v979
          %v1099 = vpack.c.bf16 %v990, %v987
          %v1100 = vpack.c.bf16 %v998, %v995
          %v1101 = vpack.c.bf16 %v1006, %v1003
          %v1102 = vpack.c.bf16 %v1014, %v1011
          %v1103 = vpack.c.bf16 %v1022, %v1019
          %v1104 = vpack.c.bf16 %v1030, %v1027
          %v1105 = vpack.c.bf16 %v1038, %v1035
          %v1106 = vpack.c.bf16 %v1046, %v1043
          %v1107 = vpack.c.bf16 %v1054, %v1051
          %v1108 = vpack.c.bf16 %v1062, %v1059
          %v1109 = vpack.c.bf16 %v1070, %v1067
          %v1110 = vpack.c.bf16 %v1078, %v1075
          %v1111 = vpack.c.bf16 %v1086, %v1083
          %v1112 = vpack.c.bf16 %v1094, %v1091
          %1113 = vst [vmem:[#allocation4] sm:$0xff] %v1097
          %1114 = vst [vmem:[#allocation4 + $0x8] sm:$0xff] %v1098
          %1115 = vst [vmem:[#allocation4 + $0x10] sm:$0xff] %v1099
          %1116 = vst [vmem:[#allocation4 + $0x18] sm:$0xff] %v1100
          %1117 = vst [vmem:[#allocation4 + $0x20] sm:$0xff] %v1101
          %1118 = vst [vmem:[#allocation4 + $0x28] sm:$0xff] %v1102
          %1119 = vst [vmem:[#allocation4 + $0x30] sm:$0xff] %v1103
          %1120 = vst [vmem:[#allocation4 + $0x38] sm:$0xff] %v1104
          %1121 = vst [vmem:[#allocation4 + $0x40] sm:$0xff] %v1105
          %1122 = vst [vmem:[#allocation4 + $0x48] sm:$0xff] %v1106
          %1123 = vst [vmem:[#allocation4 + $0x50] sm:$0xff] %v1107
          %1124 = vst [vmem:[#allocation4 + $0x58] sm:$0xff] %v1108
          %1125 = vst [vmem:[#allocation4 + $0x60] sm:$0xff] %v1109
          %1126 = vst [vmem:[#allocation4 + $0x68] sm:$0xff] %v1110
          %1127 = vst [vmem:[#allocation4 + $0x70] sm:$0xff] %v1111
          %1128 = vst [vmem:[#allocation4 + $0x78] sm:$0xff] %v1112
          %1129 = vst [vmem:[#allocation5] sm:$0xff] 0.0
          %1130 = vst [vmem:[#allocation5 + $0x8] sm:$0xff] 0.0
          %1131 = vst [vmem:[#allocation5 + $0x10] sm:$0xff] 0.0
          %1132 = vst [vmem:[#allocation5 + $0x18] sm:$0xff] 0.0
          %1133 = vst [vmem:[#allocation5 + $0x20] sm:$0xff] 0.0
          %1134 = vst [vmem:[#allocation5 + $0x28] sm:$0xff] 0.0
          %1135 = vst [vmem:[#allocation5 + $0x30] sm:$0xff] 0.0
          %1136 = vst [vmem:[#allocation5 + $0x38] sm:$0xff] 0.0
          %1137 = vst [vmem:[#allocation5 + $0x40] sm:$0xff] 0.0
          %1138 = vst [vmem:[#allocation5 + $0x48] sm:$0xff] 0.0
          %1139 = vst [vmem:[#allocation5 + $0x50] sm:$0xff] 0.0
          %1140 = vst [vmem:[#allocation5 + $0x58] sm:$0xff] 0.0
          %1141 = vst [vmem:[#allocation5 + $0x60] sm:$0xff] 0.0
          %1142 = vst [vmem:[#allocation5 + $0x68] sm:$0xff] 0.0
          %1143 = vst [vmem:[#allocation5 + $0x70] sm:$0xff] 0.0
          %1144 = vst [vmem:[#allocation5 + $0x78] sm:$0xff] 0.0
          %1145 = vst [vmem:[#allocation5 + $0x80] sm:$0xff] 0.0
          %1146 = vst [vmem:[#allocation5 + $0x88] sm:$0xff] 0.0
          %1147 = vst [vmem:[#allocation5 + $0x90] sm:$0xff] 0.0
          %1148 = vst [vmem:[#allocation5 + $0x98] sm:$0xff] 0.0
          %1149 = vst [vmem:[#allocation5 + $0xa0] sm:$0xff] 0.0
          %1150 = vst [vmem:[#allocation5 + $0xa8] sm:$0xff] 0.0
          %1151 = vst [vmem:[#allocation5 + $0xb0] sm:$0xff] 0.0
          %1152 = vst [vmem:[#allocation5 + $0xb8] sm:$0xff] 0.0
          %1153 = vst [vmem:[#allocation5 + $0xc0] sm:$0xff] 0.0
          %1154 = vst [vmem:[#allocation5 + $0xc8] sm:$0xff] 0.0
          %1155 = vst [vmem:[#allocation5 + $0xd0] sm:$0xff] 0.0
          %1156 = vst [vmem:[#allocation5 + $0xd8] sm:$0xff] 0.0
          %1157 = vst [vmem:[#allocation5 + $0xe0] sm:$0xff] 0.0
          %1158 = vst [vmem:[#allocation5 + $0xe8] sm:$0xff] 0.0
          %1159 = vst [vmem:[#allocation5 + $0xf0] sm:$0xff] 0.0
          %1160 = vst [vmem:[#allocation5 + $0xf8] sm:$0xff] 0.0
        $region56: #{tpu_custom_call.1} parent=39 // pred_fallthru
          _
        %s1161 = smul.u32 %s28, 128
        %s1162 = sshra.s32 %s1161, 4
        %s1163 = sand.u32 %s1161, 15
        %s1164 = smul.addr %s1162, 8
        %s1165 = scalar_lea.vmem [#allocation2], %s1164
        %v1166 = vld [vmem:[%s1165] sm:$0xff]
        %v1167 = vld [vmem:[%s1165 + $0x8] sm:$0xff]
        %v1168 = vld [vmem:[%s1165 + $0x10] sm:$0xff]
        %v1169 = vld [vmem:[%s1165 + $0x18] sm:$0xff]
        %v1170 = vld [vmem:[%s1165 + $0x20] sm:$0xff]
        %v1171 = vld [vmem:[%s1165 + $0x28] sm:$0xff]
        %v1172 = vld [vmem:[%s1165 + $0x30] sm:$0xff]
        %v1173 = vld [vmem:[%s1165 + $0x38] sm:$0xff]
        %s1174 = smul.addr %s1162, 8
        %s1175 = scalar_lea.vmem [#allocation4], %s1174
        %v1176 = vld [vmem:[%s1175] sm:$0xff]
        %v1177 = vld [vmem:[%s1175 + $0x8] sm:$0xff]
        %v1178 = vld [vmem:[%s1175 + $0x10] sm:$0xff]
        %v1179 = vld [vmem:[%s1175 + $0x18] sm:$0xff]
        %v1180 = vld [vmem:[%s1175 + $0x20] sm:$0xff]
        %v1181 = vld [vmem:[%s1175 + $0x28] sm:$0xff]
        %v1182 = vld [vmem:[%s1175 + $0x30] sm:$0xff]
        %v1183 = vld [vmem:[%s1175 + $0x38] sm:$0xff]
        %v1184 = vld [vmem:[#allocation3] sm:$0xff]
        %v1185 = vld [vmem:[#allocation3 + $0x8] sm:$0xff]
        %v1186 = vld [vmem:[#allocation3 + $0x10] sm:$0xff]
        %v1187 = vld [vmem:[#allocation3 + $0x18] sm:$0xff]
        %v1188 = vld [vmem:[#allocation3 + $0x20] sm:$0xff]
        %v1189 = vld [vmem:[#allocation3 + $0x28] sm:$0xff]
        %v1190 = vld [vmem:[#allocation3 + $0x30] sm:$0xff]
        %v1191 = vld [vmem:[#allocation3 + $0x38] sm:$0xff]
        %v1192 = vld [vmem:[#allocation3 + $0x40] sm:$0xff]
        %v1193 = vld [vmem:[#allocation3 + $0x48] sm:$0xff]
        %v1194 = vld [vmem:[#allocation3 + $0x50] sm:$0xff]
        %v1195 = vld [vmem:[#allocation3 + $0x58] sm:$0xff]
        %v1196 = vld [vmem:[#allocation3 + $0x60] sm:$0xff]
        %v1197 = vld [vmem:[#allocation3 + $0x68] sm:$0xff]
        %v1198 = vld [vmem:[#allocation3 + $0x70] sm:$0xff]
        %v1199 = vld [vmem:[#allocation3 + $0x78] sm:$0xff]
        %1200 = vmatprep.subr.bf16.mxu0 0
        %1201 = vmatpush1.bf16.xpose.msra.mxu0 %v1166
        %1202 = vmatprep.subr.bf16.mxu0 0
        %1203 = vmatpush1.bf16.xpose.msra.mxu0 %v1167
        %1204 = vmatprep.subr.bf16.mxu0 0
        %1205 = vmatpush1.bf16.xpose.msra.mxu0 %v1168
        %1206 = vmatprep.subr.bf16.mxu0 0
        %1207 = vmatpush1.bf16.xpose.msra.mxu0 %v1169
        %1208 = vmatprep.subr.bf16.mxu0 0
        %1209 = vmatpush1.bf16.xpose.msra.mxu0 %v1170
        %1210 = vmatprep.subr.bf16.mxu0 0
        %1211 = vmatpush1.bf16.xpose.msra.mxu0 %v1171
        %1212 = vmatprep.subr.bf16.mxu0 0
        %1213 = vmatpush1.bf16.xpose.msra.mxu0 %v1172
        %1214 = vmatprep.subr.bf16.mxu0 0
        %1215 = vmatpush1.bf16.xpose.msra.mxu0 %v1173
        %1216 = vmatprep.subr.bf16.mxu0 0
        %1217 = vmatpush1.bf16.xpose.msra.mxu0 0
        %1218 = vmatprep.subr.bf16.mxu0 0
        %1219 = vmatpush1.bf16.xpose.msra.mxu0 0
        %1220 = vmatprep.subr.bf16.mxu0 0
        %1221 = vmatpush1.bf16.xpose.msra.mxu0 0
        %1222 = vmatprep.subr.bf16.mxu0 0
        %1223 = vmatpush1.bf16.xpose.msra.mxu0 0
        %1224 = vmatprep.subr.bf16.mxu0 0
        %1225 = vmatpush1.bf16.xpose.msra.mxu0 0
        %1226 = vmatprep.subr.bf16.mxu0 0
        %1227 = vmatpush1.bf16.xpose.msra.mxu0 0
        %1228 = vmatprep.subr.bf16.mxu0 0
        %1229 = vmatpush1.bf16.xpose.msra.mxu0 0
        %1230 = vmatprep.subr.bf16.mxu0 0
        %1231 = vmatpush1.bf16.xpose.msra.mxu0 0
        %1232 = vmatprep.mubr.bf16.mxu0 0
        %1233 = vmatmul.mubr.bf16.gmra.mrb[0].mxu0 %v1184
        %v1234 = vpop.f32.mrb[0].mxu0
        %v1235 = vadd.f32 0.0, %v1234
        %v1236 = vpop.f32.mrb[0].mxu0
        %v1237 = vpop.f32.mrb[0].mxu0
        %v1238 = vadd.f32 0.0, %v1237
        %v1239 = vpop.f32.mrb[0].mxu0
        %1240 = vmatprep.mubr.bf16.mxu0 0
        %1241 = vmatmul.mubr.bf16.gmra.mrb[0].mxu0 %v1185
        %v1242 = vpop.f32.mrb[0].mxu0
        %v1243 = vadd.f32 0.0, %v1242
        %v1244 = vpop.f32.mrb[0].mxu0
        %v1245 = vpop.f32.mrb[0].mxu0
        %v1246 = vadd.f32 0.0, %v1245
        %v1247 = vpop.f32.mrb[0].mxu0
        %1248 = vmatprep.mubr.bf16.mxu0 0
        %1249 = vmatmul.mubr.bf16.gmra.mrb[0].mxu0 %v1186
        %v1250 = vpop.f32.mrb[0].mxu0
        %v1251 = vadd.f32 0.0, %v1250
        %v1252 = vpop.f32.mrb[0].mxu0
        %v1253 = vpop.f32.mrb[0].mxu0
        %v1254 = vadd.f32 0.0, %v1253
        %v1255 = vpop.f32.mrb[0].mxu0
        %1256 = vmatprep.mubr.bf16.mxu0 0
        %1257 = vmatmul.mubr.bf16.gmra.mrb[0].mxu0 %v1187
        %v1258 = vpop.f32.mrb[0].mxu0
        %v1259 = vadd.f32 0.0, %v1258
        %v1260 = vpop.f32.mrb[0].mxu0
        %v1261 = vpop.f32.mrb[0].mxu0
        %v1262 = vadd.f32 0.0, %v1261
        %v1263 = vpop.f32.mrb[0].mxu0
        %1264 = vmatprep.mubr.bf16.mxu0 0
        %1265 = vmatmul.mubr.bf16.gmra.mrb[0].mxu0 %v1188
        %v1266 = vpop.f32.mrb[0].mxu0
        %v1267 = vadd.f32 0.0, %v1266
        %v1268 = vpop.f32.mrb[0].mxu0
        %v1269 = vpop.f32.mrb[0].mxu0
        %v1270 = vadd.f32 0.0, %v1269
        %v1271 = vpop.f32.mrb[0].mxu0
        %1272 = vmatprep.mubr.bf16.mxu0 0
        %1273 = vmatmul.mubr.bf16.gmra.mrb[0].mxu0 %v1189
        %v1274 = vpop.f32.mrb[0].mxu0
        %v1275 = vadd.f32 0.0, %v1274
        %v1276 = vpop.f32.mrb[0].mxu0
        %v1277 = vpop.f32.mrb[0].mxu0
        %v1278 = vadd.f32 0.0, %v1277
        %v1279 = vpop.f32.mrb[0].mxu0
        %1280 = vmatprep.mubr.bf16.mxu0 0
        %1281 = vmatmul.mubr.bf16.gmra.mrb[0].mxu0 %v1190
        %v1282 = vpop.f32.mrb[0].mxu0
        %v1283 = vadd.f32 0.0, %v1282
        %v1284 = vpop.f32.mrb[0].mxu0
        %v1285 = vpop.f32.mrb[0].mxu0
        %v1286 = vadd.f32 0.0, %v1285
        %v1287 = vpop.f32.mrb[0].mxu0
        %1288 = vmatprep.mubr.bf16.mxu0 0
        %1289 = vmatmul.mubr.bf16.gmra.mrb[0].mxu0 %v1191
        %v1290 = vpop.f32.mrb[0].mxu0
        %v1291 = vadd.f32 0.0, %v1290
        %v1292 = vpop.f32.mrb[0].mxu0
        %v1293 = vpop.f32.mrb[0].mxu0
        %v1294 = vadd.f32 0.0, %v1293
        %v1295 = vpop.f32.mrb[0].mxu0
        %1296 = vmatprep.mubr.bf16.mxu0 0
        %1297 = vmatmul.mubr.bf16.gmra.mrb[0].mxu0 %v1192
        %v1298 = vpop.f32.mrb[0].mxu0
        %v1299 = vadd.f32 0.0, %v1298
        %v1300 = vpop.f32.mrb[0].mxu0
        %v1301 = vpop.f32.mrb[0].mxu0
        %v1302 = vadd.f32 0.0, %v1301
        %v1303 = vpop.f32.mrb[0].mxu0
        %1304 = vmatprep.mubr.bf16.mxu0 0
        %1305 = vmatmul.mubr.bf16.gmra.mrb[0].mxu0 %v1193
        %v1306 = vpop.f32.mrb[0].mxu0
        %v1307 = vadd.f32 0.0, %v1306
        %v1308 = vpop.f32.mrb[0].mxu0
        %v1309 = vpop.f32.mrb[0].mxu0
        %v1310 = vadd.f32 0.0, %v1309
        %v1311 = vpop.f32.mrb[0].mxu0
        %1312 = vmatprep.mubr.bf16.mxu0 0
        %1313 = vmatmul.mubr.bf16.gmra.mrb[0].mxu0 %v1194
        %v1314 = vpop.f32.mrb[0].mxu0
        %v1315 = vadd.f32 0.0, %v1314
        %v1316 = vpop.f32.mrb[0].mxu0
        %v1317 = vpop.f32.mrb[0].mxu0
        %v1318 = vadd.f32 0.0, %v1317
        %v1319 = vpop.f32.mrb[0].mxu0
        %1320 = vmatprep.mubr.bf16.mxu0 0
        %1321 = vmatmul.mubr.bf16.gmra.mrb[0].mxu0 %v1195
        %v1322 = vpop.f32.mrb[0].mxu0
        %v1323 = vadd.f32 0.0, %v1322
        %v1324 = vpop.f32.mrb[0].mxu0
        %v1325 = vpop.f32.mrb[0].mxu0
        %v1326 = vadd.f32 0.0, %v1325
        %v1327 = vpop.f32.mrb[0].mxu0
        %1328 = vmatprep.mubr.bf16.mxu0 0
        %1329 = vmatmul.mubr.bf16.gmra.mrb[0].mxu0 %v1196
        %v1330 = vpop.f32.mrb[0].mxu0
        %v1331 = vadd.f32 0.0, %v1330
        %v1332 = vpop.f32.mrb[0].mxu0
        %v1333 = vpop.f32.mrb[0].mxu0
        %v1334 = vadd.f32 0.0, %v1333
        %v1335 = vpop.f32.mrb[0].mxu0
        %1336 = vmatprep.mubr.bf16.mxu0 0
        %1337 = vmatmul.mubr.bf16.gmra.mrb[0].mxu0 %v1197
        %v1338 = vpop.f32.mrb[0].mxu0
        %v1339 = vadd.f32 0.0, %v1338
        %v1340 = vpop.f32.mrb[0].mxu0
        %v1341 = vpop.f32.mrb[0].mxu0
        %v1342 = vadd.f32 0.0, %v1341
        %v1343 = vpop.f32.mrb[0].mxu0
        %1344 = vmatprep.mubr.bf16.mxu0 0
        %1345 = vmatmul.mubr.bf16.gmra.mrb[0].mxu0 %v1198
        %v1346 = vpop.f32.mrb[0].mxu0
        %v1347 = vadd.f32 0.0, %v1346
        %v1348 = vpop.f32.mrb[0].mxu0
        %v1349 = vpop.f32.mrb[0].mxu0
        %v1350 = vadd.f32 0.0, %v1349
        %v1351 = vpop.f32.mrb[0].mxu0
        %1352 = vmatprep.mubr.bf16.mxu0 0
        %1353 = vmatmul.mubr.bf16.gmra.mrb[0].mxu0 %v1199
        %v1354 = vpop.f32.mrb[0].mxu0
        %v1355 = vadd.f32 0.0, %v1354
        %v1356 = vpop.f32.mrb[0].mxu0
        %v1357 = vpop.f32.mrb[0].mxu0
        %v1358 = vadd.f32 0.0, %v1357
        %v1359 = vpop.f32.mrb[0].mxu0
        %1360 = vdwg.mxu0
        %v1361 = vmax.f32 %v1235, %v1251
        %v1362 = vmax.f32 %v1238, %v1254
        %v1363 = vmax.f32 %v1243, %v1259
        %v1364 = vmax.f32 %v1246, %v1262
        %v1365 = vmax.f32 %v1361, %v1267
        %v1366 = vmax.f32 %v1362, %v1270
        %v1367 = vmax.f32 %v1363, %v1275
        %v1368 = vmax.f32 %v1364, %v1278
        %v1369 = vmax.f32 %v1365, %v1283
        %v1370 = vmax.f32 %v1366, %v1286
        %v1371 = vmax.f32 %v1367, %v1291
        %v1372 = vmax.f32 %v1368, %v1294
        %v1373 = vmax.f32 %v1369, %v1299
        %v1374 = vmax.f32 %v1370, %v1302
        %v1375 = vmax.f32 %v1371, %v1307
        %v1376 = vmax.f32 %v1372, %v1310
        %v1377 = vmax.f32 %v1373, %v1315
        %v1378 = vmax.f32 %v1374, %v1318
        %v1379 = vmax.f32 %v1375, %v1323
        %v1380 = vmax.f32 %v1376, %v1326
        %v1381 = vmax.f32 %v1377, %v1331
        %v1382 = vmax.f32 %v1378, %v1334
        %v1383 = vmax.f32 %v1379, %v1339
        %v1384 = vmax.f32 %v1380, %v1342
        %v1385 = vmax.f32 %v1381, %v1347
        %v1386 = vmax.f32 %v1382, %v1350
        %v1387 = vmax.f32 %v1383, %v1355
        %v1388 = vmax.f32 %v1384, %v1358
        %v1389 = vmax.f32 %v1385, %v1386
        %v1390 = vmax.f32 %v1387, %v1388
        %v1391 = vmax.f32 %v1389, %v1390
        %v1392 = vrot.slane %v1391, 4
        %v1393 = vmax.f32 %v1391, %v1392
        %v1394 = vrot.slane %v1393, 2
        %v1395 = vmax.f32 %v1393, %v1394
        %v1396 = vrot.slane %v1395, 1
        %v1397 = vmax.f32 %v1395, %v1396
        %v1398 = vsub.f32 %v1235, %v1397
        %v1399 = vsub.f32 %v1238, %v1397
        %v1400 = vsub.f32 %v1243, %v1397
        %v1401 = vsub.f32 %v1246, %v1397
        %v1402 = vsub.f32 %v1251, %v1397
        %v1403 = vsub.f32 %v1254, %v1397
        %v1404 = vsub.f32 %v1259, %v1397
        %v1405 = vsub.f32 %v1262, %v1397
        %v1406 = vsub.f32 %v1267, %v1397
        %v1407 = vsub.f32 %v1270, %v1397
        %v1408 = vsub.f32 %v1275, %v1397
        %v1409 = vsub.f32 %v1278, %v1397
        %v1410 = vsub.f32 %v1283, %v1397
        %v1411 = vsub.f32 %v1286, %v1397
        %v1412 = vsub.f32 %v1291, %v1397
        %v1413 = vsub.f32 %v1294, %v1397
        %v1414 = vsub.f32 %v1299, %v1397
        %v1415 = vsub.f32 %v1302, %v1397
        %v1416 = vsub.f32 %v1307, %v1397
        %v1417 = vsub.f32 %v1310, %v1397
        %v1418 = vsub.f32 %v1315, %v1397
        %v1419 = vsub.f32 %v1318, %v1397
        %v1420 = vsub.f32 %v1323, %v1397
        %v1421 = vsub.f32 %v1326, %v1397
        %v1422 = vsub.f32 %v1331, %v1397
        %v1423 = vsub.f32 %v1334, %v1397
        %v1424 = vsub.f32 %v1339, %v1397
        %v1425 = vsub.f32 %v1342, %v1397
        %v1426 = vsub.f32 %v1347, %v1397
        %v1427 = vsub.f32 %v1350, %v1397
        %v1428 = vsub.f32 %v1355, %v1397
        %v1429 = vsub.f32 %v1358, %v1397
        %v1430 = vmul.f32 %v1398, 1.442695
        %v1431 = vpow.pop %v1430
        %v1432 = vmul.f32 %v1399, 1.442695
        %v1433 = vpow.pop %v1432
        %v1434 = vmul.f32 %v1400, 1.442695
        %v1435 = vpow.pop %v1434
        %v1436 = vmul.f32 %v1401, 1.442695
        %v1437 = vpow.pop %v1436
        %v1438 = vmul.f32 %v1402, 1.442695
        %v1439 = vpow.pop %v1438
        %v1440 = vmul.f32 %v1403, 1.442695
        %v1441 = vpow.pop %v1440
        %v1442 = vmul.f32 %v1404, 1.442695
        %v1443 = vpow.pop %v1442
        %v1444 = vmul.f32 %v1405, 1.442695
        %v1445 = vpow.pop %v1444
        %v1446 = vmul.f32 %v1406, 1.442695
        %v1447 = vpow.pop %v1446
        %v1448 = vmul.f32 %v1407, 1.442695
        %v1449 = vpow.pop %v1448
        %v1450 = vmul.f32 %v1408, 1.442695
        %v1451 = vpow.pop %v1450
        %v1452 = vmul.f32 %v1409, 1.442695
        %v1453 = vpow.pop %v1452
        %v1454 = vmul.f32 %v1410, 1.442695
        %v1455 = vpow.pop %v1454
        %v1456 = vmul.f32 %v1411, 1.442695
        %v1457 = vpow.pop %v1456
        %v1458 = vmul.f32 %v1412, 1.442695
        %v1459 = vpow.pop %v1458
        %v1460 = vmul.f32 %v1413, 1.442695
        %v1461 = vpow.pop %v1460
        %v1462 = vmul.f32 %v1414, 1.442695
        %v1463 = vpow.pop %v1462
        %v1464 = vmul.f32 %v1415, 1.442695
        %v1465 = vpow.pop %v1464
        %v1466 = vmul.f32 %v1416, 1.442695
        %v1467 = vpow.pop %v1466
        %v1468 = vmul.f32 %v1417, 1.442695
        %v1469 = vpow.pop %v1468
        %v1470 = vmul.f32 %v1418, 1.442695
        %v1471 = vpow.pop %v1470
        %v1472 = vmul.f32 %v1419, 1.442695
        %v1473 = vpow.pop %v1472
        %v1474 = vmul.f32 %v1420, 1.442695
        %v1475 = vpow.pop %v1474
        %v1476 = vmul.f32 %v1421, 1.442695
        %v1477 = vpow.pop %v1476
        %v1478 = vmul.f32 %v1422, 1.442695
        %v1479 = vpow.pop %v1478
        %v1480 = vmul.f32 %v1423, 1.442695
        %v1481 = vpow.pop %v1480
        %v1482 = vmul.f32 %v1424, 1.442695
        %v1483 = vpow.pop %v1482
        %v1484 = vmul.f32 %v1425, 1.442695
        %v1485 = vpow.pop %v1484
        %v1486 = vmul.f32 %v1426, 1.442695
        %v1487 = vpow.pop %v1486
        %v1488 = vmul.f32 %v1427, 1.442695
        %v1489 = vpow.pop %v1488
        %v1490 = vmul.f32 %v1428, 1.442695
        %v1491 = vpow.pop %v1490
        %v1492 = vmul.f32 %v1429, 1.442695
        %v1493 = vpow.pop %v1492
        %v1494 = vadd.f32 %v1431, %v1433
        %v1495 = vadd.f32 %v1494, %v1435
        %v1496 = vadd.f32 %v1495, %v1437
        %v1497 = vadd.f32 %v1496, %v1439
        %v1498 = vadd.f32 %v1497, %v1441
        %v1499 = vadd.f32 %v1498, %v1443
        %v1500 = vadd.f32 %v1499, %v1445
        %v1501 = vadd.f32 %v1500, %v1447
        %v1502 = vadd.f32 %v1501, %v1449
        %v1503 = vadd.f32 %v1502, %v1451
        %v1504 = vadd.f32 %v1503, %v1453
        %v1505 = vadd.f32 %v1504, %v1455
        %v1506 = vadd.f32 %v1505, %v1457
        %v1507 = vadd.f32 %v1506, %v1459
        %v1508 = vadd.f32 %v1507, %v1461
        %v1509 = vadd.f32 %v1508, %v1463
        %v1510 = vadd.f32 %v1509, %v1465
        %v1511 = vadd.f32 %v1510, %v1467
        %v1512 = vadd.f32 %v1511, %v1469
        %v1513 = vadd.f32 %v1512, %v1471
        %v1514 = vadd.f32 %v1513, %v1473
        %v1515 = vadd.f32 %v1514, %v1475
        %v1516 = vadd.f32 %v1515, %v1477
        %v1517 = vadd.f32 %v1516, %v1479
        %v1518 = vadd.f32 %v1517, %v1481
        %v1519 = vadd.f32 %v1518, %v1483
        %v1520 = vadd.f32 %v1519, %v1485
        %v1521 = vadd.f32 %v1520, %v1487
        %v1522 = vadd.f32 %v1521, %v1489
        %v1523 = vadd.f32 %v1522, %v1491
        %v1524 = vadd.f32 %v1523, %v1493
        %v1525 = vrot.slane %v1524, 4
        %v1526 = vadd.f32 %v1524, %v1525
        %v1527 = vrot.slane %v1526, 2
        %v1528 = vadd.f32 %v1526, %v1527
        %v1529 = vrot.slane %v1528, 1
        %v1530 = vadd.f32 %v1528, %v1529
        %v1531 = vrcp.pop %v1530
        %v1532 = vlaneseq
        %v1533 = vshrl.u32 %v1532, 7
        %v1534 = vadd.s32 %v1533, 8
        %v1535 = vadd.s32 %v1533, 16
        %v1536 = vadd.s32 %v1533, 24
        %v1537 = vadd.s32 %v1533, 32
        %v1538 = vadd.s32 %v1533, 40
        %v1539 = vadd.s32 %v1533, 48
        %v1540 = vadd.s32 %v1533, 56
        %v1541 = vadd.s32 %v1533, 64
        %v1542 = vadd.s32 %v1533, 72
        %v1543 = vadd.s32 %v1533, 80
        %v1544 = vadd.s32 %v1533, 88
        %v1545 = vadd.s32 %v1533, 96
        %v1546 = vadd.s32 %v1533, 104
        %v1547 = vadd.s32 %v1533, 112
        %v1548 = vadd.s32 %v1533, 120
        %v1549 = vlaneseq
        %v1550 = vand.u32 %v1549, 127
        %vm1551 = vcmp.eq.s32.totalorder %v1533, %v1550
        %vm1552 = vcmp.eq.s32.totalorder %v1534, %v1550
        %vm1553 = vcmp.eq.s32.totalorder %v1535, %v1550
        %vm1554 = vcmp.eq.s32.totalorder %v1536, %v1550
        %vm1555 = vcmp.eq.s32.totalorder %v1537, %v1550
        %vm1556 = vcmp.eq.s32.totalorder %v1538, %v1550
        %vm1557 = vcmp.eq.s32.totalorder %v1539, %v1550
        %vm1558 = vcmp.eq.s32.totalorder %v1540, %v1550
        %vm1559 = vcmp.eq.s32.totalorder %v1541, %v1550
        %vm1560 = vcmp.eq.s32.totalorder %v1542, %v1550
        %vm1561 = vcmp.eq.s32.totalorder %v1543, %v1550
        %vm1562 = vcmp.eq.s32.totalorder %v1544, %v1550
        %vm1563 = vcmp.eq.s32.totalorder %v1545, %v1550
        %vm1564 = vcmp.eq.s32.totalorder %v1546, %v1550
        %vm1565 = vcmp.eq.s32.totalorder %v1547, %v1550
        %vm1566 = vcmp.eq.s32.totalorder %v1548, %v1550
        %v1567 = vsel %vm1551, 1, 0
        %v1568 = vsel %vm1552, 1, 0
        %v1569 = vsel %vm1553, 1, 0
        %v1570 = vsel %vm1554, 1, 0
        %v1571 = vsel %vm1555, 1, 0
        %v1572 = vsel %vm1556, 1, 0
        %v1573 = vsel %vm1557, 1, 0
        %v1574 = vsel %vm1558, 1, 0
        %v1575 = vsel %vm1559, 1, 0
        %v1576 = vsel %vm1560, 1, 0
        %v1577 = vsel %vm1561, 1, 0
        %v1578 = vsel %vm1562, 1, 0
        %v1579 = vsel %vm1563, 1, 0
        %v1580 = vsel %vm1564, 1, 0
        %v1581 = vsel %vm1565, 1, 0
        %v1582 = vsel %vm1566, 1, 0
        %v1583 = vcvt.s32.f32 %v1567
        %v1584 = vcvt.s32.f32 %v1568
        %v1585 = vcvt.s32.f32 %v1569
        %v1586 = vcvt.s32.f32 %v1570
        %v1587 = vcvt.s32.f32 %v1571
        %v1588 = vcvt.s32.f32 %v1572
        %v1589 = vcvt.s32.f32 %v1573
        %v1590 = vcvt.s32.f32 %v1574
        %v1591 = vcvt.s32.f32 %v1575
        %v1592 = vcvt.s32.f32 %v1576
        %v1593 = vcvt.s32.f32 %v1577
        %v1594 = vcvt.s32.f32 %v1578
        %v1595 = vcvt.s32.f32 %v1579
        %v1596 = vcvt.s32.f32 %v1580
        %v1597 = vcvt.s32.f32 %v1581
        %v1598 = vcvt.s32.f32 %v1582
        %v1599 = vmul.f32 %v1583, %v1531
        %v1600 = vmul.f32 %v1584, %v1531
        %v1601 = vmul.f32 %v1585, %v1531
        %v1602 = vmul.f32 %v1586, %v1531
        %v1603 = vmul.f32 %v1587, %v1531
        %v1604 = vmul.f32 %v1588, %v1531
        %v1605 = vmul.f32 %v1589, %v1531
        %v1606 = vmul.f32 %v1590, %v1531
        %v1607 = vmul.f32 %v1591, %v1531
        %v1608 = vmul.f32 %v1592, %v1531
        %v1609 = vmul.f32 %v1593, %v1531
        %v1610 = vmul.f32 %v1594, %v1531
        %v1611 = vmul.f32 %v1595, %v1531
        %v1612 = vmul.f32 %v1596, %v1531
        %v1613 = vmul.f32 %v1597, %v1531
        %v1614 = vmul.f32 %v1598, %v1531
        %1615 = vadd.xlane.f32.xlu0 %v1599
        %v1616 = vpop.xlane.xlu0 %1615
        %1617 = vadd.xlane.f32.xlu0 %v1600
        %v1618 = vpop.xlane.xlu0 %1617
        %1619 = vadd.xlane.f32.xlu0 %v1601
        %v1620 = vpop.xlane.xlu0 %1619
        %1621 = vadd.xlane.f32.xlu0 %v1602
        %v1622 = vpop.xlane.xlu0 %1621
        %1623 = vadd.xlane.f32.xlu0 %v1603
        %v1624 = vpop.xlane.xlu0 %1623
        %1625 = vadd.xlane.f32.xlu0 %v1604
        %v1626 = vpop.xlane.xlu0 %1625
        %1627 = vadd.xlane.f32.xlu0 %v1605
        %v1628 = vpop.xlane.xlu0 %1627
        %1629 = vadd.xlane.f32.xlu0 %v1606
        %v1630 = vpop.xlane.xlu0 %1629
        %1631 = vadd.xlane.f32.xlu0 %v1607
        %v1632 = vpop.xlane.xlu0 %1631
        %1633 = vadd.xlane.f32.xlu0 %v1608
        %v1634 = vpop.xlane.xlu0 %1633
        %1635 = vadd.xlane.f32.xlu0 %v1609
        %v1636 = vpop.xlane.xlu0 %1635
        %1637 = vadd.xlane.f32.xlu0 %v1610
        %v1638 = vpop.xlane.xlu0 %1637
        %1639 = vadd.xlane.f32.xlu0 %v1611
        %v1640 = vpop.xlane.xlu0 %1639
        %1641 = vadd.xlane.f32.xlu0 %v1612
        %v1642 = vpop.xlane.xlu0 %1641
        %1643 = vadd.xlane.f32.xlu0 %v1613
        %v1644 = vpop.xlane.xlu0 %1643
        %1645 = vadd.xlane.f32.xlu0 %v1614
        %v1646 = vpop.xlane.xlu0 %1645
        %v1647 = vunpack.c.l.bf16 %v1176
        %v1648 = vunpack.c.h.bf16 %v1176
        %v1649 = vunpack.c.l.bf16 %v1177
        %v1650 = vunpack.c.h.bf16 %v1177
        %v1651 = vunpack.c.l.bf16 %v1178
        %v1652 = vunpack.c.h.bf16 %v1178
        %v1653 = vunpack.c.l.bf16 %v1179
        %v1654 = vunpack.c.h.bf16 %v1179
        %v1655 = vunpack.c.l.bf16 %v1180
        %v1656 = vunpack.c.h.bf16 %v1180
        %v1657 = vunpack.c.l.bf16 %v1181
        %v1658 = vunpack.c.h.bf16 %v1181
        %v1659 = vunpack.c.l.bf16 %v1182
        %v1660 = vunpack.c.h.bf16 %v1182
        %v1661 = vunpack.c.l.bf16 %v1183
        %v1662 = vunpack.c.h.bf16 %v1183
        %v1663 = vmul.f32 %v1647, %v1616
        %v1664 = vmul.f32 %v1648, %v1618
        %v1665 = vmul.f32 %v1649, %v1620
        %v1666 = vmul.f32 %v1650, %v1622
        %v1667 = vmul.f32 %v1651, %v1624
        %v1668 = vmul.f32 %v1652, %v1626
        %v1669 = vmul.f32 %v1653, %v1628
        %v1670 = vmul.f32 %v1654, %v1630
        %v1671 = vmul.f32 %v1655, %v1632
        %v1672 = vmul.f32 %v1656, %v1634
        %v1673 = vmul.f32 %v1657, %v1636
        %v1674 = vmul.f32 %v1658, %v1638
        %v1675 = vmul.f32 %v1659, %v1640
        %v1676 = vmul.f32 %v1660, %v1642
        %v1677 = vmul.f32 %v1661, %v1644
        %v1678 = vmul.f32 %v1662, %v1646
        %v1679 = vpack.c.bf16 %v1664, %v1663
        %v1680 = vpack.c.bf16 %v1666, %v1665
        %v1681 = vpack.c.bf16 %v1668, %v1667
        %v1682 = vpack.c.bf16 %v1670, %v1669
        %v1683 = vpack.c.bf16 %v1672, %v1671
        %v1684 = vpack.c.bf16 %v1674, %v1673
        %v1685 = vpack.c.bf16 %v1676, %v1675
        %v1686 = vpack.c.bf16 %v1678, %v1677
        %v1687 = vld [vmem:[#allocation5] sm:$0xff]
        %v1688 = vld [vmem:[#allocation5 + $0x8] sm:$0xff]
        %v1689 = vld [vmem:[#allocation5 + $0x10] sm:$0xff]
        %v1690 = vld [vmem:[#allocation5 + $0x18] sm:$0xff]
        %v1691 = vld [vmem:[#allocation5 + $0x20] sm:$0xff]
        %v1692 = vld [vmem:[#allocation5 + $0x28] sm:$0xff]
        %v1693 = vld [vmem:[#allocation5 + $0x30] sm:$0xff]
        %v1694 = vld [vmem:[#allocation5 + $0x38] sm:$0xff]
        %v1695 = vld [vmem:[#allocation5 + $0x40] sm:$0xff]
        %v1696 = vld [vmem:[#allocation5 + $0x48] sm:$0xff]
        %v1697 = vld [vmem:[#allocation5 + $0x50] sm:$0xff]
        %v1698 = vld [vmem:[#allocation5 + $0x58] sm:$0xff]
        %v1699 = vld [vmem:[#allocation5 + $0x60] sm:$0xff]
        %v1700 = vld [vmem:[#allocation5 + $0x68] sm:$0xff]
        %v1701 = vld [vmem:[#allocation5 + $0x70] sm:$0xff]
        %v1702 = vld [vmem:[#allocation5 + $0x78] sm:$0xff]
        %v1703 = vld [vmem:[#allocation5 + $0x80] sm:$0xff]
        %v1704 = vld [vmem:[#allocation5 + $0x88] sm:$0xff]
        %v1705 = vld [vmem:[#allocation5 + $0x90] sm:$0xff]
        %v1706 = vld [vmem:[#allocation5 + $0x98] sm:$0xff]
        %v1707 = vld [vmem:[#allocation5 + $0xa0] sm:$0xff]
        %v1708 = vld [vmem:[#allocation5 + $0xa8] sm:$0xff]
        %v1709 = vld [vmem:[#allocation5 + $0xb0] sm:$0xff]
        %v1710 = vld [vmem:[#allocation5 + $0xb8] sm:$0xff]
        %v1711 = vld [vmem:[#allocation5 + $0xc0] sm:$0xff]
        %v1712 = vld [vmem:[#allocation5 + $0xc8] sm:$0xff]
        %v1713 = vld [vmem:[#allocation5 + $0xd0] sm:$0xff]
        %v1714 = vld [vmem:[#allocation5 + $0xd8] sm:$0xff]
        %v1715 = vld [vmem:[#allocation5 + $0xe0] sm:$0xff]
        %v1716 = vld [vmem:[#allocation5 + $0xe8] sm:$0xff]
        %v1717 = vld [vmem:[#allocation5 + $0xf0] sm:$0xff]
        %v1718 = vld [vmem:[#allocation5 + $0xf8] sm:$0xff]
        %v1719 = vpack.c.bf16 %v1433, %v1431
        %v1720 = vpack.c.bf16 %v1437, %v1435
        %v1721 = vpack.c.bf16 %v1441, %v1439
        %v1722 = vpack.c.bf16 %v1445, %v1443
        %v1723 = vpack.c.bf16 %v1449, %v1447
        %v1724 = vpack.c.bf16 %v1453, %v1451
        %v1725 = vpack.c.bf16 %v1457, %v1455
        %v1726 = vpack.c.bf16 %v1461, %v1459
        %v1727 = vpack.c.bf16 %v1465, %v1463
        %v1728 = vpack.c.bf16 %v1469, %v1467
        %v1729 = vpack.c.bf16 %v1473, %v1471
        %v1730 = vpack.c.bf16 %v1477, %v1475
        %v1731 = vpack.c.bf16 %v1481, %v1479
        %v1732 = vpack.c.bf16 %v1485, %v1483
        %v1733 = vpack.c.bf16 %v1489, %v1487
        %v1734 = vpack.c.bf16 %v1493, %v1491
        %1735 = vmatprep.subr.bf16.mxu0 0
        %1736 = vmatpush1.bf16.msra.mxu0 %v1679
        %1737 = vmatprep.subr.bf16.mxu0 0
        %1738 = vmatpush1.bf16.msra.mxu0 %v1680
        %1739 = vmatprep.subr.bf16.mxu0 0
        %1740 = vmatpush1.bf16.msra.mxu0 %v1681
        %1741 = vmatprep.subr.bf16.mxu0 0
        %1742 = vmatpush1.bf16.msra.mxu0 %v1682
        %1743 = vmatprep.subr.bf16.mxu0 0
        %1744 = vmatpush1.bf16.msra.mxu0 %v1683
        %1745 = vmatprep.subr.bf16.mxu0 0
        %1746 = vmatpush1.bf16.msra.mxu0 %v1684
        %1747 = vmatprep.subr.bf16.mxu0 0
        %1748 = vmatpush1.bf16.msra.mxu0 %v1685
        %1749 = vmatprep.subr.bf16.mxu0 0
        %1750 = vmatpush1.bf16.msra.mxu0 %v1686
        %1751 = vmatprep.subr.bf16.mxu0 0
        %1752 = vmatpush1.bf16.msra.mxu0 0
        %1753 = vmatprep.subr.bf16.mxu0 0
        %1754 = vmatpush1.bf16.msra.mxu0 0
        %1755 = vmatprep.subr.bf16.mxu0 0
        %1756 = vmatpush1.bf16.msra.mxu0 0
        %1757 = vmatprep.subr.bf16.mxu0 0
        %1758 = vmatpush1.bf16.msra.mxu0 0
        %1759 = vmatprep.subr.bf16.mxu0 0
        %1760 = vmatpush1.bf16.msra.mxu0 0
        %1761 = vmatprep.subr.bf16.mxu0 0
        %1762 = vmatpush1.bf16.msra.mxu0 0
        %1763 = vmatprep.subr.bf16.mxu0 0
        %1764 = vmatpush1.bf16.msra.mxu0 0
        %1765 = vmatprep.subr.bf16.mxu0 0
        %1766 = vmatpush1.bf16.msra.mxu0 0
        %1767 = vmatprep.mubr.bf16.mxu0 0
        %1768 = vmatmul.mubr.bf16.gmra.mrb[0].mxu0 %v1719
        %v1769 = vpop.f32.mrb[0].mxu0
        %v1770 = vadd.f32 0.0, %v1769
        %v1771 = vpop.f32.mrb[0].mxu0
        %v1772 = vpop.f32.mrb[0].mxu0
        %v1773 = vadd.f32 0.0, %v1772
        %v1774 = vpop.f32.mrb[0].mxu0
        %1775 = vmatprep.mubr.bf16.mxu0 0
        %1776 = vmatmul.mubr.bf16.gmra.mrb[0].mxu0 %v1720
        %v1777 = vpop.f32.mrb[0].mxu0
        %v1778 = vadd.f32 0.0, %v1777
        %v1779 = vpop.f32.mrb[0].mxu0
        %v1780 = vpop.f32.mrb[0].mxu0
        %v1781 = vadd.f32 0.0, %v1780
        %v1782 = vpop.f32.mrb[0].mxu0
        %1783 = vmatprep.mubr.bf16.mxu0 0
        %1784 = vmatmul.mubr.bf16.gmra.mrb[0].mxu0 %v1721
        %v1785 = vpop.f32.mrb[0].mxu0
        %v1786 = vadd.f32 0.0, %v1785
        %v1787 = vpop.f32.mrb[0].mxu0
        %v1788 = vpop.f32.mrb[0].mxu0
        %v1789 = vadd.f32 0.0, %v1788
        %v1790 = vpop.f32.mrb[0].mxu0
        %1791 = vmatprep.mubr.bf16.mxu0 0
        %1792 = vmatmul.mubr.bf16.gmra.mrb[0].mxu0 %v1722
        %v1793 = vpop.f32.mrb[0].mxu0
        %v1794 = vadd.f32 0.0, %v1793
        %v1795 = vpop.f32.mrb[0].mxu0
        %v1796 = vpop.f32.mrb[0].mxu0
        %v1797 = vadd.f32 0.0, %v1796
        %v1798 = vpop.f32.mrb[0].mxu0
        %1799 = vmatprep.mubr.bf16.mxu0 0
        %1800 = vmatmul.mubr.bf16.gmra.mrb[0].mxu0 %v1723
        %v1801 = vpop.f32.mrb[0].mxu0
        %v1802 = vadd.f32 0.0, %v1801
        %v1803 = vpop.f32.mrb[0].mxu0
        %v1804 = vpop.f32.mrb[0].mxu0
        %v1805 = vadd.f32 0.0, %v1804
        %v1806 = vpop.f32.mrb[0].mxu0
        %1807 = vmatprep.mubr.bf16.mxu0 0
        %1808 = vmatmul.mubr.bf16.gmra.mrb[0].mxu0 %v1724
        %v1809 = vpop.f32.mrb[0].mxu0
        %v1810 = vadd.f32 0.0, %v1809
        %v1811 = vpop.f32.mrb[0].mxu0
        %v1812 = vpop.f32.mrb[0].mxu0
        %v1813 = vadd.f32 0.0, %v1812
        %v1814 = vpop.f32.mrb[0].mxu0
        %1815 = vmatprep.mubr.bf16.mxu0 0
        %1816 = vmatmul.mubr.bf16.gmra.mrb[0].mxu0 %v1725
        %v1817 = vpop.f32.mrb[0].mxu0
        %v1818 = vadd.f32 0.0, %v1817
        %v1819 = vpop.f32.mrb[0].mxu0
        %v1820 = vpop.f32.mrb[0].mxu0
        %v1821 = vadd.f32 0.0, %v1820
        %v1822 = vpop.f32.mrb[0].mxu0
        %1823 = vmatprep.mubr.bf16.mxu0 0
        %1824 = vmatmul.mubr.bf16.gmra.mrb[0].mxu0 %v1726
        %v1825 = vpop.f32.mrb[0].mxu0
        %v1826 = vadd.f32 0.0, %v1825
        %v1827 = vpop.f32.mrb[0].mxu0
        %v1828 = vpop.f32.mrb[0].mxu0
        %v1829 = vadd.f32 0.0, %v1828
        %v1830 = vpop.f32.mrb[0].mxu0
        %1831 = vmatprep.mubr.bf16.mxu0 0
        %1832 = vmatmul.mubr.bf16.gmra.mrb[0].mxu0 %v1727
        %v1833 = vpop.f32.mrb[0].mxu0
        %v1834 = vadd.f32 0.0, %v1833
        %v1835 = vpop.f32.mrb[0].mxu0
        %v1836 = vpop.f32.mrb[0].mxu0
        %v1837 = vadd.f32 0.0, %v1836
        %v1838 = vpop.f32.mrb[0].mxu0
        %1839 = vmatprep.mubr.bf16.mxu0 0
        %1840 = vmatmul.mubr.bf16.gmra.mrb[0].mxu0 %v1728
        %v1841 = vpop.f32.mrb[0].mxu0
        %v1842 = vadd.f32 0.0, %v1841
        %v1843 = vpop.f32.mrb[0].mxu0
        %v1844 = vpop.f32.mrb[0].mxu0
        %v1845 = vadd.f32 0.0, %v1844
        %v1846 = vpop.f32.mrb[0].mxu0
        %1847 = vmatprep.mubr.bf16.mxu0 0
        %1848 = vmatmul.mubr.bf16.gmra.mrb[0].mxu0 %v1729
        %v1849 = vpop.f32.mrb[0].mxu0
        %v1850 = vadd.f32 0.0, %v1849
        %v1851 = vpop.f32.mrb[0].mxu0
        %v1852 = vpop.f32.mrb[0].mxu0
        %v1853 = vadd.f32 0.0, %v1852
        %v1854 = vpop.f32.mrb[0].mxu0
        %1855 = vmatprep.mubr.bf16.mxu0 0
        %1856 = vmatmul.mubr.bf16.gmra.mrb[0].mxu0 %v1730
        %v1857 = vpop.f32.mrb[0].mxu0
        %v1858 = vadd.f32 0.0, %v1857
        %v1859 = vpop.f32.mrb[0].mxu0
        %v1860 = vpop.f32.mrb[0].mxu0
        %v1861 = vadd.f32 0.0, %v1860
        %v1862 = vpop.f32.mrb[0].mxu0
        %1863 = vmatprep.mubr.bf16.mxu0 0
        %1864 = vmatmul.mubr.bf16.gmra.mrb[0].mxu0 %v1731
        %v1865 = vpop.f32.mrb[0].mxu0
        %v1866 = vadd.f32 0.0, %v1865
        %v1867 = vpop.f32.mrb[0].mxu0
        %v1868 = vpop.f32.mrb[0].mxu0
        %v1869 = vadd.f32 0.0, %v1868
        %v1870 = vpop.f32.mrb[0].mxu0
        %1871 = vmatprep.mubr.bf16.mxu0 0
        %1872 = vmatmul.mubr.bf16.gmra.mrb[0].mxu0 %v1732
        %v1873 = vpop.f32.mrb[0].mxu0
        %v1874 = vadd.f32 0.0, %v1873
        %v1875 = vpop.f32.mrb[0].mxu0
        %v1876 = vpop.f32.mrb[0].mxu0
        %v1877 = vadd.f32 0.0, %v1876
        %v1878 = vpop.f32.mrb[0].mxu0
        %1879 = vmatprep.mubr.bf16.mxu0 0
        %1880 = vmatmul.mubr.bf16.gmra.mrb[0].mxu0 %v1733
        %v1881 = vpop.f32.mrb[0].mxu0
        %v1882 = vadd.f32 0.0, %v1881
        %v1883 = vpop.f32.mrb[0].mxu0
        %v1884 = vpop.f32.mrb[0].mxu0
        %v1885 = vadd.f32 0.0, %v1884
        %v1886 = vpop.f32.mrb[0].mxu0
        %1887 = vmatprep.mubr.bf16.mxu0 0
        %1888 = vmatmul.mubr.bf16.gmra.mrb[0].mxu0 %v1734
        %v1889 = vpop.f32.mrb[0].mxu0
        %v1890 = vadd.f32 0.0, %v1889
        %v1891 = vpop.f32.mrb[0].mxu0
        %v1892 = vpop.f32.mrb[0].mxu0
        %v1893 = vadd.f32 0.0, %v1892
        %v1894 = vpop.f32.mrb[0].mxu0
        %1895 = vdwg.mxu0
        %v1896 = vadd.f32 %v1687, %v1770
        %v1897 = vadd.f32 %v1688, %v1773
        %v1898 = vadd.f32 %v1689, %v1778
        %v1899 = vadd.f32 %v1690, %v1781
        %v1900 = vadd.f32 %v1691, %v1786
        %v1901 = vadd.f32 %v1692, %v1789
        %v1902 = vadd.f32 %v1693, %v1794
        %v1903 = vadd.f32 %v1694, %v1797
        %v1904 = vadd.f32 %v1695, %v1802
        %v1905 = vadd.f32 %v1696, %v1805
        %v1906 = vadd.f32 %v1697, %v1810
        %v1907 = vadd.f32 %v1698, %v1813
        %v1908 = vadd.f32 %v1699, %v1818
        %v1909 = vadd.f32 %v1700, %v1821
        %v1910 = vadd.f32 %v1701, %v1826
        %v1911 = vadd.f32 %v1702, %v1829
        %v1912 = vadd.f32 %v1703, %v1834
        %v1913 = vadd.f32 %v1704, %v1837
        %v1914 = vadd.f32 %v1705, %v1842
        %v1915 = vadd.f32 %v1706, %v1845
        %v1916 = vadd.f32 %v1707, %v1850
        %v1917 = vadd.f32 %v1708, %v1853
        %v1918 = vadd.f32 %v1709, %v1858
        %v1919 = vadd.f32 %v1710, %v1861
        %v1920 = vadd.f32 %v1711, %v1866
        %v1921 = vadd.f32 %v1712, %v1869
        %v1922 = vadd.f32 %v1713, %v1874
        %v1923 = vadd.f32 %v1714, %v1877
        %v1924 = vadd.f32 %v1715, %v1882
        %v1925 = vadd.f32 %v1716, %v1885
        %v1926 = vadd.f32 %v1717, %v1890
        %v1927 = vadd.f32 %v1718, %v1893
        %1928 = vst [vmem:[#allocation5] sm:$0xff] %v1896
        %1929 = vst [vmem:[#allocation5 + $0x8] sm:$0xff] %v1897
        %1930 = vst [vmem:[#allocation5 + $0x10] sm:$0xff] %v1898
        %1931 = vst [vmem:[#allocation5 + $0x18] sm:$0xff] %v1899
        %1932 = vst [vmem:[#allocation5 + $0x20] sm:$0xff] %v1900
        %1933 = vst [vmem:[#allocation5 + $0x28] sm:$0xff] %v1901
        %1934 = vst [vmem:[#allocation5 + $0x30] sm:$0xff] %v1902
        %1935 = vst [vmem:[#allocation5 + $0x38] sm:$0xff] %v1903
        %1936 = vst [vmem:[#allocation5 + $0x40] sm:$0xff] %v1904
        %1937 = vst [vmem:[#allocation5 + $0x48] sm:$0xff] %v1905
        %1938 = vst [vmem:[#allocation5 + $0x50] sm:$0xff] %v1906
        %1939 = vst [vmem:[#allocation5 + $0x58] sm:$0xff] %v1907
        %1940 = vst [vmem:[#allocation5 + $0x60] sm:$0xff] %v1908
        %1941 = vst [vmem:[#allocation5 + $0x68] sm:$0xff] %v1909
        %1942 = vst [vmem:[#allocation5 + $0x70] sm:$0xff] %v1910
        %1943 = vst [vmem:[#allocation5 + $0x78] sm:$0xff] %v1911
        %1944 = vst [vmem:[#allocation5 + $0x80] sm:$0xff] %v1912
        %1945 = vst [vmem:[#allocation5 + $0x88] sm:$0xff] %v1913
        %1946 = vst [vmem:[#allocation5 + $0x90] sm:$0xff] %v1914
        %1947 = vst [vmem:[#allocation5 + $0x98] sm:$0xff] %v1915
        %1948 = vst [vmem:[#allocation5 + $0xa0] sm:$0xff] %v1916
        %1949 = vst [vmem:[#allocation5 + $0xa8] sm:$0xff] %v1917
        %1950 = vst [vmem:[#allocation5 + $0xb0] sm:$0xff] %v1918
        %1951 = vst [vmem:[#allocation5 + $0xb8] sm:$0xff] %v1919
        %1952 = vst [vmem:[#allocation5 + $0xc0] sm:$0xff] %v1920
        %1953 = vst [vmem:[#allocation5 + $0xc8] sm:$0xff] %v1921
        %1954 = vst [vmem:[#allocation5 + $0xd0] sm:$0xff] %v1922
        %1955 = vst [vmem:[#allocation5 + $0xd8] sm:$0xff] %v1923
        %1956 = vst [vmem:[#allocation5 + $0xe0] sm:$0xff] %v1924
        %1957 = vst [vmem:[#allocation5 + $0xe8] sm:$0xff] %v1925
        %1958 = vst [vmem:[#allocation5 + $0xf0] sm:$0xff] %v1926
        %1959 = vst [vmem:[#allocation5 + $0xf8] sm:$0xff] %v1927
        %p1960 = scmp.eq.s32.totalorder %s28, 1
        // Predicated region
        $region57: #{tpu_custom_call.1} parent=39 // pred_check
          %p1961 = pneg %p1960
        $region58: #{tpu_custom_call.1} parent=39 // pred_check_branch
          %1963 = sbr.rel (%p1961) target = $region60
        $region59: #{tpu_custom_call.1} parent=39 // pred_region
          %v1964 = vld [vmem:[#allocation5] sm:$0xff]
          %v1965 = vld [vmem:[#allocation5 + $0x8] sm:$0xff]
          %v1966 = vld [vmem:[#allocation5 + $0x10] sm:$0xff]
          %v1967 = vld [vmem:[#allocation5 + $0x18] sm:$0xff]
          %v1968 = vld [vmem:[#allocation5 + $0x20] sm:$0xff]
          %v1969 = vld [vmem:[#allocation5 + $0x28] sm:$0xff]
          %v1970 = vld [vmem:[#allocation5 + $0x30] sm:$0xff]
          %v1971 = vld [vmem:[#allocation5 + $0x38] sm:$0xff]
          %v1972 = vld [vmem:[#allocation5 + $0x40] sm:$0xff]
          %v1973 = vld [vmem:[#allocation5 + $0x48] sm:$0xff]
          %v1974 = vld [vmem:[#allocation5 + $0x50] sm:$0xff]
          %v1975 = vld [vmem:[#allocation5 + $0x58] sm:$0xff]
          %v1976 = vld [vmem:[#allocation5 + $0x60] sm:$0xff]
          %v1977 = vld [vmem:[#allocation5 + $0x68] sm:$0xff]
          %v1978 = vld [vmem:[#allocation5 + $0x70] sm:$0xff]
          %v1979 = vld [vmem:[#allocation5 + $0x78] sm:$0xff]
          %v1980 = vld [vmem:[#allocation5 + $0x80] sm:$0xff]
          %v1981 = vld [vmem:[#allocation5 + $0x88] sm:$0xff]
          %v1982 = vld [vmem:[#allocation5 + $0x90] sm:$0xff]
          %v1983 = vld [vmem:[#allocation5 + $0x98] sm:$0xff]
          %v1984 = vld [vmem:[#allocation5 + $0xa0] sm:$0xff]
          %v1985 = vld [vmem:[#allocation5 + $0xa8] sm:$0xff]
          %v1986 = vld [vmem:[#allocation5 + $0xb0] sm:$0xff]
          %v1987 = vld [vmem:[#allocation5 + $0xb8] sm:$0xff]
          %v1988 = vld [vmem:[#allocation5 + $0xc0] sm:$0xff]
          %v1989 = vld [vmem:[#allocation5 + $0xc8] sm:$0xff]
          %v1990 = vld [vmem:[#allocation5 + $0xd0] sm:$0xff]
          %v1991 = vld [vmem:[#allocation5 + $0xd8] sm:$0xff]
          %v1992 = vld [vmem:[#allocation5 + $0xe0] sm:$0xff]
          %v1993 = vld [vmem:[#allocation5 + $0xe8] sm:$0xff]
          %v1994 = vld [vmem:[#allocation5 + $0xf0] sm:$0xff]
          %v1995 = vld [vmem:[#allocation5 + $0xf8] sm:$0xff]
          %v1996 = vpack.c.bf16 %v1965, %v1964
          %v1997 = vpack.c.bf16 %v1967, %v1966
          %v1998 = vpack.c.bf16 %v1969, %v1968
          %v1999 = vpack.c.bf16 %v1971, %v1970
          %v2000 = vpack.c.bf16 %v1973, %v1972
          %v2001 = vpack.c.bf16 %v1975, %v1974
          %v2002 = vpack.c.bf16 %v1977, %v1976
          %v2003 = vpack.c.bf16 %v1979, %v1978
          %v2004 = vpack.c.bf16 %v1981, %v1980
          %v2005 = vpack.c.bf16 %v1983, %v1982
          %v2006 = vpack.c.bf16 %v1985, %v1984
          %v2007 = vpack.c.bf16 %v1987, %v1986
          %v2008 = vpack.c.bf16 %v1989, %v1988
          %v2009 = vpack.c.bf16 %v1991, %v1990
          %v2010 = vpack.c.bf16 %v1993, %v1992
          %v2011 = vpack.c.bf16 %v1995, %v1994
          %v2012 = vld [vmem:[#allocation11] sm:$0xf]
          %v2013 = vld [vmem:[#allocation11 + $0x4] sm:$0xf]
          %v2014 = vld [vmem:[#allocation11 + $0x8] sm:$0xf]
          %v2015 = vld [vmem:[#allocation11 + $0xc] sm:$0xf]
          %v2016 = vld [vmem:[#allocation11 + $0x10] sm:$0xf]
          %v2017 = vld [vmem:[#allocation11 + $0x14] sm:$0xf]
          %v2018 = vld [vmem:[#allocation11 + $0x18] sm:$0xf]
          %v2019 = vld [vmem:[#allocation11 + $0x1c] sm:$0xf]
          %v2020 = vld [vmem:[#allocation11 + $0x20] sm:$0xf]
          %v2021 = vld [vmem:[#allocation11 + $0x24] sm:$0xf]
          %v2022 = vld [vmem:[#allocation11 + $0x28] sm:$0xf]
          %v2023 = vld [vmem:[#allocation11 + $0x2c] sm:$0xf]
          %v2024 = vld [vmem:[#allocation11 + $0x30] sm:$0xf]
          %v2025 = vld [vmem:[#allocation11 + $0x34] sm:$0xf]
          %v2026 = vld [vmem:[#allocation11 + $0x38] sm:$0xf]
          %v2027 = vld [vmem:[#allocation11 + $0x3c] sm:$0xf]
          %v2028 = vld [vmem:[%s4] sm:$0x1]
          %v2030 = vlaneseq
          %v2031 = vshrl.u32 %v2030, 7
          %v2032 = vsub.s32 0, %v2031
          %v2033 = vrot.slane %v2028, %v2032
          %v2051 = vunpack.c.l.b16 %v2012
          %v2052 = vunpack.c.l.b16 %v2013
          %v2053 = vunpack.c.l.b16 %v2014
          %v2054 = vunpack.c.l.b16 %v2015
          %v2055 = vunpack.c.l.b16 %v2016
          %v2056 = vunpack.c.l.b16 %v2017
          %v2057 = vunpack.c.l.b16 %v2018
          %v2058 = vunpack.c.l.b16 %v2019
          %v2059 = vunpack.c.l.b16 %v2020
          %v2060 = vunpack.c.l.b16 %v2021
          %v2061 = vunpack.c.l.b16 %v2022
          %v2062 = vunpack.c.l.b16 %v2023
          %v2063 = vunpack.c.l.b16 %v2024
          %v2064 = vunpack.c.l.b16 %v2025
          %v2065 = vunpack.c.l.b16 %v2026
          %v2066 = vunpack.c.l.b16 %v2027
          %v2067 = vpack.c.b16 %v2052, %v2051
          %v2068 = vpack.c.b16 %v2054, %v2053
          %v2069 = vpack.c.b16 %v2056, %v2055
          %v2070 = vpack.c.b16 %v2058, %v2057
          %v2071 = vpack.c.b16 %v2060, %v2059
          %v2072 = vpack.c.b16 %v2062, %v2061
          %v2073 = vpack.c.b16 %v2064, %v2063
          %v2074 = vpack.c.b16 %v2066, %v2065
          %2083 = vmatprep.subr.bf16.mxu0 0
          %2084 = vmatpush1.bf16.msra.mxu0 %v2067
          %2085 = vmatprep.subr.bf16.mxu0 0
          %2086 = vmatpush1.bf16.msra.mxu0 %v2068
          %2087 = vmatprep.subr.bf16.mxu0 0
          %2088 = vmatpush1.bf16.msra.mxu0 %v2069
          %2089 = vmatprep.subr.bf16.mxu0 0
          %2090 = vmatpush1.bf16.msra.mxu0 %v2070
          %2091 = vmatprep.subr.bf16.mxu0 0
          %2092 = vmatpush1.bf16.msra.mxu0 %v2071
          %2093 = vmatprep.subr.bf16.mxu0 0
          %2094 = vmatpush1.bf16.msra.mxu0 %v2072
          %2095 = vmatprep.subr.bf16.mxu0 0
          %2096 = vmatpush1.bf16.msra.mxu0 %v2073
          %2097 = vmatprep.subr.bf16.mxu0 0
          %2098 = vmatpush1.bf16.msra.mxu0 %v2074
          %2099 = vmatprep.subr.bf16.mxu0 0
          %2100 = vmatpush1.bf16.msra.mxu0 0
          %2101 = vmatprep.subr.bf16.mxu0 0
          %2102 = vmatpush1.bf16.msra.mxu0 0
          %2103 = vmatprep.subr.bf16.mxu0 0
          %2104 = vmatpush1.bf16.msra.mxu0 0
          %2105 = vmatprep.subr.bf16.mxu0 0
          %2106 = vmatpush1.bf16.msra.mxu0 0
          %2107 = vmatprep.subr.bf16.mxu0 0
          %2108 = vmatpush1.bf16.msra.mxu0 0
          %2109 = vmatprep.subr.bf16.mxu0 0
          %2110 = vmatpush1.bf16.msra.mxu0 0
          %2111 = vmatprep.subr.bf16.mxu0 0
          %2112 = vmatpush1.bf16.msra.mxu0 0
          %2113 = vmatprep.subr.bf16.mxu0 0
          %2114 = vmatpush1.bf16.msra.mxu0 0
          %2115 = vmatprep.mubr.bf16.mxu0 0
          %2116 = vmatmul.mubr.bf16.gmra.mrb[0].mxu0 %v1996
          %v2117 = vpop.f32.mrb[0].mxu0
          %v2118 = vadd.f32 %v2033, %v2117
          %v2119 = vpop.f32.mrb[0].mxu0
          %v2120 = vpop.f32.mrb[0].mxu0
          %v2121 = vadd.f32 %v2033, %v2120
          %v2122 = vpop.f32.mrb[0].mxu0
          %2123 = vmatprep.mubr.bf16.mxu0 0
          %2124 = vmatmul.mubr.bf16.gmra.mrb[0].mxu0 %v1997
          %v2125 = vpop.f32.mrb[0].mxu0
          %v2126 = vadd.f32 %v2033, %v2125
          %v2127 = vpop.f32.mrb[0].mxu0
          %v2128 = vpop.f32.mrb[0].mxu0
          %v2129 = vadd.f32 %v2033, %v2128
          %v2130 = vpop.f32.mrb[0].mxu0
          %2131 = vmatprep.mubr.bf16.mxu0 0
          %2132 = vmatmul.mubr.bf16.gmra.mrb[0].mxu0 %v1998
          %v2133 = vpop.f32.mrb[0].mxu0
          %v2134 = vadd.f32 %v2033, %v2133
          %v2135 = vpop.f32.mrb[0].mxu0
          %v2136 = vpop.f32.mrb[0].mxu0
          %v2137 = vadd.f32 %v2033, %v2136
          %v2138 = vpop.f32.mrb[0].mxu0
          %2139 = vmatprep.mubr.bf16.mxu0 0
          %2140 = vmatmul.mubr.bf16.gmra.mrb[0].mxu0 %v1999
          %v2141 = vpop.f32.mrb[0].mxu0
          %v2142 = vadd.f32 %v2033, %v2141
          %v2143 = vpop.f32.mrb[0].mxu0
          %v2144 = vpop.f32.mrb[0].mxu0
          %v2145 = vadd.f32 %v2033, %v2144
          %v2146 = vpop.f32.mrb[0].mxu0
          %2147 = vmatprep.mubr.bf16.mxu0 0
          %2148 = vmatmul.mubr.bf16.gmra.mrb[0].mxu0 %v2000
          %v2149 = vpop.f32.mrb[0].mxu0
          %v2150 = vadd.f32 %v2033, %v2149
          %v2151 = vpop.f32.mrb[0].mxu0
          %v2152 = vpop.f32.mrb[0].mxu0
          %v2153 = vadd.f32 %v2033, %v2152
          %v2154 = vpop.f32.mrb[0].mxu0
          %2155 = vmatprep.mubr.bf16.mxu0 0
          %2156 = vmatmul.mubr.bf16.gmra.mrb[0].mxu0 %v2001
          %v2157 = vpop.f32.mrb[0].mxu0
          %v2158 = vadd.f32 %v2033, %v2157
          %v2159 = vpop.f32.mrb[0].mxu0
          %v2160 = vpop.f32.mrb[0].mxu0
          %v2161 = vadd.f32 %v2033, %v2160
          %v2162 = vpop.f32.mrb[0].mxu0
          %2163 = vmatprep.mubr.bf16.mxu0 0
          %2164 = vmatmul.mubr.bf16.gmra.mrb[0].mxu0 %v2002
          %v2165 = vpop.f32.mrb[0].mxu0
          %v2166 = vadd.f32 %v2033, %v2165
          %v2167 = vpop.f32.mrb[0].mxu0
          %v2168 = vpop.f32.mrb[0].mxu0
          %v2169 = vadd.f32 %v2033, %v2168
          %v2170 = vpop.f32.mrb[0].mxu0
          %2171 = vmatprep.mubr.bf16.mxu0 0
          %2172 = vmatmul.mubr.bf16.gmra.mrb[0].mxu0 %v2003
          %v2173 = vpop.f32.mrb[0].mxu0
          %v2174 = vadd.f32 %v2033, %v2173
          %v2175 = vpop.f32.mrb[0].mxu0
          %v2176 = vpop.f32.mrb[0].mxu0
          %v2177 = vadd.f32 %v2033, %v2176
          %v2178 = vpop.f32.mrb[0].mxu0
          %2179 = vmatprep.mubr.bf16.mxu0 0
          %2180 = vmatmul.mubr.bf16.gmra.mrb[0].mxu0 %v2004
          %v2181 = vpop.f32.mrb[0].mxu0
          %v2182 = vadd.f32 %v2033, %v2181
          %v2183 = vpop.f32.mrb[0].mxu0
          %v2184 = vpop.f32.mrb[0].mxu0
          %v2185 = vadd.f32 %v2033, %v2184
          %v2186 = vpop.f32.mrb[0].mxu0
          %2187 = vmatprep.mubr.bf16.mxu0 0
          %2188 = vmatmul.mubr.bf16.gmra.mrb[0].mxu0 %v2005
          %v2189 = vpop.f32.mrb[0].mxu0
          %v2190 = vadd.f32 %v2033, %v2189
          %v2191 = vpop.f32.mrb[0].mxu0
          %v2192 = vpop.f32.mrb[0].mxu0
          %v2193 = vadd.f32 %v2033, %v2192
          %v2194 = vpop.f32.mrb[0].mxu0
          %2195 = vmatprep.mubr.bf16.mxu0 0
          %2196 = vmatmul.mubr.bf16.gmra.mrb[0].mxu0 %v2006
          %v2197 = vpop.f32.mrb[0].mxu0
          %v2198 = vadd.f32 %v2033, %v2197
          %v2199 = vpop.f32.mrb[0].mxu0
          %v2200 = vpop.f32.mrb[0].mxu0
          %v2201 = vadd.f32 %v2033, %v2200
          %v2202 = vpop.f32.mrb[0].mxu0
          %2203 = vmatprep.mubr.bf16.mxu0 0
          %2204 = vmatmul.mubr.bf16.gmra.mrb[0].mxu0 %v2007
          %v2205 = vpop.f32.mrb[0].mxu0
          %v2206 = vadd.f32 %v2033, %v2205
          %v2207 = vpop.f32.mrb[0].mxu0
          %v2208 = vpop.f32.mrb[0].mxu0
          %v2209 = vadd.f32 %v2033, %v2208
          %v2210 = vpop.f32.mrb[0].mxu0
          %2211 = vmatprep.mubr.bf16.mxu0 0
          %2212 = vmatmul.mubr.bf16.gmra.mrb[0].mxu0 %v2008
          %v2213 = vpop.f32.mrb[0].mxu0
          %v2214 = vadd.f32 %v2033, %v2213
          %v2215 = vpop.f32.mrb[0].mxu0
          %v2216 = vpop.f32.mrb[0].mxu0
          %v2217 = vadd.f32 %v2033, %v2216
          %v2218 = vpop.f32.mrb[0].mxu0
          %2219 = vmatprep.mubr.bf16.mxu0 0
          %2220 = vmatmul.mubr.bf16.gmra.mrb[0].mxu0 %v2009
          %v2221 = vpop.f32.mrb[0].mxu0
          %v2222 = vadd.f32 %v2033, %v2221
          %v2223 = vpop.f32.mrb[0].mxu0
          %v2224 = vpop.f32.mrb[0].mxu0
          %v2225 = vadd.f32 %v2033, %v2224
          %v2226 = vpop.f32.mrb[0].mxu0
          %2227 = vmatprep.mubr.bf16.mxu0 0
          %2228 = vmatmul.mubr.bf16.gmra.mrb[0].mxu0 %v2010
          %v2229 = vpop.f32.mrb[0].mxu0
          %v2230 = vadd.f32 %v2033, %v2229
          %v2231 = vpop.f32.mrb[0].mxu0
          %v2232 = vpop.f32.mrb[0].mxu0
          %v2233 = vadd.f32 %v2033, %v2232
          %v2234 = vpop.f32.mrb[0].mxu0
          %2235 = vmatprep.mubr.bf16.mxu0 0
          %2236 = vmatmul.mubr.bf16.gmra.mrb[0].mxu0 %v2011
          %v2237 = vpop.f32.mrb[0].mxu0
          %v2238 = vadd.f32 %v2033, %v2237
          %v2239 = vpop.f32.mrb[0].mxu0
          %v2240 = vpop.f32.mrb[0].mxu0
          %v2241 = vadd.f32 %v2033, %v2240
          %v2242 = vpop.f32.mrb[0].mxu0
          %2243 = vdwg.mxu0
          %v2244 = vld [vmem:[%s249] sm:$0xff]
          %v2245 = vld [vmem:[%s249 + $0x8] sm:$0xff]
          %v2246 = vld [vmem:[%s249 + $0x10] sm:$0xff]
          %v2247 = vld [vmem:[%s249 + $0x18] sm:$0xff]
          %v2248 = vld [vmem:[%s249 + $0x20] sm:$0xff]
          %v2249 = vld [vmem:[%s249 + $0x28] sm:$0xff]
          %v2250 = vld [vmem:[%s249 + $0x30] sm:$0xff]
          %v2251 = vld [vmem:[%s249 + $0x38] sm:$0xff]
          %v2252 = vld [vmem:[%s249 + $0x40] sm:$0xff]
          %v2253 = vld [vmem:[%s249 + $0x48] sm:$0xff]
          %v2254 = vld [vmem:[%s249 + $0x50] sm:$0xff]
          %v2255 = vld [vmem:[%s249 + $0x58] sm:$0xff]
          %v2256 = vld [vmem:[%s249 + $0x60] sm:$0xff]
          %v2257 = vld [vmem:[%s249 + $0x68] sm:$0xff]
          %v2258 = vld [vmem:[%s249 + $0x70] sm:$0xff]
          %v2259 = vld [vmem:[%s249 + $0x78] sm:$0xff]
          %v2260 = vld [vmem:[%s249 + $0x80] sm:$0xff]
          %v2261 = vld [vmem:[%s249 + $0x88] sm:$0xff]
          %v2262 = vld [vmem:[%s249 + $0x90] sm:$0xff]
          %v2263 = vld [vmem:[%s249 + $0x98] sm:$0xff]
          %v2264 = vld [vmem:[%s249 + $0xa0] sm:$0xff]
          %v2265 = vld [vmem:[%s249 + $0xa8] sm:$0xff]
          %v2266 = vld [vmem:[%s249 + $0xb0] sm:$0xff]
          %v2267 = vld [vmem:[%s249 + $0xb8] sm:$0xff]
          %v2268 = vld [vmem:[%s249 + $0xc0] sm:$0xff]
          %v2269 = vld [vmem:[%s249 + $0xc8] sm:$0xff]
          %v2270 = vld [vmem:[%s249 + $0xd0] sm:$0xff]
          %v2271 = vld [vmem:[%s249 + $0xd8] sm:$0xff]
          %v2272 = vld [vmem:[%s249 + $0xe0] sm:$0xff]
          %v2273 = vld [vmem:[%s249 + $0xe8] sm:$0xff]
          %v2274 = vld [vmem:[%s249 + $0xf0] sm:$0xff]
          %v2275 = vld [vmem:[%s249 + $0xf8] sm:$0xff]
          %v2276 = vadd.f32 %v2244, %v2118
          %v2277 = vadd.f32 %v2245, %v2121
          %v2278 = vadd.f32 %v2246, %v2126
          %v2279 = vadd.f32 %v2247, %v2129
          %v2280 = vadd.f32 %v2248, %v2134
          %v2281 = vadd.f32 %v2249, %v2137
          %v2282 = vadd.f32 %v2250, %v2142
          %v2283 = vadd.f32 %v2251, %v2145
          %v2284 = vadd.f32 %v2252, %v2150
          %v2285 = vadd.f32 %v2253, %v2153
          %v2286 = vadd.f32 %v2254, %v2158
          %v2287 = vadd.f32 %v2255, %v2161
          %v2288 = vadd.f32 %v2256, %v2166
          %v2289 = vadd.f32 %v2257, %v2169
          %v2290 = vadd.f32 %v2258, %v2174
          %v2291 = vadd.f32 %v2259, %v2177
          %v2292 = vadd.f32 %v2260, %v2182
          %v2293 = vadd.f32 %v2261, %v2185
          %v2294 = vadd.f32 %v2262, %v2190
          %v2295 = vadd.f32 %v2263, %v2193
          %v2296 = vadd.f32 %v2264, %v2198
          %v2297 = vadd.f32 %v2265, %v2201
          %v2298 = vadd.f32 %v2266, %v2206
          %v2299 = vadd.f32 %v2267, %v2209
          %v2300 = vadd.f32 %v2268, %v2214
          %v2301 = vadd.f32 %v2269, %v2217
          %v2302 = vadd.f32 %v2270, %v2222
          %v2303 = vadd.f32 %v2271, %v2225
          %v2304 = vadd.f32 %v2272, %v2230
          %v2305 = vadd.f32 %v2273, %v2233
          %v2306 = vadd.f32 %v2274, %v2238
          %v2307 = vadd.f32 %v2275, %v2241
          %2308 = vst [vmem:[%s283] sm:$0xff] %v2276
          %2309 = vst [vmem:[%s283 + $0x8] sm:$0xff] %v2277
          %2310 = vst [vmem:[%s283 + $0x10] sm:$0xff] %v2278
          %2311 = vst [vmem:[%s283 + $0x18] sm:$0xff] %v2279
          %2312 = vst [vmem:[%s283 + $0x20] sm:$0xff] %v2280
          %2313 = vst [vmem:[%s283 + $0x28] sm:$0xff] %v2281
          %2314 = vst [vmem:[%s283 + $0x30] sm:$0xff] %v2282
          %2315 = vst [vmem:[%s283 + $0x38] sm:$0xff] %v2283
          %2316 = vst [vmem:[%s283 + $0x40] sm:$0xff] %v2284
          %2317 = vst [vmem:[%s283 + $0x48] sm:$0xff] %v2285
          %2318 = vst [vmem:[%s283 + $0x50] sm:$0xff] %v2286
          %2319 = vst [vmem:[%s283 + $0x58] sm:$0xff] %v2287
          %2320 = vst [vmem:[%s283 + $0x60] sm:$0xff] %v2288
          %2321 = vst [vmem:[%s283 + $0x68] sm:$0xff] %v2289
          %2322 = vst [vmem:[%s283 + $0x70] sm:$0xff] %v2290
          %2323 = vst [vmem:[%s283 + $0x78] sm:$0xff] %v2291
          %2324 = vst [vmem:[%s283 + $0x80] sm:$0xff] %v2292
          %2325 = vst [vmem:[%s283 + $0x88] sm:$0xff] %v2293
          %2326 = vst [vmem:[%s283 + $0x90] sm:$0xff] %v2294
          %2327 = vst [vmem:[%s283 + $0x98] sm:$0xff] %v2295
          %2328 = vst [vmem:[%s283 + $0xa0] sm:$0xff] %v2296
          %2329 = vst [vmem:[%s283 + $0xa8] sm:$0xff] %v2297
          %2330 = vst [vmem:[%s283 + $0xb0] sm:$0xff] %v2298
          %2331 = vst [vmem:[%s283 + $0xb8] sm:$0xff] %v2299
          %2332 = vst [vmem:[%s283 + $0xc0] sm:$0xff] %v2300
          %2333 = vst [vmem:[%s283 + $0xc8] sm:$0xff] %v2301
          %2334 = vst [vmem:[%s283 + $0xd0] sm:$0xff] %v2302
          %2335 = vst [vmem:[%s283 + $0xd8] sm:$0xff] %v2303
          %2336 = vst [vmem:[%s283 + $0xe0] sm:$0xff] %v2304
          %2337 = vst [vmem:[%s283 + $0xe8] sm:$0xff] %v2305
          %2338 = vst [vmem:[%s283 + $0xf0] sm:$0xff] %v2306
          %2339 = vst [vmem:[%s283 + $0xf8] sm:$0xff] %v2307
        $region60: #{tpu_custom_call.1} parent=39 // pred_fallthru
          _
        %s2340 = sand.u32 %s153, 1
        %s2341 = scalar_lea.sflag [#allocation8], %s2340
        %s2342 = sand.u32 %s153, 1
        %s2343 = smul.addr %s2342, 256
        %s2344 = scalar_lea.vmem [#allocation12], %s2343
        // Predicated region
        $region61: #{tpu_custom_call.1} parent=39 // pred_check
          %p2345 = pneg %p163
        $region62: #{tpu_custom_call.1} parent=39 // pred_check_branch
          %2347 = sbr.rel (%p2345) target = $region64
        $region63: #{tpu_custom_call.1} parent=39 // pred_region
          %s2349 = ssub.s32 4096, 4096
          %2350 = vsyncadd %s2341, %s2349
          %s2351 = smul.addr %s27, 32
          %s2352 = smul.addr %s2351, 128
          %s2353 = scalar_lea.hbm %s5, %s2352
          %s2354 = sshll.u32 %s2344, 4
          %s2355 = int_to_ptr.vmem [resolvable:$true] %s2354
          %2360 = dma.vmem_to_hbm [thread:$0]  %s2355, 4096, %s2353, %s2341, 128, 128, 8
        $region64: #{tpu_custom_call.1} parent=39 // pred_fallthru
          _
      $region40: #{tpu_custom_call.1} parent=5 // pred_fallthru
        _
      %p2361 = scmp.le.s32.totalorder 2, %s18
      // Predicated region
      $region65: #{tpu_custom_call.1} parent=5 // pred_check
        %p2362 = pneg %p2361
      $region66: #{tpu_custom_call.1} parent=5 // pred_check_branch
        %2364 = sbr.rel (%p2362) target = $region68
      $region67: #{tpu_custom_call.1} parent=5 // pred_region
        %s2365 = ssub.s32 %s18, 2
        // Predicated region
        $region69: #{tpu_custom_call.1} parent=67 // pred_check
          %p2366 = pneg %p169
        $region70: #{tpu_custom_call.1} parent=67 // pred_check_branch
          %2368 = sbr.rel (%p2366) target = $region72
        $region71: #{tpu_custom_call.1} parent=67 // pred_region
          %s2369 = sand.u32 %s154, 1
          %s2370 = scalar_lea.sflag [#allocation8], %s2369
          %s2371 = sand.u32 %s154, 1
          %s2372 = smul.addr %s2371, 256
          %s2373 = scalar_lea.vmem [#allocation12], %s2372
          %2374 = dma.done %s2370, 4096
        $region72: #{tpu_custom_call.1} parent=67 // pred_fallthru
          _
      $region68: #{tpu_custom_call.1} parent=5 // pred_fallthru
        _
    $region6: #{tpu_custom_call.1} parent=1 // loop_footer
      %s22 = sadd.s32 1, %s18
    $region7: #{tpu_custom_call.1} parent=1 // loop_footer_branch
      %17 = sbr.rel target = $region3
    $region8: #{tpu_custom_call.1} parent=1 // loop_exit
      _
    %2375 = vsyncpa [#allocation7], 1
    %s2376 = scalar_lea.sflag [#allocation7], 1
    %2377 = vsyncpa %s2376, 1
    %2378 = vsyncpa [#allocation10], 1
    %2379 = vsyncpa [#allocation8], 1
    %s2380 = scalar_lea.sflag [#allocation8], 1
    %2381 = vsyncpa %s2380, 1

</llo_original>
